<compile_context>
chip_gen: v7x
topology: tpu7x:2x2x1
jax: 0.10.0
libtpu: 0.0.40
codegen_flags: <defaults>
</compile_context>

<pallas_src>
import functools

import jax
import jax.numpy as jnp
from jax import lax
from jax.experimental import pallas as pl
from jax.experimental.pallas import tpu as pltpu


# ---------------------------------------------------------------------------
# Kernel
# ---------------------------------------------------------------------------
def _rvq_kernel(z_ref, wfold_ref, vfold_ref, w_in_ref, b_in_ref, lut_ref, b_out_ref,
                zq_ref, codes_ref, loss_ref, *,
                nq, d_cb, t_true, t_tile, t_chunk, mask_pad):
    """Fused residual-VQ chain on one (D_in, T_TILE) slab of one batch element.

    z_ref:     (1, D_in, Tt)        residual input tile (channels on sublanes)
    wfold_ref: (nq, C, D_in)        cbn @ w_in   (in_proj folded into the score)
    vfold_ref: (nq, C, 1)           cbn @ b_in
    w_in_ref:  (nq, D_cb, D_in)     weight-normed in_proj (for the MSE loss only)
    b_in_ref:  (nq, D_cb, 1)        in_proj bias
    lut_ref:   (nq, D_cb+D_in, C)   stacked lookup: [codebook^T ; w_out@codebook^T]
    b_out_ref: (nq, D_in, 1)        out_proj bias
    zq_ref:    (1, D_in, Tt)        sum of all quantizer outputs (post out_proj)
    codes_ref: (1, nq, Tt)          int32 code indices per quantizer
    loss_ref:  (1, 1, 1, nq)        per-tile partial SSE per quantizer
                                    (wrapper reduces over tiles / normalizes)
    """
    t_idx = pl.program_id(1)
    c_size = wfold_ref.shape[1]
    n_chunks = t_tile // t_chunk
    qlane = lax.broadcasted_iota(jnp.int32, (1, nq), 1)

    def chunk_body(c, loss_acc):
        off = pl.multiple_of(c * t_chunk, t_chunk)
        resid = z_ref[0, :, pl.ds(off, t_chunk)]               # (D_in, TC)
        zq_tot = jnp.zeros_like(resid)

        if mask_pad:
            g = (t_idx * t_tile + off
                 + lax.broadcasted_iota(jnp.int32, (1, t_chunk), 1))
            valid = g < t_true                                  # (1, TC)

        code_rows = []
        for q in range(nq):                                     # static unroll
            # ---- code-selection score: argmin(dist) == argmax(cbn @ z_e)
            #      with in_proj folded in: cross = (cbn@w_in)@resid + cbn@b_in
            cross = jnp.dot(wfold_ref[q], resid,
                            preferred_element_type=jnp.float32) + vfold_ref[q]  # (C, TC)

            # ---- z_e only needed for the MSE loss (off the critical path)
            z_e = jnp.dot(w_in_ref[q], resid,
                          preferred_element_type=jnp.float32) + b_in_ref[q]     # (D_cb, TC)

            # ---- first-index tie-broken argmax over codes -> one-hot
            row = lax.broadcasted_iota(jnp.int32, cross.shape, 0)               # (C, TC)
            cmax = jnp.max(cross, axis=0, keepdims=True)                        # (1, TC)
            idx = jnp.min(jnp.where(cross >= cmax, row, c_size),
                          axis=0, keepdims=True)                                # (1, TC)
            onehot = (row == idx).astype(jnp.float32)                           # (C, TC)
            code_rows.append(idx)

            # ---- single stacked lookup: [cb^T ; w_out@cb^T] @ onehot
            zcat = jnp.dot(lut_ref[q], onehot,
                           preferred_element_type=jnp.float32)   # (D_cb+D_in, TC)
            z_q_cb = zcat[:d_cb]                                 # (D_cb, TC) raw codebook
            z_q_i = zcat[d_cb:] + b_out_ref[q]                   # (D_in, TC) out_proj'd

            # ---- per-batch SSE (forward value of commitment & codebook loss)
            diff = z_e - z_q_cb
            colsse = jnp.sum(diff * diff, axis=0, keepdims=True)                # (1, TC)
            if mask_pad:
                colsse = jnp.where(valid, colsse, 0.0)
            sse = jnp.sum(colsse, axis=1, keepdims=True)                        # (1, 1)
            loss_acc = loss_acc + jnp.where(qlane == q, sse, 0.0)               # (1, nq)

            # ---- residual chain (straight-through forward value == z_q)
            zq_tot = zq_tot + z_q_i
            resid = resid - z_q_i

        # lane-dense stores: one per chunk for z_q and for all code rows
        zq_ref[0, :, pl.ds(off, t_chunk)] = zq_tot
        codes_ref[0, :, pl.ds(off, t_chunk)] = (
            jnp.concatenate(code_rows, axis=0).astype(jnp.int32))
        return loss_acc

    loss_acc = lax.fori_loop(0, n_chunks, chunk_body,
                             jnp.zeros((1, nq), jnp.float32))
    loss_ref[...] = loss_acc.reshape(loss_ref.shape)


# ---------------------------------------------------------------------------
# Wrapper
# ---------------------------------------------------------------------------
def _pick_time_tile(t_pad, max_tile=1024):
    """Largest lane-aligned tile (<= max_tile) dividing the padded time axis."""
    cand = min(max_tile, t_pad)
    while cand >= 128:
        if t_pad % cand == 0:
            return cand
        cand //= 2
    return t_pad


def _const_spec(shape):
    n = len(shape)
    return pl.BlockSpec(shape, lambda b, t: (0,) * n)


def _stack_params(params):
    """Hoisted per-forward precompute of all codebook-side tensors."""
    w_in = jnp.stack([p["w_in"] for p in params])                 # (nq, D_cb, D_in)
    b_in = jnp.stack([p["b_in"][:, None] for p in params])        # (nq, D_cb, 1)
    cb = jnp.stack([p["codebook"] for p in params])               # (nq, C, D_cb)
    cbn = cb / jnp.maximum(jnp.linalg.norm(cb, axis=-1, keepdims=True), 1e-12)
    # in_proj folded into the nearest-neighbour score matmul
    wfold = jnp.einsum("qcd,qdi->qci", cbn, w_in)                 # (nq, C, D_in)
    vfold = jnp.einsum("qcd,qdo->qco", cbn, b_in)                 # (nq, C, 1)
    # stacked one-hot lookup table: [codebook^T ; w_out @ codebook^T]
    cb_t = jnp.swapaxes(cb, 1, 2)                                 # (nq, D_cb, C)
    w_out = jnp.stack([p["w_out"] for p in params])               # (nq, D_in, D_cb)
    cb_out = jnp.einsum("qik,qck->qic", w_out, cb)                # (nq, D_in, C)
    lut = jnp.concatenate([cb_t, cb_out], axis=1)                 # (nq, D_cb+D_in, C)
    b_out = jnp.stack([p["b_out"][:, None] for p in params])      # (nq, D_in, 1)
    return wfold, vfold, w_in, b_in, lut, b_out


def _rvq_call(z, params, *, time_chunk=128, max_tile=1024):
    """One fused pallas_call over all quantizers sharing the same time axis.

    z: (B, D_in, T) float32.
    Returns: z_q (B, D_in, T), codes (B, nq, T) int32, loss (B, nq) per-batch
    mean((z_e - z_q)^2) per quantizer.
    """
    B, D_in, T = z.shape
    nq = len(params)
    wfold, vfold, w_in, b_in, lut, b_out = _stack_params(params)
    D_cb = w_in.shape[1]
    C = wfold.shape[1]

    # Pad T to a multiple of 128 -> lane-dense unmasked stores + real pipeline.
    T_pad = -(-T // 128) * 128
    z_p = z if T_pad == T else jnp.pad(z, ((0, 0), (0, 0), (0, T_pad - T)))
    Tt = _pick_time_tile(T_pad, max_tile)
    NT = T_pad // Tt
    TC = min(time_chunk, Tt)

    kernel = functools.partial(
        _rvq_kernel, nq=nq, d_cb=D_cb, t_true=T,
        t_tile=Tt, t_chunk=TC, mask_pad=(T_pad != T))

    zq, codes, loss = pl.pallas_call(
        kernel,
        grid=(B, NT),
        in_specs=[
            pl.BlockSpec((1, D_in, Tt), lambda b, t: (b, 0, t)),   # residual input
            _const_spec((nq, C, D_in)),                            # folded score W
            _const_spec((nq, C, 1)),                               # folded score bias
            _const_spec((nq, D_cb, D_in)),                         # w_in (loss only)
            _const_spec((nq, D_cb, 1)),                            # b_in
            _const_spec((nq, D_cb + D_in, C)),                     # stacked lookup
            _const_spec((nq, D_in, 1)),                            # b_out
        ],
        out_specs=(
            pl.BlockSpec((1, D_in, Tt), lambda b, t: (b, 0, t)),   # z_q total
            pl.BlockSpec((1, nq, Tt), lambda b, t: (b, 0, t)),     # codes
            pl.BlockSpec((1, 1, 1, nq), lambda b, t: (b, t, 0, 0)),  # per-tile SSE
        ),
        out_shape=(
            jax.ShapeDtypeStruct((B, D_in, T_pad), jnp.float32),
            jax.ShapeDtypeStruct((B, nq, T_pad), jnp.int32),
            jax.ShapeDtypeStruct((B, NT, 1, nq), jnp.float32),
        ),
        compiler_params=pltpu.CompilerParams(
            dimension_semantics=("parallel", "parallel"),
            vmem_limit_bytes=32 * 1024 * 1024,
        ),
    )(z_p, wfold, vfold, w_in, b_in, lut, b_out)

    if T_pad != T:
        zq = zq[:, :, :T]
        codes = codes[:, :, :T]
    per_batch = jnp.sum(loss[:, :, 0, :], axis=1) / (D_cb * T)     # (B, nq)
    return zq, codes, per_batch


def rvq_forward(z, quantizer_params):
    """ResidualVectorQuantize.forward.  z: (B, D_in, T) float32."""
    strides = [p["stride"] for p in quantizer_params]
    nq = len(quantizer_params)

    if all(s == 1 for s in strides):
        # Fast path: all quantizers share the time axis -> fully fused kernel.
        z_q, codes, loss_bq = _rvq_call(z, quantizer_params)      # loss (B, nq)
        per_q = jnp.mean(loss_bq, axis=0)                         # (nq,)
        commitment_loss = jnp.sum(per_q)
        codebook_loss = jnp.sum(per_q)   # identical forward value; detach is grad-only
        codes_list = [codes[:, q, :] for q in range(nq)]
        return z_q, codes_list, commitment_loss, codebook_loss

    # General-stride path: pooled time axes differ per quantizer, so quantizers
    # run as separate (single-quantizer) kernel calls with XLA pooling glue.
    # TODO(synk): fold the stride>1 avg_pool1d / repeat_interleave into the
    # kernel's load/store index maps instead of XLA passes around the call.
    z_q = jnp.zeros_like(z)
    residual = z
    commitment_loss = jnp.float32(0.0)
    codebook_loss = jnp.float32(0.0)
    codes_list = []
    for p in quantizer_params:
        stride = p["stride"]
        r = residual
        if stride > 1:
            B, D, T = r.shape
            t_out = T // stride
            r = r[:, :, :t_out * stride].reshape(B, D, t_out, stride).mean(axis=-1)
        zq_i, codes_i, loss_i = _rvq_call(r, [p])                 # loss_i (B, 1)
        if stride > 1:
            zq_i = jnp.repeat(zq_i, stride, axis=-1)              # repeat_interleave
        z_q = z_q + zq_i
        residual = residual - zq_i
        li = jnp.mean(loss_i[:, 0])
        commitment_loss = commitment_loss + li
        codebook_loss = codebook_loss + li
        codes_list.append(codes_i[:, 0, :])
    return z_q, codes_list, commitment_loss, codebook_loss


# ---------------------------------------------------------------------------
# Parameters + pure-JAX reference (forward semantics of the PyTorch module)
# ---------------------------------------------------------------------------
def init_params(key, input_dim, codebook_size, codebook_dim, vq_strides):
    """Deterministic synthetic parameters (weight-norm applied here)."""
    params = []
    for i, stride in enumerate(vq_strides):
        ks = jax.random.split(jax.random.fold_in(key, i), 7)
        v_in = jax.random.normal(ks[0], (codebook_dim, input_dim), jnp.float32) * 0.05
        g_in = jax.random.uniform(ks[1], (codebook_dim, 1), jnp.float32, 0.5, 1.5)
        w_in = g_in * v_in / jnp.linalg.norm(v_in, axis=1, keepdims=True)
        b_in = jax.random.normal(ks[2], (codebook_dim,), jnp.float32) * 0.01
        codebook = jax.random.normal(ks[3], (codebook_size, codebook_dim), jnp.float32)
        v_out = jax.random.normal(ks[4], (input_dim, codebook_dim), jnp.float32) * 0.05
        g_out = jax.random.uniform(ks[5], (input_dim, 1), jnp.float32, 0.5, 1.5)
        w_out = g_out * v_out / jnp.linalg.norm(v_out, axis=1, keepdims=True)
        b_out = jax.random.normal(ks[6], (input_dim,), jnp.float32) * 0.01
        params.append(dict(stride=stride, w_in=w_in, b_in=b_in, codebook=codebook,
                           w_out=w_out, b_out=b_out))
    return params


def _reference_rvq(z, params):
    """Direct (non-Pallas) transcription of the PyTorch forward pass."""
    z_q = jnp.zeros_like(z)
    residual = z
    commit = jnp.float32(0.0)
    codebk = jnp.float32(0.0)
    codes = []
    for p in params:
        stride = p["stride"]
        r = residual
        if stride > 1:
            B, D, T = r.shape
            t_out = T // stride
            r = r[:, :, :t_out * stride].reshape(B, D, t_out, stride).mean(axis=-1)
        B, D, T = r.shape
        z_e = jnp.einsum("ji,bit->bjt", p["w_in"], r) + p["b_in"][None, :, None]
        enc = z_e.transpose(0, 2, 1).reshape(B * T, -1)
        enc_n = enc / jnp.maximum(jnp.linalg.norm(enc, axis=1, keepdims=True), 1e-12)
        cb = p["codebook"]
        cb_n = cb / jnp.maximum(jnp.linalg.norm(cb, axis=1, keepdims=True), 1e-12)
        dist = (jnp.sum(enc_n ** 2, axis=1, keepdims=True)
                - 2.0 * enc_n @ cb_n.T
                + jnp.sum(cb_n ** 2, axis=1)[None, :])
        idx = jnp.argmax(-dist, axis=1).reshape(B, T)
        z_q_cb = cb[idx].transpose(0, 2, 1)                          # (B, D_cb, T)
        loss_b = jnp.mean((z_e - z_q_cb) ** 2, axis=(1, 2))
        zq_i = jnp.einsum("oj,bjt->bot", p["w_out"], z_q_cb) + p["b_out"][None, :, None]
        if stride > 1:
            zq_i = jnp.repeat(zq_i, stride, axis=-1)
        z_q = z_q + zq_i
        residual = residual - zq_i
        commit = commit + loss_b.mean()
        codebk = codebk + loss_b.mean()
        codes.append(idx)
    return z_q, codes, commit, codebk


# ---------------------------------------------------------------------------
if __name__ == "__main__":
    # Small shapes consistent with the module: (B, input_dim, T)
    input_dim, codebook_size, codebook_dim = 32, 128, 8
    B, T = 2, 16

    key = jax.random.PRNGKey(0)
    z = jax.random.normal(jax.random.fold_in(key, 123), (B, input_dim, T), jnp.float32)

    # --- fused stride-1 path ----------------------------------------------
    params = init_params(key, input_dim, codebook_size, codebook_dim, [1, 1, 1, 1])
    z_q, codes, commitment_loss, codebook_loss = rvq_forward(z, params)
    jax.block_until_ready((z_q, codes, commitment_loss, codebook_loss))

    assert z_q.shape == (B, input_dim, T)
    assert len(codes) == 4 and codes[0].shape == (B, T)

    r_zq, r_codes, r_commit, r_codebk = _reference_rvq(z, params)
    assert bool(jnp.allclose(z_q, r_zq, rtol=1e-3, atol=1e-3))
    assert all(bool(jnp.array_equal(a, b)) for a, b in zip(codes, r_codes))
    assert bool(jnp.allclose(commitment_loss, r_commit, rtol=1e-3, atol=1e-3))
    assert bool(jnp.allclose(codebook_loss, r_codebk, rtol=1e-3, atol=1e-3))

    # --- general-stride path (per-quantizer kernel calls + XLA glue) -------
    params_s = init_params(jax.random.fold_in(key, 7), input_dim, codebook_size,
                           codebook_dim, [1, 2])
    zq_s, codes_s, commit_s, codebk_s = rvq_forward(z, params_s)
    jax.block_until_ready((zq_s, codes_s, commit_s, codebk_s))

    r_zq_s, r_codes_s, r_commit_s, r_codebk_s = _reference_rvq(z, params_s)
    assert bool(jnp.allclose(zq_s, r_zq_s, rtol=1e-3, atol=1e-3))
    assert all(bool(jnp.array_equal(a, b)) for a, b in zip(codes_s, r_codes_s))
    assert bool(jnp.allclose(commit_s, r_commit_s, rtol=1e-3, atol=1e-3))
    assert bool(jnp.allclose(codebk_s, r_codebk_s, rtol=1e-3, atol=1e-3))

    print("KERNEL_OK")
</pallas_src>

<mosaic_0001>
module attributes {stable_mosaic.version = 11 : i64} {
  func.func @_rvq_kernel(%arg0: i32, %arg1: i32, %arg2: memref<1x32x128xf32, #tpu.memory_space<vmem>>, %arg3: memref<4x128x32xf32, #tpu.memory_space<vmem>>, %arg4: memref<4x128x1xf32, #tpu.memory_space<vmem>>, %arg5: memref<4x8x32xf32, #tpu.memory_space<vmem>>, %arg6: memref<4x8x1xf32, #tpu.memory_space<vmem>>, %arg7: memref<4x40x128xf32, #tpu.memory_space<vmem>>, %arg8: memref<4x32x1xf32, #tpu.memory_space<vmem>>, %arg9: memref<1x32x128xf32, #tpu.memory_space<vmem>>, %arg10: memref<1x4x128xi32, #tpu.memory_space<vmem>>, %arg11: memref<1x1x1x4xf32, #tpu.memory_space<vmem>>) attributes {dimension_semantics = [#tpu.dimension_semantics<parallel>, #tpu.dimension_semantics<parallel>], iteration_bounds = array<i64: 2, 1>, scalar_prefetch = 0 : i64, scratch_operands = 0 : i64, tpu.core_type = #tpu.core_type<tc>, window_params = [{transform_indices = @transform_0, window_bounds = array<i64: 1, 32, 128>}, {pipeline_mode = #tpu.pipeline_mode<synchronous>, transform_indices = @transform_1, window_bounds = array<i64: 4, 128, 32>}, {pipeline_mode = #tpu.pipeline_mode<synchronous>, transform_indices = @transform_2, window_bounds = array<i64: 4, 128, 1>}, {pipeline_mode = #tpu.pipeline_mode<synchronous>, transform_indices = @transform_3, window_bounds = array<i64: 4, 8, 32>}, {pipeline_mode = #tpu.pipeline_mode<synchronous>, transform_indices = @transform_4, window_bounds = array<i64: 4, 8, 1>}, {pipeline_mode = #tpu.pipeline_mode<synchronous>, transform_indices = @transform_5, window_bounds = array<i64: 4, 40, 128>}, {pipeline_mode = #tpu.pipeline_mode<synchronous>, transform_indices = @transform_6, window_bounds = array<i64: 4, 32, 1>}, {transform_indices = @transform_7, window_bounds = array<i64: 1, 32, 128>}, {transform_indices = @transform_8, window_bounds = array<i64: 1, 4, 128>}, {transform_indices = @transform_9, window_bounds = array<i64: 1, 1, 1, 4>}]} {
    %0 = tpu.iota {dimensions = array<i32: 1>} : vector<1x4xi32>
    %cst = arith.constant 0.000000e+00 : f32
    %1 = vector.broadcast %cst : f32 to vector<1x4xf32>
    %c0_i32 = arith.constant 0 : i32
    %c128_i32 = arith.constant 128 : i32
    %2 = arith.muli %c0_i32, %c128_i32 : i32
    %3 = tpu.assume_multiple %2, 128 : i32
    %c0 = arith.constant 0 : index
    %c0_0 = arith.constant 0 : index
    %4 = arith.index_cast %3 : i32 to index
    %5 = vector.load %arg2[%c0, %c0_0, %4] : memref<1x32x128xf32, #tpu.memory_space<vmem>>, vector<1x32x128xf32>
    %6 = vector.shape_cast %5 : vector<1x32x128xf32> to vector<32x128xf32>
    %cst_1 = arith.constant 0.000000e+00 : f32
    %7 = vector.broadcast %cst_1 : f32 to vector<32x128xf32>
    %c128_i32_2 = arith.constant 128 : i32
    %8 = arith.muli %arg1, %c128_i32_2 : i32
    %9 = arith.addi %8, %3 : i32
    %10 = tpu.iota {dimensions = array<i32: 1>} : vector<1x128xi32>
    %11 = vector.broadcast %9 : i32 to vector<1x128xi32>
    %12 = arith.addi %11, %10 : vector<1x128xi32>
    %c16_i32 = arith.constant 16 : i32
    %13 = vector.broadcast %c16_i32 : i32 to vector<1x128xi32>
    %14 = arith.cmpi slt, %12, %13 : vector<1x128xi32>
    %c0_3 = arith.constant 0 : index
    %c0_4 = arith.constant 0 : index
    %c0_5 = arith.constant 0 : index
    %15 = vector.load %arg3[%c0_3, %c0_4, %c0_5] : memref<4x128x32xf32, #tpu.memory_space<vmem>>, vector<1x128x32xf32>
    %16 = vector.shape_cast %15 : vector<1x128x32xf32> to vector<128x32xf32>
    %cst_6 = arith.constant dense<0.000000e+00> : vector<128x128xf32>
    %17 = tpu.matmul %16, %6, %cst_6 {dimension_numbers = #tpu.dot_dimension_numbers<[1], [0], [0], [1], [0, 0, 1, 1], [], []>} : vector<128x32xf32>, vector<32x128xf32>, vector<128x128xf32> -> vector<128x128xf32>
    %c0_7 = arith.constant 0 : index
    %c0_8 = arith.constant 0 : index
    %c0_9 = arith.constant 0 : index
    %18 = vector.load %arg4[%c0_7, %c0_8, %c0_9] : memref<4x128x1xf32, #tpu.memory_space<vmem>>, vector<1x128x1xf32>
    %19 = vector.shape_cast %18 : vector<1x128x1xf32> to vector<128x1xf32>
    %20 = vector.broadcast %19 : vector<128x1xf32> to vector<128x128xf32>
    %21 = arith.addf %17, %20 : vector<128x128xf32>
    %c0_10 = arith.constant 0 : index
    %c0_11 = arith.constant 0 : index
    %c0_12 = arith.constant 0 : index
    %22 = vector.load %arg5[%c0_10, %c0_11, %c0_12] : memref<4x8x32xf32, #tpu.memory_space<vmem>>, vector<1x8x32xf32>
    %23 = vector.shape_cast %22 : vector<1x8x32xf32> to vector<8x32xf32>
    %cst_13 = arith.constant dense<0.000000e+00> : vector<8x128xf32>
    %24 = tpu.matmul %23, %6, %cst_13 {dimension_numbers = #tpu.dot_dimension_numbers<[1], [0], [0], [1], [0, 0, 1, 1], [], []>} : vector<8x32xf32>, vector<32x128xf32>, vector<8x128xf32> -> vector<8x128xf32>
    %c0_14 = arith.constant 0 : index
    %c0_15 = arith.constant 0 : index
    %c0_16 = arith.constant 0 : index
    %25 = vector.load %arg6[%c0_14, %c0_15, %c0_16] : memref<4x8x1xf32, #tpu.memory_space<vmem>>, vector<1x8x1xf32>
    %26 = vector.shape_cast %25 : vector<1x8x1xf32> to vector<8x1xf32>
    %27 = vector.broadcast %26 : vector<8x1xf32> to vector<8x128xf32>
    %28 = arith.addf %24, %27 : vector<8x128xf32>
    %29 = tpu.iota {dimensions = array<i32: 0>} : vector<128x128xi32>
    %cst_17 = arith.constant dense<0xFF800000> : vector<128xf32>
    %30 = vector.multi_reduction <maximumf>, %21, %cst_17 [0] : vector<128x128xf32> to vector<128xf32>
    %31 = vector.shape_cast %30 : vector<128xf32> to vector<1x128xf32>
    %32 = vector.broadcast %31 : vector<1x128xf32> to vector<128x128xf32>
    %33 = arith.cmpf oge, %21, %32 : vector<128x128xf32>
    %c128_i32_18 = arith.constant 128 : i32
    %34 = vector.broadcast %c128_i32_18 : i32 to vector<128x128xi32>
    %35 = arith.select %33, %29, %34 : vector<128x128xi1>, vector<128x128xi32>
    %cst_19 = arith.constant dense<2147483647> : vector<128xi32>
    %36 = vector.multi_reduction <minsi>, %35, %cst_19 [0] : vector<128x128xi32> to vector<128xi32>
    %37 = vector.shape_cast %36 : vector<128xi32> to vector<1x128xi32>
    %38 = vector.broadcast %37 : vector<1x128xi32> to vector<128x128xi32>
    %39 = arith.cmpi eq, %29, %38 : vector<128x128xi32>
    %40 = arith.extui %39 : vector<128x128xi1> to vector<128x128xi32>
    %41 = arith.sitofp %40 : vector<128x128xi32> to vector<128x128xf32>
    %c0_20 = arith.constant 0 : index
    %c0_21 = arith.constant 0 : index
    %c0_22 = arith.constant 0 : index
    %42 = vector.load %arg7[%c0_20, %c0_21, %c0_22] : memref<4x40x128xf32, #tpu.memory_space<vmem>>, vector<1x40x128xf32>
    %43 = vector.shape_cast %42 : vector<1x40x128xf32> to vector<40x128xf32>
    %cst_23 = arith.constant dense<0.000000e+00> : vector<40x128xf32>
    %44 = tpu.matmul %43, %41, %cst_23 {dimension_numbers = #tpu.dot_dimension_numbers<[1], [0], [0], [1], [0, 0, 1, 1], [], []>} : vector<40x128xf32>, vector<128x128xf32>, vector<40x128xf32> -> vector<40x128xf32>
    %45 = vector.extract_strided_slice %44 {offsets = [0, 0], sizes = [8, 128], strides = [1, 1]} : vector<40x128xf32> to vector<8x128xf32>
    %46 = vector.extract_strided_slice %44 {offsets = [8, 0], sizes = [32, 128], strides = [1, 1]} : vector<40x128xf32> to vector<32x128xf32>
    %c0_24 = arith.constant 0 : index
    %c0_25 = arith.constant 0 : index
    %c0_26 = arith.constant 0 : index
    %47 = vector.load %arg8[%c0_24, %c0_25, %c0_26] : memref<4x32x1xf32, #tpu.memory_space<vmem>>, vector<1x32x1xf32>
    %48 = vector.shape_cast %47 : vector<1x32x1xf32> to vector<32x1xf32>
    %49 = vector.broadcast %48 : vector<32x1xf32> to vector<32x128xf32>
    %50 = arith.addf %46, %49 : vector<32x128xf32>
    %51 = arith.subf %28, %45 : vector<8x128xf32>
    %52 = arith.mulf %51, %51 : vector<8x128xf32>
    %cst_27 = arith.constant dense<0.000000e+00> : vector<128xf32>
    %53 = vector.multi_reduction <add>, %52, %cst_27 [0] : vector<8x128xf32> to vector<128xf32>
    %54 = vector.shape_cast %53 : vector<128xf32> to vector<1x128xf32>
    %cst_28 = arith.constant 0.000000e+00 : f32
    %55 = vector.broadcast %cst_28 : f32 to vector<1x128xf32>
    %56 = arith.select %14, %54, %55 : vector<1x128xi1>, vector<1x128xf32>
    %cst_29 = arith.constant dense<0.000000e+00> : vector<1xf32>
    %57 = vector.multi_reduction <add>, %56, %cst_29 [1] : vector<1x128xf32> to vector<1xf32>
    %58 = vector.shape_cast %57 : vector<1xf32> to vector<1x1xf32>
    %c0_i32_30 = arith.constant 0 : i32
    %59 = vector.broadcast %c0_i32_30 : i32 to vector<1x4xi32>
    %60 = arith.cmpi eq, %0, %59 : vector<1x4xi32>
    %cst_31 = arith.constant 0.000000e+00 : f32
    %61 = vector.shape_cast %58 : vector<1x1xf32> to vector<1x1xf32>
    %62 = vector.broadcast %61 : vector<1x1xf32> to vector<1x4xf32>
    %63 = vector.broadcast %cst_31 : f32 to vector<1x4xf32>
    %64 = arith.select %60, %62, %63 : vector<1x4xi1>, vector<1x4xf32>
    %65 = arith.addf %1, %64 : vector<1x4xf32>
    %66 = arith.addf %7, %50 : vector<32x128xf32>
    %67 = arith.subf %6, %50 : vector<32x128xf32>
    %c1 = arith.constant 1 : index
    %c0_32 = arith.constant 0 : index
    %c0_33 = arith.constant 0 : index
    %68 = vector.load %arg3[%c1, %c0_32, %c0_33] : memref<4x128x32xf32, #tpu.memory_space<vmem>>, vector<1x128x32xf32>
    %69 = vector.shape_cast %68 : vector<1x128x32xf32> to vector<128x32xf32>
    %cst_34 = arith.constant dense<0.000000e+00> : vector<128x128xf32>
    %70 = tpu.matmul %69, %67, %cst_34 {dimension_numbers = #tpu.dot_dimension_numbers<[1], [0], [0], [1], [0, 0, 1, 1], [], []>} : vector<128x32xf32>, vector<32x128xf32>, vector<128x128xf32> -> vector<128x128xf32>
    %c1_35 = arith.constant 1 : index
    %c0_36 = arith.constant 0 : index
    %c0_37 = arith.constant 0 : index
    %71 = vector.load %arg4[%c1_35, %c0_36, %c0_37] : memref<4x128x1xf32, #tpu.memory_space<vmem>>, vector<1x128x1xf32>
    %72 = vector.shape_cast %71 : vector<1x128x1xf32> to vector<128x1xf32>
    %73 = vector.broadcast %72 : vector<128x1xf32> to vector<128x128xf32>
    %74 = arith.addf %70, %73 : vector<128x128xf32>
    %c1_38 = arith.constant 1 : index
    %c0_39 = arith.constant 0 : index
    %c0_40 = arith.constant 0 : index
    %75 = vector.load %arg5[%c1_38, %c0_39, %c0_40] : memref<4x8x32xf32, #tpu.memory_space<vmem>>, vector<1x8x32xf32>
    %76 = vector.shape_cast %75 : vector<1x8x32xf32> to vector<8x32xf32>
    %cst_41 = arith.constant dense<0.000000e+00> : vector<8x128xf32>
    %77 = tpu.matmul %76, %67, %cst_41 {dimension_numbers = #tpu.dot_dimension_numbers<[1], [0], [0], [1], [0, 0, 1, 1], [], []>} : vector<8x32xf32>, vector<32x128xf32>, vector<8x128xf32> -> vector<8x128xf32>
    %c1_42 = arith.constant 1 : index
    %c0_43 = arith.constant 0 : index
    %c0_44 = arith.constant 0 : index
    %78 = vector.load %arg6[%c1_42, %c0_43, %c0_44] : memref<4x8x1xf32, #tpu.memory_space<vmem>>, vector<1x8x1xf32>
    %79 = vector.shape_cast %78 : vector<1x8x1xf32> to vector<8x1xf32>
    %80 = vector.broadcast %79 : vector<8x1xf32> to vector<8x128xf32>
    %81 = arith.addf %77, %80 : vector<8x128xf32>
    %82 = tpu.iota {dimensions = array<i32: 0>} : vector<128x128xi32>
    %cst_45 = arith.constant dense<0xFF800000> : vector<128xf32>
    %83 = vector.multi_reduction <maximumf>, %74, %cst_45 [0] : vector<128x128xf32> to vector<128xf32>
    %84 = vector.shape_cast %83 : vector<128xf32> to vector<1x128xf32>
    %85 = vector.broadcast %84 : vector<1x128xf32> to vector<128x128xf32>
    %86 = arith.cmpf oge, %74, %85 : vector<128x128xf32>
    %c128_i32_46 = arith.constant 128 : i32
    %87 = vector.broadcast %c128_i32_46 : i32 to vector<128x128xi32>
    %88 = arith.select %86, %82, %87 : vector<128x128xi1>, vector<128x128xi32>
    %cst_47 = arith.constant dense<2147483647> : vector<128xi32>
    %89 = vector.multi_reduction <minsi>, %88, %cst_47 [0] : vector<128x128xi32> to vector<128xi32>
    %90 = vector.shape_cast %89 : vector<128xi32> to vector<1x128xi32>
    %91 = vector.broadcast %90 : vector<1x128xi32> to vector<128x128xi32>
    %92 = arith.cmpi eq, %82, %91 : vector<128x128xi32>
    %93 = arith.extui %92 : vector<128x128xi1> to vector<128x128xi32>
    %94 = arith.sitofp %93 : vector<128x128xi32> to vector<128x128xf32>
    %c1_48 = arith.constant 1 : index
    %c0_49 = arith.constant 0 : index
    %c0_50 = arith.constant 0 : index
    %95 = vector.load %arg7[%c1_48, %c0_49, %c0_50] : memref<4x40x128xf32, #tpu.memory_space<vmem>>, vector<1x40x128xf32>
    %96 = vector.shape_cast %95 : vector<1x40x128xf32> to vector<40x128xf32>
    %cst_51 = arith.constant dense<0.000000e+00> : vector<40x128xf32>
    %97 = tpu.matmul %96, %94, %cst_51 {dimension_numbers = #tpu.dot_dimension_numbers<[1], [0], [0], [1], [0, 0, 1, 1], [], []>} : vector<40x128xf32>, vector<128x128xf32>, vector<40x128xf32> -> vector<40x128xf32>
    %98 = vector.extract_strided_slice %97 {offsets = [0, 0], sizes = [8, 128], strides = [1, 1]} : vector<40x128xf32> to vector<8x128xf32>
    %99 = vector.extract_strided_slice %97 {offsets = [8, 0], sizes = [32, 128], strides = [1, 1]} : vector<40x128xf32> to vector<32x128xf32>
    %c1_52 = arith.constant 1 : index
    %c0_53 = arith.constant 0 : index
    %c0_54 = arith.constant 0 : index
    %100 = vector.load %arg8[%c1_52, %c0_53, %c0_54] : memref<4x32x1xf32, #tpu.memory_space<vmem>>, vector<1x32x1xf32>
    %101 = vector.shape_cast %100 : vector<1x32x1xf32> to vector<32x1xf32>
    %102 = vector.broadcast %101 : vector<32x1xf32> to vector<32x128xf32>
    %103 = arith.addf %99, %102 : vector<32x128xf32>
    %104 = arith.subf %81, %98 : vector<8x128xf32>
    %105 = arith.mulf %104, %104 : vector<8x128xf32>
    %cst_55 = arith.constant dense<0.000000e+00> : vector<128xf32>
    %106 = vector.multi_reduction <add>, %105, %cst_55 [0] : vector<8x128xf32> to vector<128xf32>
    %107 = vector.shape_cast %106 : vector<128xf32> to vector<1x128xf32>
    %cst_56 = arith.constant 0.000000e+00 : f32
    %108 = vector.broadcast %cst_56 : f32 to vector<1x128xf32>
    %109 = arith.select %14, %107, %108 : vector<1x128xi1>, vector<1x128xf32>
    %cst_57 = arith.constant dense<0.000000e+00> : vector<1xf32>
    %110 = vector.multi_reduction <add>, %109, %cst_57 [1] : vector<1x128xf32> to vector<1xf32>
    %111 = vector.shape_cast %110 : vector<1xf32> to vector<1x1xf32>
    %c1_i32 = arith.constant 1 : i32
    %112 = vector.broadcast %c1_i32 : i32 to vector<1x4xi32>
    %113 = arith.cmpi eq, %0, %112 : vector<1x4xi32>
    %cst_58 = arith.constant 0.000000e+00 : f32
    %114 = vector.shape_cast %111 : vector<1x1xf32> to vector<1x1xf32>
    %115 = vector.broadcast %114 : vector<1x1xf32> to vector<1x4xf32>
    %116 = vector.broadcast %cst_58 : f32 to vector<1x4xf32>
    %117 = arith.select %113, %115, %116 : vector<1x4xi1>, vector<1x4xf32>
    %118 = arith.addf %65, %117 : vector<1x4xf32>
    %119 = arith.addf %66, %103 : vector<32x128xf32>
    %120 = arith.subf %67, %103 : vector<32x128xf32>
    %c2 = arith.constant 2 : index
    %c0_59 = arith.constant 0 : index
    %c0_60 = arith.constant 0 : index
    %121 = vector.load %arg3[%c2, %c0_59, %c0_60] : memref<4x128x32xf32, #tpu.memory_space<vmem>>, vector<1x128x32xf32>
    %122 = vector.shape_cast %121 : vector<1x128x32xf32> to vector<128x32xf32>
    %cst_61 = arith.constant dense<0.000000e+00> : vector<128x128xf32>
    %123 = tpu.matmul %122, %120, %cst_61 {dimension_numbers = #tpu.dot_dimension_numbers<[1], [0], [0], [1], [0, 0, 1, 1], [], []>} : vector<128x32xf32>, vector<32x128xf32>, vector<128x128xf32> -> vector<128x128xf32>
    %c2_62 = arith.constant 2 : index
    %c0_63 = arith.constant 0 : index
    %c0_64 = arith.constant 0 : index
    %124 = vector.load %arg4[%c2_62, %c0_63, %c0_64] : memref<4x128x1xf32, #tpu.memory_space<vmem>>, vector<1x128x1xf32>
    %125 = vector.shape_cast %124 : vector<1x128x1xf32> to vector<128x1xf32>
    %126 = vector.broadcast %125 : vector<128x1xf32> to vector<128x128xf32>
    %127 = arith.addf %123, %126 : vector<128x128xf32>
    %c2_65 = arith.constant 2 : index
    %c0_66 = arith.constant 0 : index
    %c0_67 = arith.constant 0 : index
    %128 = vector.load %arg5[%c2_65, %c0_66, %c0_67] : memref<4x8x32xf32, #tpu.memory_space<vmem>>, vector<1x8x32xf32>
    %129 = vector.shape_cast %128 : vector<1x8x32xf32> to vector<8x32xf32>
    %cst_68 = arith.constant dense<0.000000e+00> : vector<8x128xf32>
    %130 = tpu.matmul %129, %120, %cst_68 {dimension_numbers = #tpu.dot_dimension_numbers<[1], [0], [0], [1], [0, 0, 1, 1], [], []>} : vector<8x32xf32>, vector<32x128xf32>, vector<8x128xf32> -> vector<8x128xf32>
    %c2_69 = arith.constant 2 : index
    %c0_70 = arith.constant 0 : index
    %c0_71 = arith.constant 0 : index
    %131 = vector.load %arg6[%c2_69, %c0_70, %c0_71] : memref<4x8x1xf32, #tpu.memory_space<vmem>>, vector<1x8x1xf32>
    %132 = vector.shape_cast %131 : vector<1x8x1xf32> to vector<8x1xf32>
    %133 = vector.broadcast %132 : vector<8x1xf32> to vector<8x128xf32>
    %134 = arith.addf %130, %133 : vector<8x128xf32>
    %135 = tpu.iota {dimensions = array<i32: 0>} : vector<128x128xi32>
    %cst_72 = arith.constant dense<0xFF800000> : vector<128xf32>
    %136 = vector.multi_reduction <maximumf>, %127, %cst_72 [0] : vector<128x128xf32> to vector<128xf32>
    %137 = vector.shape_cast %136 : vector<128xf32> to vector<1x128xf32>
    %138 = vector.broadcast %137 : vector<1x128xf32> to vector<128x128xf32>
    %139 = arith.cmpf oge, %127, %138 : vector<128x128xf32>
    %c128_i32_73 = arith.constant 128 : i32
    %140 = vector.broadcast %c128_i32_73 : i32 to vector<128x128xi32>
    %141 = arith.select %139, %135, %140 : vector<128x128xi1>, vector<128x128xi32>
    %cst_74 = arith.constant dense<2147483647> : vector<128xi32>
    %142 = vector.multi_reduction <minsi>, %141, %cst_74 [0] : vector<128x128xi32> to vector<128xi32>
    %143 = vector.shape_cast %142 : vector<128xi32> to vector<1x128xi32>
    %144 = vector.broadcast %143 : vector<1x128xi32> to vector<128x128xi32>
    %145 = arith.cmpi eq, %135, %144 : vector<128x128xi32>
    %146 = arith.extui %145 : vector<128x128xi1> to vector<128x128xi32>
    %147 = arith.sitofp %146 : vector<128x128xi32> to vector<128x128xf32>
    %c2_75 = arith.constant 2 : index
    %c0_76 = arith.constant 0 : index
    %c0_77 = arith.constant 0 : index
    %148 = vector.load %arg7[%c2_75, %c0_76, %c0_77] : memref<4x40x128xf32, #tpu.memory_space<vmem>>, vector<1x40x128xf32>
    %149 = vector.shape_cast %148 : vector<1x40x128xf32> to vector<40x128xf32>
    %cst_78 = arith.constant dense<0.000000e+00> : vector<40x128xf32>
    %150 = tpu.matmul %149, %147, %cst_78 {dimension_numbers = #tpu.dot_dimension_numbers<[1], [0], [0], [1], [0, 0, 1, 1], [], []>} : vector<40x128xf32>, vector<128x128xf32>, vector<40x128xf32> -> vector<40x128xf32>
    %151 = vector.extract_strided_slice %150 {offsets = [0, 0], sizes = [8, 128], strides = [1, 1]} : vector<40x128xf32> to vector<8x128xf32>
    %152 = vector.extract_strided_slice %150 {offsets = [8, 0], sizes = [32, 128], strides = [1, 1]} : vector<40x128xf32> to vector<32x128xf32>
    %c2_79 = arith.constant 2 : index
    %c0_80 = arith.constant 0 : index
    %c0_81 = arith.constant 0 : index
    %153 = vector.load %arg8[%c2_79, %c0_80, %c0_81] : memref<4x32x1xf32, #tpu.memory_space<vmem>>, vector<1x32x1xf32>
    %154 = vector.shape_cast %153 : vector<1x32x1xf32> to vector<32x1xf32>
    %155 = vector.broadcast %154 : vector<32x1xf32> to vector<32x128xf32>
    %156 = arith.addf %152, %155 : vector<32x128xf32>
    %157 = arith.subf %134, %151 : vector<8x128xf32>
    %158 = arith.mulf %157, %157 : vector<8x128xf32>
    %cst_82 = arith.constant dense<0.000000e+00> : vector<128xf32>
    %159 = vector.multi_reduction <add>, %158, %cst_82 [0] : vector<8x128xf32> to vector<128xf32>
    %160 = vector.shape_cast %159 : vector<128xf32> to vector<1x128xf32>
    %cst_83 = arith.constant 0.000000e+00 : f32
    %161 = vector.broadcast %cst_83 : f32 to vector<1x128xf32>
    %162 = arith.select %14, %160, %161 : vector<1x128xi1>, vector<1x128xf32>
    %cst_84 = arith.constant dense<0.000000e+00> : vector<1xf32>
    %163 = vector.multi_reduction <add>, %162, %cst_84 [1] : vector<1x128xf32> to vector<1xf32>
    %164 = vector.shape_cast %163 : vector<1xf32> to vector<1x1xf32>
    %c2_i32 = arith.constant 2 : i32
    %165 = vector.broadcast %c2_i32 : i32 to vector<1x4xi32>
    %166 = arith.cmpi eq, %0, %165 : vector<1x4xi32>
    %cst_85 = arith.constant 0.000000e+00 : f32
    %167 = vector.shape_cast %164 : vector<1x1xf32> to vector<1x1xf32>
    %168 = vector.broadcast %167 : vector<1x1xf32> to vector<1x4xf32>
    %169 = vector.broadcast %cst_85 : f32 to vector<1x4xf32>
    %170 = arith.select %166, %168, %169 : vector<1x4xi1>, vector<1x4xf32>
    %171 = arith.addf %118, %170 : vector<1x4xf32>
    %172 = arith.addf %119, %156 : vector<32x128xf32>
    %173 = arith.subf %120, %156 : vector<32x128xf32>
    %c3 = arith.constant 3 : index
    %c0_86 = arith.constant 0 : index
    %c0_87 = arith.constant 0 : index
    %174 = vector.load %arg3[%c3, %c0_86, %c0_87] : memref<4x128x32xf32, #tpu.memory_space<vmem>>, vector<1x128x32xf32>
    %175 = vector.shape_cast %174 : vector<1x128x32xf32> to vector<128x32xf32>
    %cst_88 = arith.constant dense<0.000000e+00> : vector<128x128xf32>
    %176 = tpu.matmul %175, %173, %cst_88 {dimension_numbers = #tpu.dot_dimension_numbers<[1], [0], [0], [1], [0, 0, 1, 1], [], []>} : vector<128x32xf32>, vector<32x128xf32>, vector<128x128xf32> -> vector<128x128xf32>
    %c3_89 = arith.constant 3 : index
    %c0_90 = arith.constant 0 : index
    %c0_91 = arith.constant 0 : index
    %177 = vector.load %arg4[%c3_89, %c0_90, %c0_91] : memref<4x128x1xf32, #tpu.memory_space<vmem>>, vector<1x128x1xf32>
    %178 = vector.shape_cast %177 : vector<1x128x1xf32> to vector<128x1xf32>
    %179 = vector.broadcast %178 : vector<128x1xf32> to vector<128x128xf32>
    %180 = arith.addf %176, %179 : vector<128x128xf32>
    %c3_92 = arith.constant 3 : index
    %c0_93 = arith.constant 0 : index
    %c0_94 = arith.constant 0 : index
    %181 = vector.load %arg5[%c3_92, %c0_93, %c0_94] : memref<4x8x32xf32, #tpu.memory_space<vmem>>, vector<1x8x32xf32>
    %182 = vector.shape_cast %181 : vector<1x8x32xf32> to vector<8x32xf32>
    %cst_95 = arith.constant dense<0.000000e+00> : vector<8x128xf32>
    %183 = tpu.matmul %182, %173, %cst_95 {dimension_numbers = #tpu.dot_dimension_numbers<[1], [0], [0], [1], [0, 0, 1, 1], [], []>} : vector<8x32xf32>, vector<32x128xf32>, vector<8x128xf32> -> vector<8x128xf32>
    %c3_96 = arith.constant 3 : index
    %c0_97 = arith.constant 0 : index
    %c0_98 = arith.constant 0 : index
    %184 = vector.load %arg6[%c3_96, %c0_97, %c0_98] : memref<4x8x1xf32, #tpu.memory_space<vmem>>, vector<1x8x1xf32>
    %185 = vector.shape_cast %184 : vector<1x8x1xf32> to vector<8x1xf32>
    %186 = vector.broadcast %185 : vector<8x1xf32> to vector<8x128xf32>
    %187 = arith.addf %183, %186 : vector<8x128xf32>
    %188 = tpu.iota {dimensions = array<i32: 0>} : vector<128x128xi32>
    %cst_99 = arith.constant dense<0xFF800000> : vector<128xf32>
    %189 = vector.multi_reduction <maximumf>, %180, %cst_99 [0] : vector<128x128xf32> to vector<128xf32>
    %190 = vector.shape_cast %189 : vector<128xf32> to vector<1x128xf32>
    %191 = vector.broadcast %190 : vector<1x128xf32> to vector<128x128xf32>
    %192 = arith.cmpf oge, %180, %191 : vector<128x128xf32>
    %c128_i32_100 = arith.constant 128 : i32
    %193 = vector.broadcast %c128_i32_100 : i32 to vector<128x128xi32>
    %194 = arith.select %192, %188, %193 : vector<128x128xi1>, vector<128x128xi32>
    %cst_101 = arith.constant dense<2147483647> : vector<128xi32>
    %195 = vector.multi_reduction <minsi>, %194, %cst_101 [0] : vector<128x128xi32> to vector<128xi32>
    %196 = vector.shape_cast %195 : vector<128xi32> to vector<1x128xi32>
    %197 = vector.broadcast %196 : vector<1x128xi32> to vector<128x128xi32>
    %198 = arith.cmpi eq, %188, %197 : vector<128x128xi32>
    %199 = arith.extui %198 : vector<128x128xi1> to vector<128x128xi32>
    %200 = arith.sitofp %199 : vector<128x128xi32> to vector<128x128xf32>
    %c3_102 = arith.constant 3 : index
    %c0_103 = arith.constant 0 : index
    %c0_104 = arith.constant 0 : index
    %201 = vector.load %arg7[%c3_102, %c0_103, %c0_104] : memref<4x40x128xf32, #tpu.memory_space<vmem>>, vector<1x40x128xf32>
    %202 = vector.shape_cast %201 : vector<1x40x128xf32> to vector<40x128xf32>
    %cst_105 = arith.constant dense<0.000000e+00> : vector<40x128xf32>
    %203 = tpu.matmul %202, %200, %cst_105 {dimension_numbers = #tpu.dot_dimension_numbers<[1], [0], [0], [1], [0, 0, 1, 1], [], []>} : vector<40x128xf32>, vector<128x128xf32>, vector<40x128xf32> -> vector<40x128xf32>
    %204 = vector.extract_strided_slice %203 {offsets = [0, 0], sizes = [8, 128], strides = [1, 1]} : vector<40x128xf32> to vector<8x128xf32>
    %205 = vector.extract_strided_slice %203 {offsets = [8, 0], sizes = [32, 128], strides = [1, 1]} : vector<40x128xf32> to vector<32x128xf32>
    %c3_106 = arith.constant 3 : index
    %c0_107 = arith.constant 0 : index
    %c0_108 = arith.constant 0 : index
    %206 = vector.load %arg8[%c3_106, %c0_107, %c0_108] : memref<4x32x1xf32, #tpu.memory_space<vmem>>, vector<1x32x1xf32>
    %207 = vector.shape_cast %206 : vector<1x32x1xf32> to vector<32x1xf32>
    %208 = vector.broadcast %207 : vector<32x1xf32> to vector<32x128xf32>
    %209 = arith.addf %205, %208 : vector<32x128xf32>
    %210 = arith.subf %187, %204 : vector<8x128xf32>
    %211 = arith.mulf %210, %210 : vector<8x128xf32>
    %cst_109 = arith.constant dense<0.000000e+00> : vector<128xf32>
    %212 = vector.multi_reduction <add>, %211, %cst_109 [0] : vector<8x128xf32> to vector<128xf32>
    %213 = vector.shape_cast %212 : vector<128xf32> to vector<1x128xf32>
    %cst_110 = arith.constant 0.000000e+00 : f32
    %214 = vector.broadcast %cst_110 : f32 to vector<1x128xf32>
    %215 = arith.select %14, %213, %214 : vector<1x128xi1>, vector<1x128xf32>
    %cst_111 = arith.constant dense<0.000000e+00> : vector<1xf32>
    %216 = vector.multi_reduction <add>, %215, %cst_111 [1] : vector<1x128xf32> to vector<1xf32>
    %217 = vector.shape_cast %216 : vector<1xf32> to vector<1x1xf32>
    %c3_i32 = arith.constant 3 : i32
    %218 = vector.broadcast %c3_i32 : i32 to vector<1x4xi32>
    %219 = arith.cmpi eq, %0, %218 : vector<1x4xi32>
    %cst_112 = arith.constant 0.000000e+00 : f32
    %220 = vector.shape_cast %217 : vector<1x1xf32> to vector<1x1xf32>
    %221 = vector.broadcast %220 : vector<1x1xf32> to vector<1x4xf32>
    %222 = vector.broadcast %cst_112 : f32 to vector<1x4xf32>
    %223 = arith.select %219, %221, %222 : vector<1x4xi1>, vector<1x4xf32>
    %224 = arith.addf %171, %223 : vector<1x4xf32>
    %225 = arith.addf %172, %209 : vector<32x128xf32>
    %c0_113 = arith.constant 0 : index
    %c0_114 = arith.constant 0 : index
    %226 = arith.index_cast %3 : i32 to index
    %227 = vector.load %arg9[%c0_113, %c0_114, %226] : memref<1x32x128xf32, #tpu.memory_space<vmem>>, vector<1x32x128xf32>
    %228 = vector.shape_cast %227 : vector<1x32x128xf32> to vector<32x128xf32>
    %229 = vector.shape_cast %225 : vector<32x128xf32> to vector<1x32x128xf32>
    tpu.vector_store %arg9[%c0_113, %c0_114, %226], %229 {strides = array<i32>} : memref<1x32x128xf32, #tpu.memory_space<vmem>>, vector<1x32x128xf32>,
    %230 = tpu.concatenate %37, %90, %143, %196 in 0 : vector<1x128xi32>, vector<1x128xi32>, vector<1x128xi32>, vector<1x128xi32> -> vector<4x128xi32>
    %c0_115 = arith.constant 0 : index
    %c0_116 = arith.constant 0 : index
    %231 = arith.index_cast %3 : i32 to index
    %232 = vector.load %arg10[%c0_115, %c0_116, %231] : memref<1x4x128xi32, #tpu.memory_space<vmem>>, vector<1x4x128xi32>
    %233 = vector.shape_cast %232 : vector<1x4x128xi32> to vector<4x128xi32>
    %234 = vector.shape_cast %230 : vector<4x128xi32> to vector<1x4x128xi32>
    tpu.vector_store %arg10[%c0_115, %c0_116, %231], %234 {strides = array<i32>} : memref<1x4x128xi32, #tpu.memory_space<vmem>>, vector<1x4x128xi32>,
    %c1_i32_117 = arith.constant 1 : i32
    %235 = vector.shape_cast %224 : vector<1x4xf32> to vector<1x1x1x4xf32>
    %c0_118 = arith.constant 0 : index
    %c0_119 = arith.constant 0 : index
    %c0_120 = arith.constant 0 : index
    %c0_121 = arith.constant 0 : index
    %236 = vector.load %arg11[%c0_118, %c0_119, %c0_120, %c0_121] : memref<1x1x1x4xf32, #tpu.memory_space<vmem>>, vector<1x1x1x4xf32>
    tpu.vector_store %arg11[%c0_118, %c0_119, %c0_120, %c0_121], %235 {strides = array<i32>} : memref<1x1x1x4xf32, #tpu.memory_space<vmem>>, vector<1x1x1x4xf32>,
    return
  }
  func.func @transform_0(%arg0: i32, %arg1: i32) -> (i32, i32, i32) {
    %c0_i32 = arith.constant 0 : i32
    %c0_i32_0 = arith.constant 0 : i32
    return %arg0, %c0_i32, %arg1 : i32, i32, i32
  }
  func.func @transform_1(%arg0: i32, %arg1: i32) -> (i32, i32, i32) {
    %c0_i32 = arith.constant 0 : i32
    %c0_i32_0 = arith.constant 0 : i32
    %c0_i32_1 = arith.constant 0 : i32
    %c0_i32_2 = arith.constant 0 : i32
    return %c0_i32, %c0_i32_0, %c0_i32_1 : i32, i32, i32
  }
  func.func @transform_2(%arg0: i32, %arg1: i32) -> (i32, i32, i32) {
    %c0_i32 = arith.constant 0 : i32
    %c0_i32_0 = arith.constant 0 : i32
    %c0_i32_1 = arith.constant 0 : i32
    %c0_i32_2 = arith.constant 0 : i32
    return %c0_i32, %c0_i32_0, %c0_i32_1 : i32, i32, i32
  }
  func.func @transform_3(%arg0: i32, %arg1: i32) -> (i32, i32, i32) {
    %c0_i32 = arith.constant 0 : i32
    %c0_i32_0 = arith.constant 0 : i32
    %c0_i32_1 = arith.constant 0 : i32
    %c0_i32_2 = arith.constant 0 : i32
    return %c0_i32, %c0_i32_0, %c0_i32_1 : i32, i32, i32
  }
  func.func @transform_4(%arg0: i32, %arg1: i32) -> (i32, i32, i32) {
    %c0_i32 = arith.constant 0 : i32
    %c0_i32_0 = arith.constant 0 : i32
    %c0_i32_1 = arith.constant 0 : i32
    %c0_i32_2 = arith.constant 0 : i32
    return %c0_i32, %c0_i32_0, %c0_i32_1 : i32, i32, i32
  }
  func.func @transform_5(%arg0: i32, %arg1: i32) -> (i32, i32, i32) {
    %c0_i32 = arith.constant 0 : i32
    %c0_i32_0 = arith.constant 0 : i32
    %c0_i32_1 = arith.constant 0 : i32
    %c0_i32_2 = arith.constant 0 : i32
    return %c0_i32, %c0_i32_0, %c0_i32_1 : i32, i32, i32
  }
  func.func @transform_6(%arg0: i32, %arg1: i32) -> (i32, i32, i32) {
    %c0_i32 = arith.constant 0 : i32
    %c0_i32_0 = arith.constant 0 : i32
    %c0_i32_1 = arith.constant 0 : i32
    %c0_i32_2 = arith.constant 0 : i32
    return %c0_i32, %c0_i32_0, %c0_i32_1 : i32, i32, i32
  }
  func.func @transform_7(%arg0: i32, %arg1: i32) -> (i32, i32, i32) {
    %c0_i32 = arith.constant 0 : i32
    %c0_i32_0 = arith.constant 0 : i32
    return %arg0, %c0_i32, %arg1 : i32, i32, i32
  }
  func.func @transform_8(%arg0: i32, %arg1: i32) -> (i32, i32, i32) {
    %c0_i32 = arith.constant 0 : i32
    %c0_i32_0 = arith.constant 0 : i32
    return %arg0, %c0_i32, %arg1 : i32, i32, i32
  }
  func.func @transform_9(%arg0: i32, %arg1: i32) -> (i32, i32, i32, i32) {
    %c0_i32 = arith.constant 0 : i32
    %c0_i32_0 = arith.constant 0 : i32
    %c0_i32_1 = arith.constant 0 : i32
    return %arg0, %arg1, %c0_i32, %c0_i32_0 : i32, i32, i32, i32
  }
}

</mosaic_0001>

<llo_original>
// kernel: tpu_custom_call.1
$region0: #{tpu_custom_call.1}
  #allocation0 [shape = 'u32[]', space=smem, size = 0x4, offset = 0x4, fixed_abs, tag = 'smem constant byte address 0x4 - core index']
  #allocation1 [shape = 'u32[144,128]{1,0:T(1,128)}', space=vmem, size = 0x12000, scoped, tag = 'internal scratch']
  %s0 = inlined_call_operand.vmem [shape: f32[2,32,128], index: 0, kind: input, shape index: {}]
  %s1 = inlined_call_operand.vmem [shape: f32[4,128,32], index: 1, kind: input, shape index: {}]
  %s2 = inlined_call_operand.vmem [shape: f32[4,128,1], index: 2, kind: input, shape index: {}]
  %s3 = inlined_call_operand.vmem [shape: f32[4,8,32], index: 3, kind: input, shape index: {}]
  %s4 = inlined_call_operand.vmem [shape: f32[4,8,1], index: 4, kind: input, shape index: {}]
  %s5 = inlined_call_operand.vmem [shape: f32[4,40,128], index: 5, kind: input, shape index: {}]
  %s6 = inlined_call_operand.vmem [shape: f32[4,32,1], index: 6, kind: input, shape index: {}]
  %s7 = inlined_call_operand.hbm [shape: f32[2,32,128], index: 7, kind: output, shape index: {0}]
  %s8 = inlined_call_operand.hbm [shape: s32[2,4,128], index: 8, kind: output, shape index: {1}]
  %s9 = inlined_call_operand.hbm [shape: f32[2,1,1,4], index: 9, kind: output, shape index: {2}]
  %10 = xla_tuple %s7, %s8, %s9
  %s11 = sld [smem:[#allocation0]]
  $region77: #{tpu_custom_call.1} parent=0
    _
  %s13 = ssub.s32 1, %s11
  %s14 = scalar_select 0, %s13, %s11
  $region1: #{tpu_custom_call.1} parent=0
    #allocation2 [shape = 'u8[32768]{0}', space=vmem, size = 0x8000, scoped, tag = 'output window, operand 0']
    #allocation3 [shape = 's32[2]{0}', space=sflag, size = 0x8, scoped, tag = 'scoped memory for tpu_custom_call.1']
    #allocation4 [shape = 'u8[4096]{0}', space=vmem, size = 0x1000, scoped, tag = 'output window, operand 1']
    #allocation5 [shape = 's32[2]{0}', space=sflag, size = 0x8, scoped, tag = 'scoped memory for tpu_custom_call.1']
    #allocation6 [shape = 'u8[1024]{0}', space=vmem, size = 0x400, scoped, tag = 'output window, operand 2']
    %15 = vsyncpa [#allocation3], 0
    %s16 = scalar_lea.sflag [#allocation3], 1
    %17 = vsyncpa %s16, 0
    %18 = vsyncpa [#allocation5], 0
    %s19 = scalar_lea.sflag [#allocation5], 1
    %20 = vsyncpa %s19, 0
    loop: start=0, step=1, limit=4
    $region2: #{tpu_custom_call.1} parent=1 // loop_pre_header
      _
    $region3: #{tpu_custom_call.1} parent=1 // loop_header
      %s22 = sphi 0, %s26
      %p23 = scmp.ge.s32.totalorder %s22, 4
      %s29 = sphi 0, %s41
      %s30 = sphi 0, %s37
      %s31 = sphi 0, %s29
      %s32 = sphi 0, %s30
      %s33 = sphi 0, %s31
      %s34 = sphi 0, %s32
      %s46 = sphi 0, %s48
      %s49 = sphi 0, %s46
      %s50 = sphi 0, %s49
      %s66 = sphi 0, %s50
      %s70 = sphi 0, %s70
      %s72 = sphi 0, %s70
      %s73 = sphi 0, %s72
      %s87 = sphi 0, %s73
      %s91 = sphi 0, %s91
      %s93 = sphi 0, %s91
      %s94 = sphi 0, %s93
      %s108 = sphi 0, %s94
      %s112 = sphi 0, %s112
      %s114 = sphi 0, %s112
      %s115 = sphi 0, %s114
      %s129 = sphi 0, %s115
      %s133 = sphi 0, %s133
      %s135 = sphi 0, %s133
      %s136 = sphi 0, %s135
      %s150 = sphi 0, %s136
      %s154 = sphi 0, %s154
      %s156 = sphi 0, %s154
      %s157 = sphi 0, %s156
      %s171 = sphi 0, %s157
      %s175 = sphi 0, %s175
      %s177 = sphi 0, %s175
      %s178 = sphi 0, %s177
      %s192 = sphi 0, %s178
      %s200 = sphi 0, %s202
      %s203 = sphi 0, %s200
      %s204 = sphi 0, %s203
      %s220 = sphi 0, %s204
      %s228 = sphi 0, %s230
      %s231 = sphi 0, %s228
      %s232 = sphi 0, %s231
      %s248 = sphi 0, %s232
      %s256 = sphi 0, %s258
      %s259 = sphi 0, %s256
      %s260 = sphi 0, %s259
      %s276 = sphi 0, %s260
    $region4: #{tpu_custom_call.1} parent=1 // loop_header_branch
      %25 = sbr.rel (%p23) target = $region8
    $region5: #{tpu_custom_call.1} parent=1 // loop_body
      %s27 = ssub.s32 %s22, 1
      %s28 = ssub.s32 %s22, 2
      %s35 = sadd.s32 1, %s30
      %p36 = scmp.ge.s32.totalorder %s35, 1
      %s37 = scalar_select %p36, 0, %s35
      %s38 = sadd.s32 1, %s29
      %s39 = scalar_select %p36, %s38, %s29
      %p40 = scmp.ge.s32.totalorder %s39, 2
      %s41 = scalar_select %p40, 0, %s39
      %s42 = ssub.s32 %s29, %s41
      %s43 = ssub.s32 %s30, %s37
      %s44 = sor.u32 %s42, %s43
      %p45 = scmp.eq.s32.totalorder %s44, 0
      %s47 = sadd.s32 %s46, 1
      %s48 = scalar_select %p45, %s46, %s47
      %p51 = pneg %p45
      %p52 = scmp.eq.s32.totalorder %s22, 1
      %p53 = por %p51, %p52
      %p54 = scmp.ne.s32.totalorder %s46, %s49
      %p55 = scmp.eq.s32.totalorder %s22, 0
      %p56 = por %p54, %p55
      %p57 = scmp.ne.s32.totalorder %s46, %s49
      %p58 = scmp.eq.s32.totalorder %s27, 1
      %p59 = por %p57, %p58
      %p60 = scmp.ne.s32.totalorder %s49, %s50
      %p61 = scmp.eq.s32.totalorder %s27, 0
      %p62 = por %p60, %p61
      %p63 = scmp.ne.s32.totalorder %s49, %s50
      %p64 = scmp.eq.s32.totalorder %s28, 1
      %p65 = por %p63, %p64
      %p67 = scmp.ne.s32.totalorder %s50, %s66
      %p68 = scmp.eq.s32.totalorder %s28, 0
      %p69 = por %p67, %p68
      %s71 = sadd.s32 %s70, 1
      %p74 = scmp.eq.s32.totalorder %s22, 1
      %p75 = scmp.ne.s32.totalorder %s70, %s72
      %p76 = scmp.eq.s32.totalorder %s22, 0
      %p77 = por %p75, %p76
      %p78 = scmp.ne.s32.totalorder %s70, %s72
      %p79 = scmp.eq.s32.totalorder %s27, 1
      %p80 = por %p78, %p79
      %p81 = scmp.ne.s32.totalorder %s72, %s73
      %p82 = scmp.eq.s32.totalorder %s27, 0
      %p83 = por %p81, %p82
      %p84 = scmp.ne.s32.totalorder %s72, %s73
      %p85 = scmp.eq.s32.totalorder %s28, 1
      %p86 = por %p84, %p85
      %p88 = scmp.ne.s32.totalorder %s73, %s87
      %p89 = scmp.eq.s32.totalorder %s28, 0
      %p90 = por %p88, %p89
      %s92 = sadd.s32 %s91, 1
      %p95 = scmp.eq.s32.totalorder %s22, 1
      %p96 = scmp.ne.s32.totalorder %s91, %s93
      %p97 = scmp.eq.s32.totalorder %s22, 0
      %p98 = por %p96, %p97
      %p99 = scmp.ne.s32.totalorder %s91, %s93
      %p100 = scmp.eq.s32.totalorder %s27, 1
      %p101 = por %p99, %p100
      %p102 = scmp.ne.s32.totalorder %s93, %s94
      %p103 = scmp.eq.s32.totalorder %s27, 0
      %p104 = por %p102, %p103
      %p105 = scmp.ne.s32.totalorder %s93, %s94
      %p106 = scmp.eq.s32.totalorder %s28, 1
      %p107 = por %p105, %p106
      %p109 = scmp.ne.s32.totalorder %s94, %s108
      %p110 = scmp.eq.s32.totalorder %s28, 0
      %p111 = por %p109, %p110
      %s113 = sadd.s32 %s112, 1
      %p116 = scmp.eq.s32.totalorder %s22, 1
      %p117 = scmp.ne.s32.totalorder %s112, %s114
      %p118 = scmp.eq.s32.totalorder %s22, 0
      %p119 = por %p117, %p118
      %p120 = scmp.ne.s32.totalorder %s112, %s114
      %p121 = scmp.eq.s32.totalorder %s27, 1
      %p122 = por %p120, %p121
      %p123 = scmp.ne.s32.totalorder %s114, %s115
      %p124 = scmp.eq.s32.totalorder %s27, 0
      %p125 = por %p123, %p124
      %p126 = scmp.ne.s32.totalorder %s114, %s115
      %p127 = scmp.eq.s32.totalorder %s28, 1
      %p128 = por %p126, %p127
      %p130 = scmp.ne.s32.totalorder %s115, %s129
      %p131 = scmp.eq.s32.totalorder %s28, 0
      %p132 = por %p130, %p131
      %s134 = sadd.s32 %s133, 1
      %p137 = scmp.eq.s32.totalorder %s22, 1
      %p138 = scmp.ne.s32.totalorder %s133, %s135
      %p139 = scmp.eq.s32.totalorder %s22, 0
      %p140 = por %p138, %p139
      %p141 = scmp.ne.s32.totalorder %s133, %s135
      %p142 = scmp.eq.s32.totalorder %s27, 1
      %p143 = por %p141, %p142
      %p144 = scmp.ne.s32.totalorder %s135, %s136
      %p145 = scmp.eq.s32.totalorder %s27, 0
      %p146 = por %p144, %p145
      %p147 = scmp.ne.s32.totalorder %s135, %s136
      %p148 = scmp.eq.s32.totalorder %s28, 1
      %p149 = por %p147, %p148
      %p151 = scmp.ne.s32.totalorder %s136, %s150
      %p152 = scmp.eq.s32.totalorder %s28, 0
      %p153 = por %p151, %p152
      %s155 = sadd.s32 %s154, 1
      %p158 = scmp.eq.s32.totalorder %s22, 1
      %p159 = scmp.ne.s32.totalorder %s154, %s156
      %p160 = scmp.eq.s32.totalorder %s22, 0
      %p161 = por %p159, %p160
      %p162 = scmp.ne.s32.totalorder %s154, %s156
      %p163 = scmp.eq.s32.totalorder %s27, 1
      %p164 = por %p162, %p163
      %p165 = scmp.ne.s32.totalorder %s156, %s157
      %p166 = scmp.eq.s32.totalorder %s27, 0
      %p167 = por %p165, %p166
      %p168 = scmp.ne.s32.totalorder %s156, %s157
      %p169 = scmp.eq.s32.totalorder %s28, 1
      %p170 = por %p168, %p169
      %p172 = scmp.ne.s32.totalorder %s157, %s171
      %p173 = scmp.eq.s32.totalorder %s28, 0
      %p174 = por %p172, %p173
      %s176 = sadd.s32 %s175, 1
      %p179 = scmp.eq.s32.totalorder %s22, 1
      %p180 = scmp.ne.s32.totalorder %s175, %s177
      %p181 = scmp.eq.s32.totalorder %s22, 0
      %p182 = por %p180, %p181
      %p183 = scmp.ne.s32.totalorder %s175, %s177
      %p184 = scmp.eq.s32.totalorder %s27, 1
      %p185 = por %p183, %p184
      %p186 = scmp.ne.s32.totalorder %s177, %s178
      %p187 = scmp.eq.s32.totalorder %s27, 0
      %p188 = por %p186, %p187
      %p189 = scmp.ne.s32.totalorder %s177, %s178
      %p190 = scmp.eq.s32.totalorder %s28, 1
      %p191 = por %p189, %p190
      %p193 = scmp.ne.s32.totalorder %s178, %s192
      %p194 = scmp.eq.s32.totalorder %s28, 0
      %p195 = por %p193, %p194
      %s196 = ssub.s32 %s29, %s41
      %s197 = ssub.s32 %s30, %s37
      %s198 = sor.u32 %s196, %s197
      %p199 = scmp.eq.s32.totalorder %s198, 0
      %s201 = sadd.s32 %s200, 1
      %s202 = scalar_select %p199, %s200, %s201
      %p205 = pneg %p199
      %p206 = scmp.eq.s32.totalorder %s22, 1
      %p207 = por %p205, %p206
      %p208 = scmp.ne.s32.totalorder %s200, %s203
      %p209 = scmp.eq.s32.totalorder %s22, 0
      %p210 = por %p208, %p209
      %p211 = scmp.ne.s32.totalorder %s200, %s203
      %p212 = scmp.eq.s32.totalorder %s27, 1
      %p213 = por %p211, %p212
      %p214 = scmp.ne.s32.totalorder %s203, %s204
      %p215 = scmp.eq.s32.totalorder %s27, 0
      %p216 = por %p214, %p215
      %p217 = scmp.ne.s32.totalorder %s203, %s204
      %p218 = scmp.eq.s32.totalorder %s28, 1
      %p219 = por %p217, %p218
      %p221 = scmp.ne.s32.totalorder %s204, %s220
      %p222 = scmp.eq.s32.totalorder %s28, 0
      %p223 = por %p221, %p222
      %s224 = ssub.s32 %s29, %s41
      %s225 = ssub.s32 %s30, %s37
      %s226 = sor.u32 %s224, %s225
      %p227 = scmp.eq.s32.totalorder %s226, 0
      %s229 = sadd.s32 %s228, 1
      %s230 = scalar_select %p227, %s228, %s229
      %p233 = pneg %p227
      %p234 = scmp.eq.s32.totalorder %s22, 1
      %p235 = por %p233, %p234
      %p236 = scmp.ne.s32.totalorder %s228, %s231
      %p237 = scmp.eq.s32.totalorder %s22, 0
      %p238 = por %p236, %p237
      %p239 = scmp.ne.s32.totalorder %s228, %s231
      %p240 = scmp.eq.s32.totalorder %s27, 1
      %p241 = por %p239, %p240
      %p242 = scmp.ne.s32.totalorder %s231, %s232
      %p243 = scmp.eq.s32.totalorder %s27, 0
      %p244 = por %p242, %p243
      %p245 = scmp.ne.s32.totalorder %s231, %s232
      %p246 = scmp.eq.s32.totalorder %s28, 1
      %p247 = por %p245, %p246
      %p249 = scmp.ne.s32.totalorder %s232, %s248
      %p250 = scmp.eq.s32.totalorder %s28, 0
      %p251 = por %p249, %p250
      %s252 = ssub.s32 %s29, %s41
      %s253 = ssub.s32 %s30, %s37
      %s254 = sor.u32 %s252, %s253
      %p255 = scmp.eq.s32.totalorder %s254, 0
      %s257 = sadd.s32 %s256, 1
      %s258 = scalar_select %p255, %s256, %s257
      %p261 = pneg %p255
      %p262 = scmp.eq.s32.totalorder %s22, 1
      %p263 = por %p261, %p262
      %p264 = scmp.ne.s32.totalorder %s256, %s259
      %p265 = scmp.eq.s32.totalorder %s22, 0
      %p266 = por %p264, %p265
      %p267 = scmp.ne.s32.totalorder %s256, %s259
      %p268 = scmp.eq.s32.totalorder %s27, 1
      %p269 = por %p267, %p268
      %p270 = scmp.ne.s32.totalorder %s259, %s260
      %p271 = scmp.eq.s32.totalorder %s27, 0
      %p272 = por %p270, %p271
      %p273 = scmp.ne.s32.totalorder %s259, %s260
      %p274 = scmp.eq.s32.totalorder %s28, 1
      %p275 = por %p273, %p274
      %p277 = scmp.ne.s32.totalorder %s260, %s276
      %p278 = scmp.eq.s32.totalorder %s28, 0
      %p279 = por %p277, %p278
      %p280 = scmp.le.s32.totalorder 1, %s22
      %p281 = scmp.lt.s32.totalorder %s22, 3
      %p282 = pnand %p280, %p281
      %p283 = pneg %p282
      // Predicated region
      $region9: #{tpu_custom_call.1} parent=5 // pred_check
        _
      $region10: #{tpu_custom_call.1} parent=5 // pred_check_branch
        %285 = sbr.rel (%p282) target = $region12
      $region11: #{tpu_custom_call.1} parent=5 // pred_region
        %s286 = ssub.s32 %s22, 1
        // Predicated region
        $region13: #{tpu_custom_call.1} parent=11 // pred_check
          %p287 = pneg %p83
        $region14: #{tpu_custom_call.1} parent=11 // pred_check_branch
          %289 = sbr.rel (%p287) target = $region16
        $region15: #{tpu_custom_call.1} parent=11 // pred_region
          _
        $region16: #{tpu_custom_call.1} parent=11 // pred_fallthru
          _
        // Predicated region
        $region17: #{tpu_custom_call.1} parent=11 // pred_check
          %p290 = pneg %p104
        $region18: #{tpu_custom_call.1} parent=11 // pred_check_branch
          %292 = sbr.rel (%p290) target = $region20
        $region19: #{tpu_custom_call.1} parent=11 // pred_region
          _
        $region20: #{tpu_custom_call.1} parent=11 // pred_fallthru
          _
        // Predicated region
        $region21: #{tpu_custom_call.1} parent=11 // pred_check
          %p293 = pneg %p125
        $region22: #{tpu_custom_call.1} parent=11 // pred_check_branch
          %295 = sbr.rel (%p293) target = $region24
        $region23: #{tpu_custom_call.1} parent=11 // pred_region
          _
        $region24: #{tpu_custom_call.1} parent=11 // pred_fallthru
          _
        // Predicated region
        $region25: #{tpu_custom_call.1} parent=11 // pred_check
          %p296 = pneg %p146
        $region26: #{tpu_custom_call.1} parent=11 // pred_check_branch
          %298 = sbr.rel (%p296) target = $region28
        $region27: #{tpu_custom_call.1} parent=11 // pred_region
          _
        $region28: #{tpu_custom_call.1} parent=11 // pred_fallthru
          _
        // Predicated region
        $region29: #{tpu_custom_call.1} parent=11 // pred_check
          %p299 = pneg %p167
        $region30: #{tpu_custom_call.1} parent=11 // pred_check_branch
          %301 = sbr.rel (%p299) target = $region32
        $region31: #{tpu_custom_call.1} parent=11 // pred_region
          _
        $region32: #{tpu_custom_call.1} parent=11 // pred_fallthru
          _
        // Predicated region
        $region33: #{tpu_custom_call.1} parent=11 // pred_check
          %p302 = pneg %p188
        $region34: #{tpu_custom_call.1} parent=11 // pred_check_branch
          %304 = sbr.rel (%p302) target = $region36
        $region35: #{tpu_custom_call.1} parent=11 // pred_region
          _
        $region36: #{tpu_custom_call.1} parent=11 // pred_fallthru
          _
      $region12: #{tpu_custom_call.1} parent=5 // pred_fallthru
        _
      %p305 = scmp.lt.s32.totalorder %s22, 2
      // Predicated region
      $region37: #{tpu_custom_call.1} parent=5 // pred_check
        %p306 = pneg %p305
      $region38: #{tpu_custom_call.1} parent=5 // pred_check_branch
        %308 = sbr.rel (%p306) target = $region40
      $region39: #{tpu_custom_call.1} parent=5 // pred_region
        // Predicated region
        $region41: #{tpu_custom_call.1} parent=39 // pred_check
          %p309 = pneg %p56
        $region42: #{tpu_custom_call.1} parent=39 // pred_check_branch
          %311 = sbr.rel (%p309) target = $region44
        $region43: #{tpu_custom_call.1} parent=39 // pred_region
          %p312 = scmp.lt.s32.totalorder %s29, 1
          %s313 = scalar_select %p312, %s29, 1
          %p314 = scmp.lt.s32.totalorder %s30, 0
          %s315 = scalar_select %p314, %s30, 0
          %s316 = smul.addr %s313, 4
          %s317 = sadd.s32 %s315, %s316
          %s318 = smul.addr %s317, 8
          %s319 = scalar_lea.vmem %s0, %s318
        $region44: #{tpu_custom_call.1} parent=39 // pred_fallthru
          _
      $region40: #{tpu_custom_call.1} parent=5 // pred_fallthru
        _
      %p320 = scmp.le.s32.totalorder 1, %s22
      %p321 = scmp.lt.s32.totalorder %s22, 3
      %p322 = pnand %p320, %p321
      %p323 = pneg %p322
      // Predicated region
      $region45: #{tpu_custom_call.1} parent=5 // pred_check
        _
      $region46: #{tpu_custom_call.1} parent=5 // pred_check_branch
        %325 = sbr.rel (%p322) target = $region48
      $region47: #{tpu_custom_call.1} parent=5 // pred_region
        %s326 = ssub.s32 %s22, 1
        %p327 = scmp.lt.s32.totalorder %s31, 1
        %s328 = scalar_select %p327, %s31, 1
        %p329 = scmp.lt.s32.totalorder %s32, 0
        %s330 = scalar_select %p329, %s32, 0
        %s331 = smul.addr %s328, 4
        %s332 = sadd.s32 %s330, %s331
        %s333 = smul.addr %s332, 8
        %s334 = scalar_lea.vmem %s0, %s333
        %p335 = pneg %p62
        %p336 = pneg %p59
        %p337 = pneg %p83
        %p338 = pneg %p80
        %p339 = pneg %p104
        %p340 = pneg %p101
        %p341 = pneg %p125
        %p342 = pneg %p122
        %p343 = pneg %p146
        %p344 = pneg %p143
        %p345 = pneg %p167
        %p346 = pneg %p164
        %p347 = pneg %p188
        %p348 = pneg %p185
        %p349 = pneg %p216
        %p350 = pneg %p213
        %s351 = sand.u32 %s203, 1
        %s352 = scalar_lea.sflag [#allocation3], %s351
        %s353 = sand.u32 %s203, 1
        %s354 = smul.addr %s353, 32
        %s355 = scalar_lea.vmem [#allocation2], %s354
        %p356 = pneg %p244
        %p357 = pneg %p241
        %s358 = sand.u32 %s27, 1
        %s359 = scalar_lea.sflag [#allocation5], %s358
        %s360 = sand.u32 %s231, 1
        %s361 = smul.addr %s360, 4
        %s362 = scalar_lea.vmem [#allocation4], %s361
        %p363 = pneg %p272
        %p364 = pneg %p269
        %s365 = sand.u32 %s27, 1
        %s366 = scalar_lea.sflag [#allocation5], %s365
        %s367 = sand.u32 %s259, 1
        %s368 = scalar_lea.vmem [#allocation6], %s367
        %p369 = scmp.lt.s32.totalorder %s31, 1
        %s370 = scalar_select %p369, %s31, 1
        %p371 = scmp.lt.s32.totalorder %s32, 0
        %s372 = scalar_select %p371, %s32, 0
        %s373 = smul.addr %s370, 4
        %s374 = sadd.s32 %s372, %s373
        %s375 = smul.addr %s374, 8
        %s376 = scalar_lea.vmem %s0, %s375
        %v377 = vlaneseq
        %v378 = vand.u32 %v377, 127
        %v379 = vld [vmem:[%s376] sm:$0xff]
        %v380 = vld [vmem:[%s376 + $0x8] sm:$0xff]
        %v381 = vld [vmem:[%s376 + $0x10] sm:$0xff]
        %v382 = vld [vmem:[%s376 + $0x18] sm:$0xff]
        %s383 = smul.u32 %s32, 128
        %s384 = sadd.s32 %s383, 0
        %v385 = vstv %s384
        %v386 = vadd.s32 %v385, %v378
        %vm387 = vcmp.lt.s32.totalorder %v386, 16
        %v388 = vld [vmem:[%s1] sm:$0xff]
        %v389 = vld [vmem:[%s1 + $0x8] sm:$0xff]
        %v390 = vld [vmem:[%s1 + $0x10] sm:$0xff]
        %v391 = vld [vmem:[%s1 + $0x18] sm:$0xff]
        %v392 = vld [vmem:[%s1 + $0x20] sm:$0xff]
        %v393 = vld [vmem:[%s1 + $0x28] sm:$0xff]
        %v394 = vld [vmem:[%s1 + $0x30] sm:$0xff]
        %v395 = vld [vmem:[%s1 + $0x38] sm:$0xff]
        %v396 = vld [vmem:[%s1 + $0x40] sm:$0xff]
        %v397 = vld [vmem:[%s1 + $0x48] sm:$0xff]
        %v398 = vld [vmem:[%s1 + $0x50] sm:$0xff]
        %v399 = vld [vmem:[%s1 + $0x58] sm:$0xff]
        %v400 = vld [vmem:[%s1 + $0x60] sm:$0xff]
        %v401 = vld [vmem:[%s1 + $0x68] sm:$0xff]
        %v402 = vld [vmem:[%s1 + $0x70] sm:$0xff]
        %v403 = vld [vmem:[%s1 + $0x78] sm:$0xff]
        %v404 = vld [vmem:[%s2] sm:$0xff]
        %v405 = vld [vmem:[%s2 + $0x8] sm:$0xff]
        %v406 = vld [vmem:[%s2 + $0x10] sm:$0xff]
        %v407 = vld [vmem:[%s2 + $0x18] sm:$0xff]
        %v408 = vld [vmem:[%s2 + $0x20] sm:$0xff]
        %v409 = vld [vmem:[%s2 + $0x28] sm:$0xff]
        %v410 = vld [vmem:[%s2 + $0x30] sm:$0xff]
        %v411 = vld [vmem:[%s2 + $0x38] sm:$0xff]
        %v412 = vld [vmem:[%s2 + $0x40] sm:$0xff]
        %v413 = vld [vmem:[%s2 + $0x48] sm:$0xff]
        %v414 = vld [vmem:[%s2 + $0x50] sm:$0xff]
        %v415 = vld [vmem:[%s2 + $0x58] sm:$0xff]
        %v416 = vld [vmem:[%s2 + $0x60] sm:$0xff]
        %v417 = vld [vmem:[%s2 + $0x68] sm:$0xff]
        %v418 = vld [vmem:[%s2 + $0x70] sm:$0xff]
        %v419 = vld [vmem:[%s2 + $0x78] sm:$0xff]
        %421 = vset.pattern.permute.xlu0 0
        %422 = vperm.xlu0 %421, %v404
        %v423 = vpop.permute.xlu0 %422
        %426 = vset.pattern.permute.xlu0 0
        %427 = vperm.xlu0 %426, %v405
        %v428 = vpop.permute.xlu0 %427
        %431 = vset.pattern.permute.xlu0 0
        %432 = vperm.xlu0 %431, %v406
        %v433 = vpop.permute.xlu0 %432
        %436 = vset.pattern.permute.xlu0 0
        %437 = vperm.xlu0 %436, %v407
        %v438 = vpop.permute.xlu0 %437
        %441 = vset.pattern.permute.xlu0 0
        %442 = vperm.xlu0 %441, %v408
        %v443 = vpop.permute.xlu0 %442
        %446 = vset.pattern.permute.xlu0 0
        %447 = vperm.xlu0 %446, %v409
        %v448 = vpop.permute.xlu0 %447
        %451 = vset.pattern.permute.xlu0 0
        %452 = vperm.xlu0 %451, %v410
        %v453 = vpop.permute.xlu0 %452
        %456 = vset.pattern.permute.xlu0 0
        %457 = vperm.xlu0 %456, %v411
        %v458 = vpop.permute.xlu0 %457
        %461 = vset.pattern.permute.xlu0 0
        %462 = vperm.xlu0 %461, %v412
        %v463 = vpop.permute.xlu0 %462
        %466 = vset.pattern.permute.xlu0 0
        %467 = vperm.xlu0 %466, %v413
        %v468 = vpop.permute.xlu0 %467
        %471 = vset.pattern.permute.xlu0 0
        %472 = vperm.xlu0 %471, %v414
        %v473 = vpop.permute.xlu0 %472
        %476 = vset.pattern.permute.xlu0 0
        %477 = vperm.xlu0 %476, %v415
        %v478 = vpop.permute.xlu0 %477
        %481 = vset.pattern.permute.xlu0 0
        %482 = vperm.xlu0 %481, %v416
        %v483 = vpop.permute.xlu0 %482
        %486 = vset.pattern.permute.xlu0 0
        %487 = vperm.xlu0 %486, %v417
        %v488 = vpop.permute.xlu0 %487
        %491 = vset.pattern.permute.xlu0 0
        %492 = vperm.xlu0 %491, %v418
        %v493 = vpop.permute.xlu0 %492
        %496 = vset.pattern.permute.xlu0 0
        %497 = vperm.xlu0 %496, %v419
        %v498 = vpop.permute.xlu0 %497
        %vm500 = vcmask 261120
        %v502 = vsel %vm500, %v388, 0
        %v505 = vsel %vm500, %v389, 0
        %v508 = vsel %vm500, %v390, 0
        %v511 = vsel %vm500, %v391, 0
        %v514 = vsel %vm500, %v392, 0
        %v517 = vsel %vm500, %v393, 0
        %v520 = vsel %vm500, %v394, 0
        %v523 = vsel %vm500, %v395, 0
        %v526 = vsel %vm500, %v396, 0
        %v529 = vsel %vm500, %v397, 0
        %v532 = vsel %vm500, %v398, 0
        %v535 = vsel %vm500, %v399, 0
        %v538 = vsel %vm500, %v400, 0
        %v541 = vsel %vm500, %v401, 0
        %v544 = vsel %vm500, %v402, 0
        %v547 = vsel %vm500, %v403, 0
        %549 = vmatprep.subr.mxu0 0.0
        %550 = vmatpush1.msra.mxu0 %v379
        %551 = vmatprep.subr.mxu0 0.0
        %552 = vmatpush1.msra.mxu0 %v380
        %553 = vmatprep.subr.mxu0 0.0
        %554 = vmatpush1.msra.mxu0 %v381
        %555 = vmatprep.subr.mxu0 0.0
        %556 = vmatpush1.msra.mxu0 %v382
        %557 = vmatprep.subr.mxu0 0.0
        %558 = vmatpush1.msra.mxu0 0.0
        %559 = vmatprep.subr.mxu0 0.0
        %560 = vmatpush1.msra.mxu0 0.0
        %561 = vmatprep.subr.mxu0 0.0
        %562 = vmatpush1.msra.mxu0 0.0
        %563 = vmatprep.subr.mxu0 0.0
        %564 = vmatpush1.msra.mxu0 0.0
        %565 = vmatprep.subr.mxu0 0.0
        %566 = vmatpush1.msra.mxu0 0.0
        %567 = vmatprep.subr.mxu0 0.0
        %568 = vmatpush1.msra.mxu0 0.0
        %569 = vmatprep.subr.mxu0 0.0
        %570 = vmatpush1.msra.mxu0 0.0
        %571 = vmatprep.subr.mxu0 0.0
        %572 = vmatpush1.msra.mxu0 0.0
        %573 = vmatprep.subr.mxu0 0.0
        %574 = vmatpush1.msra.mxu0 0.0
        %575 = vmatprep.subr.mxu0 0.0
        %576 = vmatpush1.msra.mxu0 0.0
        %577 = vmatprep.subr.mxu0 0.0
        %578 = vmatpush1.msra.mxu0 0.0
        %579 = vmatprep.subr.mxu0 0.0
        %580 = vmatpush1.msra.mxu0 0.0
        %581 = vmatprep.subr.mxu0 0.0
        %582 = vmatpush1.msra.mxu0 0.0
        %583 = vmatprep.subr.mxu0 0.0
        %584 = vmatpush1.msra.mxu0 0.0
        %585 = vmatprep.subr.mxu0 0.0
        %586 = vmatpush1.msra.mxu0 0.0
        %587 = vmatprep.subr.mxu0 0.0
        %588 = vmatpush1.msra.mxu0 0.0
        %589 = vmatprep.subr.mxu0 0.0
        %590 = vmatpush1.msra.mxu0 0.0
        %591 = vmatprep.subr.mxu0 0.0
        %592 = vmatpush1.msra.mxu0 0.0
        %593 = vmatprep.subr.mxu0 0.0
        %594 = vmatpush1.msra.mxu0 0.0
        %595 = vmatprep.subr.mxu0 0.0
        %596 = vmatpush1.msra.mxu0 0.0
        %597 = vmatprep.subr.mxu0 0.0
        %598 = vmatpush1.msra.mxu0 0.0
        %599 = vmatprep.subr.mxu0 0.0
        %600 = vmatpush1.msra.mxu0 0.0
        %601 = vmatprep.subr.mxu0 0.0
        %602 = vmatpush1.msra.mxu0 0.0
        %603 = vmatprep.subr.mxu0 0.0
        %604 = vmatpush1.msra.mxu0 0.0
        %605 = vmatprep.subr.mxu0 0.0
        %606 = vmatpush1.msra.mxu0 0.0
        %607 = vmatprep.subr.mxu0 0.0
        %608 = vmatpush1.msra.mxu0 0.0
        %609 = vmatprep.subr.mxu0 0.0
        %610 = vmatpush1.msra.mxu0 0.0
        %611 = vmatprep.subr.mxu0 0.0
        %612 = vmatpush1.msra.mxu0 0.0
        %613 = vmatprep.mubr.f32.mxu0 0.0
        %614 = vmatmul.mubr.f32.gmra.mrb[0].mxu0 %v502
        %v615 = vpop.f32.mrb[0].mxu0
        %v616 = vadd.f32 %v423, %v615
        %v617 = vpop.f32.mrb[0].mxu0
        %618 = vmatprep.mubr.f32.mxu0 0.0
        %619 = vmatmul.mubr.f32.gmra.mrb[0].mxu0 %v505
        %v620 = vpop.f32.mrb[0].mxu0
        %v621 = vadd.f32 %v428, %v620
        %v622 = vpop.f32.mrb[0].mxu0
        %623 = vmatprep.mubr.f32.mxu0 0.0
        %624 = vmatmul.mubr.f32.gmra.mrb[0].mxu0 %v508
        %v625 = vpop.f32.mrb[0].mxu0
        %v626 = vadd.f32 %v433, %v625
        %v627 = vpop.f32.mrb[0].mxu0
        %628 = vmatprep.mubr.f32.mxu0 0.0
        %629 = vmatmul.mubr.f32.gmra.mrb[0].mxu0 %v511
        %v630 = vpop.f32.mrb[0].mxu0
        %v631 = vadd.f32 %v438, %v630
        %v632 = vpop.f32.mrb[0].mxu0
        %633 = vmatprep.mubr.f32.mxu0 0.0
        %634 = vmatmul.mubr.f32.gmra.mrb[0].mxu0 %v514
        %v635 = vpop.f32.mrb[0].mxu0
        %v636 = vadd.f32 %v443, %v635
        %v637 = vpop.f32.mrb[0].mxu0
        %638 = vmatprep.mubr.f32.mxu0 0.0
        %639 = vmatmul.mubr.f32.gmra.mrb[0].mxu0 %v517
        %v640 = vpop.f32.mrb[0].mxu0
        %v641 = vadd.f32 %v448, %v640
        %v642 = vpop.f32.mrb[0].mxu0
        %643 = vmatprep.mubr.f32.mxu0 0.0
        %644 = vmatmul.mubr.f32.gmra.mrb[0].mxu0 %v520
        %v645 = vpop.f32.mrb[0].mxu0
        %v646 = vadd.f32 %v453, %v645
        %v647 = vpop.f32.mrb[0].mxu0
        %648 = vmatprep.mubr.f32.mxu0 0.0
        %649 = vmatmul.mubr.f32.gmra.mrb[0].mxu0 %v523
        %v650 = vpop.f32.mrb[0].mxu0
        %v651 = vadd.f32 %v458, %v650
        %v652 = vpop.f32.mrb[0].mxu0
        %653 = vmatprep.mubr.f32.mxu0 0.0
        %654 = vmatmul.mubr.f32.gmra.mrb[0].mxu0 %v526
        %v655 = vpop.f32.mrb[0].mxu0
        %v656 = vadd.f32 %v463, %v655
        %v657 = vpop.f32.mrb[0].mxu0
        %658 = vmatprep.mubr.f32.mxu0 0.0
        %659 = vmatmul.mubr.f32.gmra.mrb[0].mxu0 %v529
        %v660 = vpop.f32.mrb[0].mxu0
        %v661 = vadd.f32 %v468, %v660
        %v662 = vpop.f32.mrb[0].mxu0
        %663 = vmatprep.mubr.f32.mxu0 0.0
        %664 = vmatmul.mubr.f32.gmra.mrb[0].mxu0 %v532
        %v665 = vpop.f32.mrb[0].mxu0
        %v666 = vadd.f32 %v473, %v665
        %v667 = vpop.f32.mrb[0].mxu0
        %668 = vmatprep.mubr.f32.mxu0 0.0
        %669 = vmatmul.mubr.f32.gmra.mrb[0].mxu0 %v535
        %v670 = vpop.f32.mrb[0].mxu0
        %v671 = vadd.f32 %v478, %v670
        %v672 = vpop.f32.mrb[0].mxu0
        %673 = vmatprep.mubr.f32.mxu0 0.0
        %674 = vmatmul.mubr.f32.gmra.mrb[0].mxu0 %v538
        %v675 = vpop.f32.mrb[0].mxu0
        %v676 = vadd.f32 %v483, %v675
        %v677 = vpop.f32.mrb[0].mxu0
        %678 = vmatprep.mubr.f32.mxu0 0.0
        %679 = vmatmul.mubr.f32.gmra.mrb[0].mxu0 %v541
        %v680 = vpop.f32.mrb[0].mxu0
        %v681 = vadd.f32 %v488, %v680
        %v682 = vpop.f32.mrb[0].mxu0
        %683 = vmatprep.mubr.f32.mxu0 0.0
        %684 = vmatmul.mubr.f32.gmra.mrb[0].mxu0 %v544
        %v685 = vpop.f32.mrb[0].mxu0
        %v686 = vadd.f32 %v493, %v685
        %v687 = vpop.f32.mrb[0].mxu0
        %688 = vmatprep.mubr.f32.mxu0 0.0
        %689 = vmatmul.mubr.f32.gmra.mrb[0].mxu0 %v547
        %v690 = vpop.f32.mrb[0].mxu0
        %v691 = vadd.f32 %v498, %v690
        %v692 = vpop.f32.mrb[0].mxu0
        %693 = vdwg.mxu0
        %v694 = vld [vmem:[%s3] sm:$0xff]
        %v695 = vld [vmem:[%s4] sm:$0xff]
        %697 = vset.pattern.permute.xlu0 0
        %698 = vperm.xlu0 %697, %v695
        %v699 = vpop.permute.xlu0 %698
        %v702 = vsel %vm500, %v694, 0
        %704 = vmatprep.subr.mxu0 0.0
        %705 = vmatpush1.msra.mxu0 %v379
        %706 = vmatprep.subr.mxu0 0.0
        %707 = vmatpush1.msra.mxu0 %v380
        %708 = vmatprep.subr.mxu0 0.0
        %709 = vmatpush1.msra.mxu0 %v381
        %710 = vmatprep.subr.mxu0 0.0
        %711 = vmatpush1.msra.mxu0 %v382
        %712 = vmatprep.subr.mxu0 0.0
        %713 = vmatpush1.msra.mxu0 0.0
        %714 = vmatprep.subr.mxu0 0.0
        %715 = vmatpush1.msra.mxu0 0.0
        %716 = vmatprep.subr.mxu0 0.0
        %717 = vmatpush1.msra.mxu0 0.0
        %718 = vmatprep.subr.mxu0 0.0
        %719 = vmatpush1.msra.mxu0 0.0
        %720 = vmatprep.subr.mxu0 0.0
        %721 = vmatpush1.msra.mxu0 0.0
        %722 = vmatprep.subr.mxu0 0.0
        %723 = vmatpush1.msra.mxu0 0.0
        %724 = vmatprep.subr.mxu0 0.0
        %725 = vmatpush1.msra.mxu0 0.0
        %726 = vmatprep.subr.mxu0 0.0
        %727 = vmatpush1.msra.mxu0 0.0
        %728 = vmatprep.subr.mxu0 0.0
        %729 = vmatpush1.msra.mxu0 0.0
        %730 = vmatprep.subr.mxu0 0.0
        %731 = vmatpush1.msra.mxu0 0.0
        %732 = vmatprep.subr.mxu0 0.0
        %733 = vmatpush1.msra.mxu0 0.0
        %734 = vmatprep.subr.mxu0 0.0
        %735 = vmatpush1.msra.mxu0 0.0
        %736 = vmatprep.subr.mxu0 0.0
        %737 = vmatpush1.msra.mxu0 0.0
        %738 = vmatprep.subr.mxu0 0.0
        %739 = vmatpush1.msra.mxu0 0.0
        %740 = vmatprep.subr.mxu0 0.0
        %741 = vmatpush1.msra.mxu0 0.0
        %742 = vmatprep.subr.mxu0 0.0
        %743 = vmatpush1.msra.mxu0 0.0
        %744 = vmatprep.subr.mxu0 0.0
        %745 = vmatpush1.msra.mxu0 0.0
        %746 = vmatprep.subr.mxu0 0.0
        %747 = vmatpush1.msra.mxu0 0.0
        %748 = vmatprep.subr.mxu0 0.0
        %749 = vmatpush1.msra.mxu0 0.0
        %750 = vmatprep.subr.mxu0 0.0
        %751 = vmatpush1.msra.mxu0 0.0
        %752 = vmatprep.subr.mxu0 0.0
        %753 = vmatpush1.msra.mxu0 0.0
        %754 = vmatprep.subr.mxu0 0.0
        %755 = vmatpush1.msra.mxu0 0.0
        %756 = vmatprep.subr.mxu0 0.0
        %757 = vmatpush1.msra.mxu0 0.0
        %758 = vmatprep.subr.mxu0 0.0
        %759 = vmatpush1.msra.mxu0 0.0
        %760 = vmatprep.subr.mxu0 0.0
        %761 = vmatpush1.msra.mxu0 0.0
        %762 = vmatprep.subr.mxu0 0.0
        %763 = vmatpush1.msra.mxu0 0.0
        %764 = vmatprep.subr.mxu0 0.0
        %765 = vmatpush1.msra.mxu0 0.0
        %766 = vmatprep.subr.mxu0 0.0
        %767 = vmatpush1.msra.mxu0 0.0
        %768 = vmatprep.mubr.f32.mxu0 0.0
        %769 = vmatmul.mubr.f32.gmra.mrb[0].mxu0 %v702
        %v770 = vpop.f32.mrb[0].mxu0
        %v771 = vadd.f32 %v699, %v770
        %v772 = vpop.f32.mrb[0].mxu0
        %773 = vdwg.mxu0
        %v774 = vlaneseq
        %v775 = vshrl.u32 %v774, 7
        %v776 = vadd.s32 %v775, 8
        %v777 = vadd.s32 %v775, 16
        %v778 = vadd.s32 %v775, 24
        %v779 = vadd.s32 %v775, 32
        %v780 = vadd.s32 %v775, 40
        %v781 = vadd.s32 %v775, 48
        %v782 = vadd.s32 %v775, 56
        %v783 = vadd.s32 %v775, 64
        %v784 = vadd.s32 %v775, 72
        %v785 = vadd.s32 %v775, 80
        %v786 = vadd.s32 %v775, 88
        %v787 = vadd.s32 %v775, 96
        %v788 = vadd.s32 %v775, 104
        %v789 = vadd.s32 %v775, 112
        %v790 = vadd.s32 %v775, 120
        %v791 = vmax.f32 %v616, %v636
        %v792 = vmax.f32 %v621, %v641
        %v793 = vmax.f32 %v626, %v646
        %v794 = vmax.f32 %v631, %v651
        %v795 = vmax.f32 %v791, %v656
        %v796 = vmax.f32 %v792, %v661
        %v797 = vmax.f32 %v793, %v666
        %v798 = vmax.f32 %v794, %v671
        %v799 = vmax.f32 %v795, %v676
        %v800 = vmax.f32 %v796, %v681
        %v801 = vmax.f32 %v797, %v686
        %v802 = vmax.f32 %v798, %v691
        %v803 = vmax.f32 %v799, %v800
        %v804 = vmax.f32 %v801, %v802
        %v805 = vmax.f32 %v803, %v804
        %v806 = vrot.slane %v805, 4
        %v807 = vmax.f32 %v805, %v806
        %v808 = vrot.slane %v807, 2
        %v809 = vmax.f32 %v807, %v808
        %v810 = vrot.slane %v809, 1
        %v811 = vmax.f32 %v809, %v810
        %vm812 = vcmp.ge.f32.partialorder %v616, %v811
        %vm813 = vcmp.ge.f32.partialorder %v621, %v811
        %vm814 = vcmp.ge.f32.partialorder %v626, %v811
        %vm815 = vcmp.ge.f32.partialorder %v631, %v811
        %vm816 = vcmp.ge.f32.partialorder %v636, %v811
        %vm817 = vcmp.ge.f32.partialorder %v641, %v811
        %vm818 = vcmp.ge.f32.partialorder %v646, %v811
        %vm819 = vcmp.ge.f32.partialorder %v651, %v811
        %vm820 = vcmp.ge.f32.partialorder %v656, %v811
        %vm821 = vcmp.ge.f32.partialorder %v661, %v811
        %vm822 = vcmp.ge.f32.partialorder %v666, %v811
        %vm823 = vcmp.ge.f32.partialorder %v671, %v811
        %vm824 = vcmp.ge.f32.partialorder %v676, %v811
        %vm825 = vcmp.ge.f32.partialorder %v681, %v811
        %vm826 = vcmp.ge.f32.partialorder %v686, %v811
        %vm827 = vcmp.ge.f32.partialorder %v691, %v811
        %v828 = vsel %vm812, %v775, 128
        %v829 = vsel %vm813, %v776, 128
        %v830 = vsel %vm814, %v777, 128
        %v831 = vsel %vm815, %v778, 128
        %v832 = vsel %vm816, %v779, 128
        %v833 = vsel %vm817, %v780, 128
        %v834 = vsel %vm818, %v781, 128
        %v835 = vsel %vm819, %v782, 128
        %v836 = vsel %vm820, %v783, 128
        %v837 = vsel %vm821, %v784, 128
        %v838 = vsel %vm822, %v785, 128
        %v839 = vsel %vm823, %v786, 128
        %v840 = vsel %vm824, %v787, 128
        %v841 = vsel %vm825, %v788, 128
        %v842 = vsel %vm826, %v789, 128
        %v843 = vsel %vm827, %v790, 128
        %vm844 = vcmp.lt.s32.totalorder %v828, %v832
        %v845 = vsel %vm844, %v828, %v832
        %vm846 = vcmp.lt.s32.totalorder %v829, %v833
        %v847 = vsel %vm846, %v829, %v833
        %vm848 = vcmp.lt.s32.totalorder %v830, %v834
        %v849 = vsel %vm848, %v830, %v834
        %vm850 = vcmp.lt.s32.totalorder %v831, %v835
        %v851 = vsel %vm850, %v831, %v835
        %vm852 = vcmp.lt.s32.totalorder %v845, %v836
        %v853 = vsel %vm852, %v845, %v836
        %vm854 = vcmp.lt.s32.totalorder %v847, %v837
        %v855 = vsel %vm854, %v847, %v837
        %vm856 = vcmp.lt.s32.totalorder %v849, %v838
        %v857 = vsel %vm856, %v849, %v838
        %vm858 = vcmp.lt.s32.totalorder %v851, %v839
        %v859 = vsel %vm858, %v851, %v839
        %vm860 = vcmp.lt.s32.totalorder %v853, %v840
        %v861 = vsel %vm860, %v853, %v840
        %vm862 = vcmp.lt.s32.totalorder %v855, %v841
        %v863 = vsel %vm862, %v855, %v841
        %vm864 = vcmp.lt.s32.totalorder %v857, %v842
        %v865 = vsel %vm864, %v857, %v842
        %vm866 = vcmp.lt.s32.totalorder %v859, %v843
        %v867 = vsel %vm866, %v859, %v843
        %vm868 = vcmp.lt.s32.totalorder %v861, %v863
        %v869 = vsel %vm868, %v861, %v863
        %vm870 = vcmp.lt.s32.totalorder %v865, %v867
        %v871 = vsel %vm870, %v865, %v867
        %vm872 = vcmp.lt.s32.totalorder %v869, %v871
        %v873 = vsel %vm872, %v869, %v871
        %v874 = vrot.slane %v873, 4
        %vm875 = vcmp.lt.s32.totalorder %v873, %v874
        %v876 = vsel %vm875, %v873, %v874
        %v877 = vrot.slane %v876, 2
        %vm878 = vcmp.lt.s32.totalorder %v876, %v877
        %v879 = vsel %vm878, %v876, %v877
        %v880 = vrot.slane %v879, 1
        %vm881 = vcmp.lt.s32.totalorder %v879, %v880
        %v882 = vsel %vm881, %v879, %v880
        %vm883 = vcmp.eq.s32.totalorder %v775, %v882
        %vm884 = vcmp.eq.s32.totalorder %v776, %v882
        %vm885 = vcmp.eq.s32.totalorder %v777, %v882
        %vm886 = vcmp.eq.s32.totalorder %v778, %v882
        %vm887 = vcmp.eq.s32.totalorder %v779, %v882
        %vm888 = vcmp.eq.s32.totalorder %v780, %v882
        %vm889 = vcmp.eq.s32.totalorder %v781, %v882
        %vm890 = vcmp.eq.s32.totalorder %v782, %v882
        %vm891 = vcmp.eq.s32.totalorder %v783, %v882
        %vm892 = vcmp.eq.s32.totalorder %v784, %v882
        %vm893 = vcmp.eq.s32.totalorder %v785, %v882
        %vm894 = vcmp.eq.s32.totalorder %v786, %v882
        %vm895 = vcmp.eq.s32.totalorder %v787, %v882
        %vm896 = vcmp.eq.s32.totalorder %v788, %v882
        %vm897 = vcmp.eq.s32.totalorder %v789, %v882
        %vm898 = vcmp.eq.s32.totalorder %v790, %v882
        %v899 = vsel %vm883, 1, 0
        %v900 = vsel %vm884, 1, 0
        %v901 = vsel %vm885, 1, 0
        %v902 = vsel %vm886, 1, 0
        %v903 = vsel %vm887, 1, 0
        %v904 = vsel %vm888, 1, 0
        %v905 = vsel %vm889, 1, 0
        %v906 = vsel %vm890, 1, 0
        %v907 = vsel %vm891, 1, 0
        %v908 = vsel %vm892, 1, 0
        %v909 = vsel %vm893, 1, 0
        %v910 = vsel %vm894, 1, 0
        %v911 = vsel %vm895, 1, 0
        %v912 = vsel %vm896, 1, 0
        %v913 = vsel %vm897, 1, 0
        %v914 = vsel %vm898, 1, 0
        %v915 = vcvt.s32.f32 %v899
        %v916 = vcvt.s32.f32 %v900
        %v917 = vcvt.s32.f32 %v901
        %v918 = vcvt.s32.f32 %v902
        %v919 = vcvt.s32.f32 %v903
        %v920 = vcvt.s32.f32 %v904
        %v921 = vcvt.s32.f32 %v905
        %v922 = vcvt.s32.f32 %v906
        %v923 = vcvt.s32.f32 %v907
        %v924 = vcvt.s32.f32 %v908
        %v925 = vcvt.s32.f32 %v909
        %v926 = vcvt.s32.f32 %v910
        %v927 = vcvt.s32.f32 %v911
        %v928 = vcvt.s32.f32 %v912
        %v929 = vcvt.s32.f32 %v913
        %v930 = vcvt.s32.f32 %v914
        %v931 = vld [vmem:[%s5] sm:$0xff]
        %v932 = vld [vmem:[%s5 + $0x8] sm:$0xff]
        %v933 = vld [vmem:[%s5 + $0x10] sm:$0xff]
        %v934 = vld [vmem:[%s5 + $0x18] sm:$0xff]
        %v935 = vld [vmem:[%s5 + $0x20] sm:$0xff]
        %936 = vmatprep.subr.mxu0 0.0
        %937 = vmatpush1.msra.mxu0 %v915
        %938 = vmatprep.subr.mxu0 0.0
        %939 = vmatpush1.msra.mxu0 %v916
        %940 = vmatprep.subr.mxu0 0.0
        %941 = vmatpush1.msra.mxu0 %v917
        %942 = vmatprep.subr.mxu0 0.0
        %943 = vmatpush1.msra.mxu0 %v918
        %944 = vmatprep.subr.mxu0 0.0
        %945 = vmatpush1.msra.mxu0 %v919
        %946 = vmatprep.subr.mxu0 0.0
        %947 = vmatpush1.msra.mxu0 %v920
        %948 = vmatprep.subr.mxu0 0.0
        %949 = vmatpush1.msra.mxu0 %v921
        %950 = vmatprep.subr.mxu0 0.0
        %951 = vmatpush1.msra.mxu0 %v922
        %952 = vmatprep.subr.mxu0 0.0
        %953 = vmatpush1.msra.mxu0 %v923
        %954 = vmatprep.subr.mxu0 0.0
        %955 = vmatpush1.msra.mxu0 %v924
        %956 = vmatprep.subr.mxu0 0.0
        %957 = vmatpush1.msra.mxu0 %v925
        %958 = vmatprep.subr.mxu0 0.0
        %959 = vmatpush1.msra.mxu0 %v926
        %960 = vmatprep.subr.mxu0 0.0
        %961 = vmatpush1.msra.mxu0 %v927
        %962 = vmatprep.subr.mxu0 0.0
        %963 = vmatpush1.msra.mxu0 %v928
        %964 = vmatprep.subr.mxu0 0.0
        %965 = vmatpush1.msra.mxu0 %v929
        %966 = vmatprep.subr.mxu0 0.0
        %967 = vmatpush1.msra.mxu0 %v930
        %968 = vmatprep.subr.mxu0 0.0
        %969 = vmatpush1.msra.mxu0 0.0
        %970 = vmatprep.subr.mxu0 0.0
        %971 = vmatpush1.msra.mxu0 0.0
        %972 = vmatprep.subr.mxu0 0.0
        %973 = vmatpush1.msra.mxu0 0.0
        %974 = vmatprep.subr.mxu0 0.0
        %975 = vmatpush1.msra.mxu0 0.0
        %976 = vmatprep.subr.mxu0 0.0
        %977 = vmatpush1.msra.mxu0 0.0
        %978 = vmatprep.subr.mxu0 0.0
        %979 = vmatpush1.msra.mxu0 0.0
        %980 = vmatprep.subr.mxu0 0.0
        %981 = vmatpush1.msra.mxu0 0.0
        %982 = vmatprep.subr.mxu0 0.0
        %983 = vmatpush1.msra.mxu0 0.0
        %984 = vmatprep.subr.mxu0 0.0
        %985 = vmatpush1.msra.mxu0 0.0
        %986 = vmatprep.subr.mxu0 0.0
        %987 = vmatpush1.msra.mxu0 0.0
        %988 = vmatprep.subr.mxu0 0.0
        %989 = vmatpush1.msra.mxu0 0.0
        %990 = vmatprep.subr.mxu0 0.0
        %991 = vmatpush1.msra.mxu0 0.0
        %992 = vmatprep.subr.mxu0 0.0
        %993 = vmatpush1.msra.mxu0 0.0
        %994 = vmatprep.subr.mxu0 0.0
        %995 = vmatpush1.msra.mxu0 0.0
        %996 = vmatprep.subr.mxu0 0.0
        %997 = vmatpush1.msra.mxu0 0.0
        %998 = vmatprep.subr.mxu0 0.0
        %999 = vmatpush1.msra.mxu0 0.0
        %1000 = vmatprep.mubr.f32.mxu0 0.0
        %1001 = vmatmul.mubr.f32.gmra.mrb[0].mxu0 %v931
        %v1002 = vpop.f32.mrb[0].mxu0
        %v1003 = vadd.f32 0.0, %v1002
        %v1004 = vpop.f32.mrb[0].mxu0
        %1005 = vmatprep.mubr.f32.mxu0 0.0
        %1006 = vmatmul.mubr.f32.gmra.mrb[0].mxu0 %v932
        %v1007 = vpop.f32.mrb[0].mxu0
        %v1008 = vadd.f32 0.0, %v1007
        %v1009 = vpop.f32.mrb[0].mxu0
        %1010 = vmatprep.mubr.f32.mxu0 0.0
        %1011 = vmatmul.mubr.f32.gmra.mrb[0].mxu0 %v933
        %v1012 = vpop.f32.mrb[0].mxu0
        %v1013 = vadd.f32 0.0, %v1012
        %v1014 = vpop.f32.mrb[0].mxu0
        %1015 = vmatprep.mubr.f32.mxu0 0.0
        %1016 = vmatmul.mubr.f32.gmra.mrb[0].mxu0 %v934
        %v1017 = vpop.f32.mrb[0].mxu0
        %v1018 = vadd.f32 0.0, %v1017
        %v1019 = vpop.f32.mrb[0].mxu0
        %1020 = vmatprep.mubr.f32.mxu0 0.0
        %1021 = vmatmul.mubr.f32.gmra.mrb[0].mxu0 %v935
        %v1022 = vpop.f32.mrb[0].mxu0
        %v1023 = vadd.f32 0.0, %v1022
        %v1024 = vpop.f32.mrb[0].mxu0
        %1025 = vdwg.mxu0
        %v1026 = vld [vmem:[%s6] sm:$0xff]
        %v1027 = vld [vmem:[%s6 + $0x8] sm:$0xff]
        %v1028 = vld [vmem:[%s6 + $0x10] sm:$0xff]
        %v1029 = vld [vmem:[%s6 + $0x18] sm:$0xff]
        %1031 = vset.pattern.permute.xlu0 0
        %1032 = vperm.xlu0 %1031, %v1026
        %v1033 = vpop.permute.xlu0 %1032
        %1036 = vset.pattern.permute.xlu0 0
        %1037 = vperm.xlu0 %1036, %v1027
        %v1038 = vpop.permute.xlu0 %1037
        %1041 = vset.pattern.permute.xlu0 0
        %1042 = vperm.xlu0 %1041, %v1028
        %v1043 = vpop.permute.xlu0 %1042
        %1046 = vset.pattern.permute.xlu0 0
        %1047 = vperm.xlu0 %1046, %v1029
        %v1048 = vpop.permute.xlu0 %1047
        %v1050 = vadd.f32 %v1008, %v1033
        %v1051 = vadd.f32 %v1013, %v1038
        %v1052 = vadd.f32 %v1018, %v1043
        %v1053 = vadd.f32 %v1023, %v1048
        %v1054 = vsub.f32 %v771, %v1003
        %v1055 = vmul.f32 %v1054, %v1054
        %v1056 = vrot.slane %v1055, 4
        %v1057 = vadd.f32 %v1055, %v1056
        %v1058 = vrot.slane %v1057, 2
        %v1059 = vadd.f32 %v1057, %v1058
        %v1060 = vrot.slane %v1059, 1
        %v1061 = vadd.f32 %v1059, %v1060
        %v1062 = vsel %vm387, %v1061, 0.0
        %1063 = vadd.xlane.f32.xlu0 %v1062
        %v1064 = vpop.xlane.xlu0 %1063
        %vm1065 = vcmp.eq.s32.totalorder %v378, 0
        %v1066 = vsel %vm1065, %v1064, 0.0
        %v1067 = vadd.f32 %v1066, 0.0
        %v1068 = vadd.f32 %v1050, 0.0
        %v1069 = vadd.f32 %v1051, 0.0
        %v1070 = vadd.f32 %v1052, 0.0
        %v1071 = vadd.f32 %v1053, 0.0
        %v1072 = vsub.f32 %v379, %v1050
        %v1073 = vsub.f32 %v380, %v1051
        %v1074 = vsub.f32 %v381, %v1052
        %v1075 = vsub.f32 %v382, %v1053
        %s1076 = scalar_lea.vmem %s1, 128
        %v1077 = vld [vmem:[%s1076] sm:$0xff]
        %v1078 = vld [vmem:[%s1076 + $0x8] sm:$0xff]
        %v1079 = vld [vmem:[%s1076 + $0x10] sm:$0xff]
        %v1080 = vld [vmem:[%s1076 + $0x18] sm:$0xff]
        %v1081 = vld [vmem:[%s1076 + $0x20] sm:$0xff]
        %v1082 = vld [vmem:[%s1076 + $0x28] sm:$0xff]
        %v1083 = vld [vmem:[%s1076 + $0x30] sm:$0xff]
        %v1084 = vld [vmem:[%s1076 + $0x38] sm:$0xff]
        %v1085 = vld [vmem:[%s1076 + $0x40] sm:$0xff]
        %v1086 = vld [vmem:[%s1076 + $0x48] sm:$0xff]
        %v1087 = vld [vmem:[%s1076 + $0x50] sm:$0xff]
        %v1088 = vld [vmem:[%s1076 + $0x58] sm:$0xff]
        %v1089 = vld [vmem:[%s1076 + $0x60] sm:$0xff]
        %v1090 = vld [vmem:[%s1076 + $0x68] sm:$0xff]
        %v1091 = vld [vmem:[%s1076 + $0x70] sm:$0xff]
        %v1092 = vld [vmem:[%s1076 + $0x78] sm:$0xff]
        %s1093 = scalar_lea.vmem %s2, 128
        %v1094 = vld [vmem:[%s1093] sm:$0xff]
        %v1095 = vld [vmem:[%s1093 + $0x8] sm:$0xff]
        %v1096 = vld [vmem:[%s1093 + $0x10] sm:$0xff]
        %v1097 = vld [vmem:[%s1093 + $0x18] sm:$0xff]
        %v1098 = vld [vmem:[%s1093 + $0x20] sm:$0xff]
        %v1099 = vld [vmem:[%s1093 + $0x28] sm:$0xff]
        %v1100 = vld [vmem:[%s1093 + $0x30] sm:$0xff]
        %v1101 = vld [vmem:[%s1093 + $0x38] sm:$0xff]
        %v1102 = vld [vmem:[%s1093 + $0x40] sm:$0xff]
        %v1103 = vld [vmem:[%s1093 + $0x48] sm:$0xff]
        %v1104 = vld [vmem:[%s1093 + $0x50] sm:$0xff]
        %v1105 = vld [vmem:[%s1093 + $0x58] sm:$0xff]
        %v1106 = vld [vmem:[%s1093 + $0x60] sm:$0xff]
        %v1107 = vld [vmem:[%s1093 + $0x68] sm:$0xff]
        %v1108 = vld [vmem:[%s1093 + $0x70] sm:$0xff]
        %v1109 = vld [vmem:[%s1093 + $0x78] sm:$0xff]
        %1111 = vset.pattern.permute.xlu0 0
        %1112 = vperm.xlu0 %1111, %v1094
        %v1113 = vpop.permute.xlu0 %1112
        %1116 = vset.pattern.permute.xlu0 0
        %1117 = vperm.xlu0 %1116, %v1095
        %v1118 = vpop.permute.xlu0 %1117
        %1121 = vset.pattern.permute.xlu0 0
        %1122 = vperm.xlu0 %1121, %v1096
        %v1123 = vpop.permute.xlu0 %1122
        %1126 = vset.pattern.permute.xlu0 0
        %1127 = vperm.xlu0 %1126, %v1097
        %v1128 = vpop.permute.xlu0 %1127
        %1131 = vset.pattern.permute.xlu0 0
        %1132 = vperm.xlu0 %1131, %v1098
        %v1133 = vpop.permute.xlu0 %1132
        %1136 = vset.pattern.permute.xlu0 0
        %1137 = vperm.xlu0 %1136, %v1099
        %v1138 = vpop.permute.xlu0 %1137
        %1141 = vset.pattern.permute.xlu0 0
        %1142 = vperm.xlu0 %1141, %v1100
        %v1143 = vpop.permute.xlu0 %1142
        %1146 = vset.pattern.permute.xlu0 0
        %1147 = vperm.xlu0 %1146, %v1101
        %v1148 = vpop.permute.xlu0 %1147
        %1151 = vset.pattern.permute.xlu0 0
        %1152 = vperm.xlu0 %1151, %v1102
        %v1153 = vpop.permute.xlu0 %1152
        %1156 = vset.pattern.permute.xlu0 0
        %1157 = vperm.xlu0 %1156, %v1103
        %v1158 = vpop.permute.xlu0 %1157
        %1161 = vset.pattern.permute.xlu0 0
        %1162 = vperm.xlu0 %1161, %v1104
        %v1163 = vpop.permute.xlu0 %1162
        %1166 = vset.pattern.permute.xlu0 0
        %1167 = vperm.xlu0 %1166, %v1105
        %v1168 = vpop.permute.xlu0 %1167
        %1171 = vset.pattern.permute.xlu0 0
        %1172 = vperm.xlu0 %1171, %v1106
        %v1173 = vpop.permute.xlu0 %1172
        %1176 = vset.pattern.permute.xlu0 0
        %1177 = vperm.xlu0 %1176, %v1107
        %v1178 = vpop.permute.xlu0 %1177
        %1181 = vset.pattern.permute.xlu0 0
        %1182 = vperm.xlu0 %1181, %v1108
        %v1183 = vpop.permute.xlu0 %1182
        %1186 = vset.pattern.permute.xlu0 0
        %1187 = vperm.xlu0 %1186, %v1109
        %v1188 = vpop.permute.xlu0 %1187
        %v1191 = vsel %vm500, %v1077, 0
        %v1194 = vsel %vm500, %v1078, 0
        %v1197 = vsel %vm500, %v1079, 0
        %v1200 = vsel %vm500, %v1080, 0
        %v1203 = vsel %vm500, %v1081, 0
        %v1206 = vsel %vm500, %v1082, 0
        %v1209 = vsel %vm500, %v1083, 0
        %v1212 = vsel %vm500, %v1084, 0
        %v1215 = vsel %vm500, %v1085, 0
        %v1218 = vsel %vm500, %v1086, 0
        %v1221 = vsel %vm500, %v1087, 0
        %v1224 = vsel %vm500, %v1088, 0
        %v1227 = vsel %vm500, %v1089, 0
        %v1230 = vsel %vm500, %v1090, 0
        %v1233 = vsel %vm500, %v1091, 0
        %v1236 = vsel %vm500, %v1092, 0
        %1238 = vmatprep.subr.mxu0 0.0
        %1239 = vmatpush1.msra.mxu0 %v1072
        %1240 = vmatprep.subr.mxu0 0.0
        %1241 = vmatpush1.msra.mxu0 %v1073
        %1242 = vmatprep.subr.mxu0 0.0
        %1243 = vmatpush1.msra.mxu0 %v1074
        %1244 = vmatprep.subr.mxu0 0.0
        %1245 = vmatpush1.msra.mxu0 %v1075
        %1246 = vmatprep.subr.mxu0 0.0
        %1247 = vmatpush1.msra.mxu0 0.0
        %1248 = vmatprep.subr.mxu0 0.0
        %1249 = vmatpush1.msra.mxu0 0.0
        %1250 = vmatprep.subr.mxu0 0.0
        %1251 = vmatpush1.msra.mxu0 0.0
        %1252 = vmatprep.subr.mxu0 0.0
        %1253 = vmatpush1.msra.mxu0 0.0
        %1254 = vmatprep.subr.mxu0 0.0
        %1255 = vmatpush1.msra.mxu0 0.0
        %1256 = vmatprep.subr.mxu0 0.0
        %1257 = vmatpush1.msra.mxu0 0.0
        %1258 = vmatprep.subr.mxu0 0.0
        %1259 = vmatpush1.msra.mxu0 0.0
        %1260 = vmatprep.subr.mxu0 0.0
        %1261 = vmatpush1.msra.mxu0 0.0
        %1262 = vmatprep.subr.mxu0 0.0
        %1263 = vmatpush1.msra.mxu0 0.0
        %1264 = vmatprep.subr.mxu0 0.0
        %1265 = vmatpush1.msra.mxu0 0.0
        %1266 = vmatprep.subr.mxu0 0.0
        %1267 = vmatpush1.msra.mxu0 0.0
        %1268 = vmatprep.subr.mxu0 0.0
        %1269 = vmatpush1.msra.mxu0 0.0
        %1270 = vmatprep.subr.mxu0 0.0
        %1271 = vmatpush1.msra.mxu0 0.0
        %1272 = vmatprep.subr.mxu0 0.0
        %1273 = vmatpush1.msra.mxu0 0.0
        %1274 = vmatprep.subr.mxu0 0.0
        %1275 = vmatpush1.msra.mxu0 0.0
        %1276 = vmatprep.subr.mxu0 0.0
        %1277 = vmatpush1.msra.mxu0 0.0
        %1278 = vmatprep.subr.mxu0 0.0
        %1279 = vmatpush1.msra.mxu0 0.0
        %1280 = vmatprep.subr.mxu0 0.0
        %1281 = vmatpush1.msra.mxu0 0.0
        %1282 = vmatprep.subr.mxu0 0.0
        %1283 = vmatpush1.msra.mxu0 0.0
        %1284 = vmatprep.subr.mxu0 0.0
        %1285 = vmatpush1.msra.mxu0 0.0
        %1286 = vmatprep.subr.mxu0 0.0
        %1287 = vmatpush1.msra.mxu0 0.0
        %1288 = vmatprep.subr.mxu0 0.0
        %1289 = vmatpush1.msra.mxu0 0.0
        %1290 = vmatprep.subr.mxu0 0.0
        %1291 = vmatpush1.msra.mxu0 0.0
        %1292 = vmatprep.subr.mxu0 0.0
        %1293 = vmatpush1.msra.mxu0 0.0
        %1294 = vmatprep.subr.mxu0 0.0
        %1295 = vmatpush1.msra.mxu0 0.0
        %1296 = vmatprep.subr.mxu0 0.0
        %1297 = vmatpush1.msra.mxu0 0.0
        %1298 = vmatprep.subr.mxu0 0.0
        %1299 = vmatpush1.msra.mxu0 0.0
        %1300 = vmatprep.subr.mxu0 0.0
        %1301 = vmatpush1.msra.mxu0 0.0
        %1302 = vmatprep.mubr.f32.mxu0 0.0
        %1303 = vmatmul.mubr.f32.gmra.mrb[0].mxu0 %v1191
        %v1304 = vpop.f32.mrb[0].mxu0
        %v1305 = vadd.f32 %v1113, %v1304
        %v1306 = vpop.f32.mrb[0].mxu0
        %1307 = vmatprep.mubr.f32.mxu0 0.0
        %1308 = vmatmul.mubr.f32.gmra.mrb[0].mxu0 %v1194
        %v1309 = vpop.f32.mrb[0].mxu0
        %v1310 = vadd.f32 %v1118, %v1309
        %v1311 = vpop.f32.mrb[0].mxu0
        %1312 = vmatprep.mubr.f32.mxu0 0.0
        %1313 = vmatmul.mubr.f32.gmra.mrb[0].mxu0 %v1197
        %v1314 = vpop.f32.mrb[0].mxu0
        %v1315 = vadd.f32 %v1123, %v1314
        %v1316 = vpop.f32.mrb[0].mxu0
        %1317 = vmatprep.mubr.f32.mxu0 0.0
        %1318 = vmatmul.mubr.f32.gmra.mrb[0].mxu0 %v1200
        %v1319 = vpop.f32.mrb[0].mxu0
        %v1320 = vadd.f32 %v1128, %v1319
        %v1321 = vpop.f32.mrb[0].mxu0
        %1322 = vmatprep.mubr.f32.mxu0 0.0
        %1323 = vmatmul.mubr.f32.gmra.mrb[0].mxu0 %v1203
        %v1324 = vpop.f32.mrb[0].mxu0
        %v1325 = vadd.f32 %v1133, %v1324
        %v1326 = vpop.f32.mrb[0].mxu0
        %1327 = vmatprep.mubr.f32.mxu0 0.0
        %1328 = vmatmul.mubr.f32.gmra.mrb[0].mxu0 %v1206
        %v1329 = vpop.f32.mrb[0].mxu0
        %v1330 = vadd.f32 %v1138, %v1329
        %v1331 = vpop.f32.mrb[0].mxu0
        %1332 = vmatprep.mubr.f32.mxu0 0.0
        %1333 = vmatmul.mubr.f32.gmra.mrb[0].mxu0 %v1209
        %v1334 = vpop.f32.mrb[0].mxu0
        %v1335 = vadd.f32 %v1143, %v1334
        %v1336 = vpop.f32.mrb[0].mxu0
        %1337 = vmatprep.mubr.f32.mxu0 0.0
        %1338 = vmatmul.mubr.f32.gmra.mrb[0].mxu0 %v1212
        %v1339 = vpop.f32.mrb[0].mxu0
        %v1340 = vadd.f32 %v1148, %v1339
        %v1341 = vpop.f32.mrb[0].mxu0
        %1342 = vmatprep.mubr.f32.mxu0 0.0
        %1343 = vmatmul.mubr.f32.gmra.mrb[0].mxu0 %v1215
        %v1344 = vpop.f32.mrb[0].mxu0
        %v1345 = vadd.f32 %v1153, %v1344
        %v1346 = vpop.f32.mrb[0].mxu0
        %1347 = vmatprep.mubr.f32.mxu0 0.0
        %1348 = vmatmul.mubr.f32.gmra.mrb[0].mxu0 %v1218
        %v1349 = vpop.f32.mrb[0].mxu0
        %v1350 = vadd.f32 %v1158, %v1349
        %v1351 = vpop.f32.mrb[0].mxu0
        %1352 = vmatprep.mubr.f32.mxu0 0.0
        %1353 = vmatmul.mubr.f32.gmra.mrb[0].mxu0 %v1221
        %v1354 = vpop.f32.mrb[0].mxu0
        %v1355 = vadd.f32 %v1163, %v1354
        %v1356 = vpop.f32.mrb[0].mxu0
        %1357 = vmatprep.mubr.f32.mxu0 0.0
        %1358 = vmatmul.mubr.f32.gmra.mrb[0].mxu0 %v1224
        %v1359 = vpop.f32.mrb[0].mxu0
        %v1360 = vadd.f32 %v1168, %v1359
        %v1361 = vpop.f32.mrb[0].mxu0
        %1362 = vmatprep.mubr.f32.mxu0 0.0
        %1363 = vmatmul.mubr.f32.gmra.mrb[0].mxu0 %v1227
        %v1364 = vpop.f32.mrb[0].mxu0
        %v1365 = vadd.f32 %v1173, %v1364
        %v1366 = vpop.f32.mrb[0].mxu0
        %1367 = vmatprep.mubr.f32.mxu0 0.0
        %1368 = vmatmul.mubr.f32.gmra.mrb[0].mxu0 %v1230
        %v1369 = vpop.f32.mrb[0].mxu0
        %v1370 = vadd.f32 %v1178, %v1369
        %v1371 = vpop.f32.mrb[0].mxu0
        %1372 = vmatprep.mubr.f32.mxu0 0.0
        %1373 = vmatmul.mubr.f32.gmra.mrb[0].mxu0 %v1233
        %v1374 = vpop.f32.mrb[0].mxu0
        %v1375 = vadd.f32 %v1183, %v1374
        %v1376 = vpop.f32.mrb[0].mxu0
        %1377 = vmatprep.mubr.f32.mxu0 0.0
        %1378 = vmatmul.mubr.f32.gmra.mrb[0].mxu0 %v1236
        %v1379 = vpop.f32.mrb[0].mxu0
        %v1380 = vadd.f32 %v1188, %v1379
        %v1381 = vpop.f32.mrb[0].mxu0
        %1382 = vdwg.mxu0
        %s1383 = scalar_lea.vmem %s3, 8
        %v1384 = vld [vmem:[%s1383] sm:$0xff]
        %s1385 = scalar_lea.vmem %s4, 8
        %v1386 = vld [vmem:[%s1385] sm:$0xff]
        %1388 = vset.pattern.permute.xlu0 0
        %1389 = vperm.xlu0 %1388, %v1386
        %v1390 = vpop.permute.xlu0 %1389
        %v1393 = vsel %vm500, %v1384, 0
        %1395 = vmatprep.subr.mxu0 0.0
        %1396 = vmatpush1.msra.mxu0 %v1072
        %1397 = vmatprep.subr.mxu0 0.0
        %1398 = vmatpush1.msra.mxu0 %v1073
        %1399 = vmatprep.subr.mxu0 0.0
        %1400 = vmatpush1.msra.mxu0 %v1074
        %1401 = vmatprep.subr.mxu0 0.0
        %1402 = vmatpush1.msra.mxu0 %v1075
        %1403 = vmatprep.subr.mxu0 0.0
        %1404 = vmatpush1.msra.mxu0 0.0
        %1405 = vmatprep.subr.mxu0 0.0
        %1406 = vmatpush1.msra.mxu0 0.0
        %1407 = vmatprep.subr.mxu0 0.0
        %1408 = vmatpush1.msra.mxu0 0.0
        %1409 = vmatprep.subr.mxu0 0.0
        %1410 = vmatpush1.msra.mxu0 0.0
        %1411 = vmatprep.subr.mxu0 0.0
        %1412 = vmatpush1.msra.mxu0 0.0
        %1413 = vmatprep.subr.mxu0 0.0
        %1414 = vmatpush1.msra.mxu0 0.0
        %1415 = vmatprep.subr.mxu0 0.0
        %1416 = vmatpush1.msra.mxu0 0.0
        %1417 = vmatprep.subr.mxu0 0.0
        %1418 = vmatpush1.msra.mxu0 0.0
        %1419 = vmatprep.subr.mxu0 0.0
        %1420 = vmatpush1.msra.mxu0 0.0
        %1421 = vmatprep.subr.mxu0 0.0
        %1422 = vmatpush1.msra.mxu0 0.0
        %1423 = vmatprep.subr.mxu0 0.0
        %1424 = vmatpush1.msra.mxu0 0.0
        %1425 = vmatprep.subr.mxu0 0.0
        %1426 = vmatpush1.msra.mxu0 0.0
        %1427 = vmatprep.subr.mxu0 0.0
        %1428 = vmatpush1.msra.mxu0 0.0
        %1429 = vmatprep.subr.mxu0 0.0
        %1430 = vmatpush1.msra.mxu0 0.0
        %1431 = vmatprep.subr.mxu0 0.0
        %1432 = vmatpush1.msra.mxu0 0.0
        %1433 = vmatprep.subr.mxu0 0.0
        %1434 = vmatpush1.msra.mxu0 0.0
        %1435 = vmatprep.subr.mxu0 0.0
        %1436 = vmatpush1.msra.mxu0 0.0
        %1437 = vmatprep.subr.mxu0 0.0
        %1438 = vmatpush1.msra.mxu0 0.0
        %1439 = vmatprep.subr.mxu0 0.0
        %1440 = vmatpush1.msra.mxu0 0.0
        %1441 = vmatprep.subr.mxu0 0.0
        %1442 = vmatpush1.msra.mxu0 0.0
        %1443 = vmatprep.subr.mxu0 0.0
        %1444 = vmatpush1.msra.mxu0 0.0
        %1445 = vmatprep.subr.mxu0 0.0
        %1446 = vmatpush1.msra.mxu0 0.0
        %1447 = vmatprep.subr.mxu0 0.0
        %1448 = vmatpush1.msra.mxu0 0.0
        %1449 = vmatprep.subr.mxu0 0.0
        %1450 = vmatpush1.msra.mxu0 0.0
        %1451 = vmatprep.subr.mxu0 0.0
        %1452 = vmatpush1.msra.mxu0 0.0
        %1453 = vmatprep.subr.mxu0 0.0
        %1454 = vmatpush1.msra.mxu0 0.0
        %1455 = vmatprep.subr.mxu0 0.0
        %1456 = vmatpush1.msra.mxu0 0.0
        %1457 = vmatprep.subr.mxu0 0.0
        %1458 = vmatpush1.msra.mxu0 0.0
        %1459 = vmatprep.mubr.f32.mxu0 0.0
        %1460 = vmatmul.mubr.f32.gmra.mrb[0].mxu0 %v1393
        %v1461 = vpop.f32.mrb[0].mxu0
        %v1462 = vadd.f32 %v1390, %v1461
        %v1463 = vpop.f32.mrb[0].mxu0
        %1464 = vdwg.mxu0
        %v1465 = vmax.f32 %v1305, %v1325
        %v1466 = vmax.f32 %v1310, %v1330
        %v1467 = vmax.f32 %v1315, %v1335
        %v1468 = vmax.f32 %v1320, %v1340
        %v1469 = vmax.f32 %v1465, %v1345
        %v1470 = vmax.f32 %v1466, %v1350
        %v1471 = vmax.f32 %v1467, %v1355
        %v1472 = vmax.f32 %v1468, %v1360
        %v1473 = vmax.f32 %v1469, %v1365
        %v1474 = vmax.f32 %v1470, %v1370
        %v1475 = vmax.f32 %v1471, %v1375
        %v1476 = vmax.f32 %v1472, %v1380
        %v1477 = vmax.f32 %v1473, %v1474
        %v1478 = vmax.f32 %v1475, %v1476
        %v1479 = vmax.f32 %v1477, %v1478
        %v1480 = vrot.slane %v1479, 4
        %v1481 = vmax.f32 %v1479, %v1480
        %v1482 = vrot.slane %v1481, 2
        %v1483 = vmax.f32 %v1481, %v1482
        %v1484 = vrot.slane %v1483, 1
        %v1485 = vmax.f32 %v1483, %v1484
        %vm1486 = vcmp.ge.f32.partialorder %v1305, %v1485
        %vm1487 = vcmp.ge.f32.partialorder %v1310, %v1485
        %vm1488 = vcmp.ge.f32.partialorder %v1315, %v1485
        %vm1489 = vcmp.ge.f32.partialorder %v1320, %v1485
        %vm1490 = vcmp.ge.f32.partialorder %v1325, %v1485
        %vm1491 = vcmp.ge.f32.partialorder %v1330, %v1485
        %vm1492 = vcmp.ge.f32.partialorder %v1335, %v1485
        %vm1493 = vcmp.ge.f32.partialorder %v1340, %v1485
        %vm1494 = vcmp.ge.f32.partialorder %v1345, %v1485
        %vm1495 = vcmp.ge.f32.partialorder %v1350, %v1485
        %vm1496 = vcmp.ge.f32.partialorder %v1355, %v1485
        %vm1497 = vcmp.ge.f32.partialorder %v1360, %v1485
        %vm1498 = vcmp.ge.f32.partialorder %v1365, %v1485
        %vm1499 = vcmp.ge.f32.partialorder %v1370, %v1485
        %vm1500 = vcmp.ge.f32.partialorder %v1375, %v1485
        %vm1501 = vcmp.ge.f32.partialorder %v1380, %v1485
        %v1502 = vsel %vm1486, %v775, 128
        %v1503 = vsel %vm1487, %v776, 128
        %v1504 = vsel %vm1488, %v777, 128
        %v1505 = vsel %vm1489, %v778, 128
        %v1506 = vsel %vm1490, %v779, 128
        %v1507 = vsel %vm1491, %v780, 128
        %v1508 = vsel %vm1492, %v781, 128
        %v1509 = vsel %vm1493, %v782, 128
        %v1510 = vsel %vm1494, %v783, 128
        %v1511 = vsel %vm1495, %v784, 128
        %v1512 = vsel %vm1496, %v785, 128
        %v1513 = vsel %vm1497, %v786, 128
        %v1514 = vsel %vm1498, %v787, 128
        %v1515 = vsel %vm1499, %v788, 128
        %v1516 = vsel %vm1500, %v789, 128
        %v1517 = vsel %vm1501, %v790, 128
        %vm1518 = vcmp.lt.s32.totalorder %v1502, %v1506
        %v1519 = vsel %vm1518, %v1502, %v1506
        %vm1520 = vcmp.lt.s32.totalorder %v1503, %v1507
        %v1521 = vsel %vm1520, %v1503, %v1507
        %vm1522 = vcmp.lt.s32.totalorder %v1504, %v1508
        %v1523 = vsel %vm1522, %v1504, %v1508
        %vm1524 = vcmp.lt.s32.totalorder %v1505, %v1509
        %v1525 = vsel %vm1524, %v1505, %v1509
        %vm1526 = vcmp.lt.s32.totalorder %v1519, %v1510
        %v1527 = vsel %vm1526, %v1519, %v1510
        %vm1528 = vcmp.lt.s32.totalorder %v1521, %v1511
        %v1529 = vsel %vm1528, %v1521, %v1511
        %vm1530 = vcmp.lt.s32.totalorder %v1523, %v1512
        %v1531 = vsel %vm1530, %v1523, %v1512
        %vm1532 = vcmp.lt.s32.totalorder %v1525, %v1513
        %v1533 = vsel %vm1532, %v1525, %v1513
        %vm1534 = vcmp.lt.s32.totalorder %v1527, %v1514
        %v1535 = vsel %vm1534, %v1527, %v1514
        %vm1536 = vcmp.lt.s32.totalorder %v1529, %v1515
        %v1537 = vsel %vm1536, %v1529, %v1515
        %vm1538 = vcmp.lt.s32.totalorder %v1531, %v1516
        %v1539 = vsel %vm1538, %v1531, %v1516
        %vm1540 = vcmp.lt.s32.totalorder %v1533, %v1517
        %v1541 = vsel %vm1540, %v1533, %v1517
        %vm1542 = vcmp.lt.s32.totalorder %v1535, %v1537
        %v1543 = vsel %vm1542, %v1535, %v1537
        %vm1544 = vcmp.lt.s32.totalorder %v1539, %v1541
        %v1545 = vsel %vm1544, %v1539, %v1541
        %vm1546 = vcmp.lt.s32.totalorder %v1543, %v1545
        %v1547 = vsel %vm1546, %v1543, %v1545
        %v1548 = vrot.slane %v1547, 4
        %vm1549 = vcmp.lt.s32.totalorder %v1547, %v1548
        %v1550 = vsel %vm1549, %v1547, %v1548
        %v1551 = vrot.slane %v1550, 2
        %vm1552 = vcmp.lt.s32.totalorder %v1550, %v1551
        %v1553 = vsel %vm1552, %v1550, %v1551
        %v1554 = vrot.slane %v1553, 1
        %vm1555 = vcmp.lt.s32.totalorder %v1553, %v1554
        %v1556 = vsel %vm1555, %v1553, %v1554
        %vm1557 = vcmp.eq.s32.totalorder %v775, %v1556
        %vm1558 = vcmp.eq.s32.totalorder %v776, %v1556
        %vm1559 = vcmp.eq.s32.totalorder %v777, %v1556
        %vm1560 = vcmp.eq.s32.totalorder %v778, %v1556
        %vm1561 = vcmp.eq.s32.totalorder %v779, %v1556
        %vm1562 = vcmp.eq.s32.totalorder %v780, %v1556
        %vm1563 = vcmp.eq.s32.totalorder %v781, %v1556
        %vm1564 = vcmp.eq.s32.totalorder %v782, %v1556
        %vm1565 = vcmp.eq.s32.totalorder %v783, %v1556
        %vm1566 = vcmp.eq.s32.totalorder %v784, %v1556
        %vm1567 = vcmp.eq.s32.totalorder %v785, %v1556
        %vm1568 = vcmp.eq.s32.totalorder %v786, %v1556
        %vm1569 = vcmp.eq.s32.totalorder %v787, %v1556
        %vm1570 = vcmp.eq.s32.totalorder %v788, %v1556
        %vm1571 = vcmp.eq.s32.totalorder %v789, %v1556
        %vm1572 = vcmp.eq.s32.totalorder %v790, %v1556
        %v1573 = vsel %vm1557, 1, 0
        %v1574 = vsel %vm1558, 1, 0
        %v1575 = vsel %vm1559, 1, 0
        %v1576 = vsel %vm1560, 1, 0
        %v1577 = vsel %vm1561, 1, 0
        %v1578 = vsel %vm1562, 1, 0
        %v1579 = vsel %vm1563, 1, 0
        %v1580 = vsel %vm1564, 1, 0
        %v1581 = vsel %vm1565, 1, 0
        %v1582 = vsel %vm1566, 1, 0
        %v1583 = vsel %vm1567, 1, 0
        %v1584 = vsel %vm1568, 1, 0
        %v1585 = vsel %vm1569, 1, 0
        %v1586 = vsel %vm1570, 1, 0
        %v1587 = vsel %vm1571, 1, 0
        %v1588 = vsel %vm1572, 1, 0
        %v1589 = vcvt.s32.f32 %v1573
        %v1590 = vcvt.s32.f32 %v1574
        %v1591 = vcvt.s32.f32 %v1575
        %v1592 = vcvt.s32.f32 %v1576
        %v1593 = vcvt.s32.f32 %v1577
        %v1594 = vcvt.s32.f32 %v1578
        %v1595 = vcvt.s32.f32 %v1579
        %v1596 = vcvt.s32.f32 %v1580
        %v1597 = vcvt.s32.f32 %v1581
        %v1598 = vcvt.s32.f32 %v1582
        %v1599 = vcvt.s32.f32 %v1583
        %v1600 = vcvt.s32.f32 %v1584
        %v1601 = vcvt.s32.f32 %v1585
        %v1602 = vcvt.s32.f32 %v1586
        %v1603 = vcvt.s32.f32 %v1587
        %v1604 = vcvt.s32.f32 %v1588
        %s1605 = scalar_lea.vmem %s5, 40
        %v1606 = vld [vmem:[%s1605] sm:$0xff]
        %v1607 = vld [vmem:[%s1605 + $0x8] sm:$0xff]
        %v1608 = vld [vmem:[%s1605 + $0x10] sm:$0xff]
        %v1609 = vld [vmem:[%s1605 + $0x18] sm:$0xff]
        %v1610 = vld [vmem:[%s1605 + $0x20] sm:$0xff]
        %1611 = vmatprep.subr.mxu0 0.0
        %1612 = vmatpush1.msra.mxu0 %v1589
        %1613 = vmatprep.subr.mxu0 0.0
        %1614 = vmatpush1.msra.mxu0 %v1590
        %1615 = vmatprep.subr.mxu0 0.0
        %1616 = vmatpush1.msra.mxu0 %v1591
        %1617 = vmatprep.subr.mxu0 0.0
        %1618 = vmatpush1.msra.mxu0 %v1592
        %1619 = vmatprep.subr.mxu0 0.0
        %1620 = vmatpush1.msra.mxu0 %v1593
        %1621 = vmatprep.subr.mxu0 0.0
        %1622 = vmatpush1.msra.mxu0 %v1594
        %1623 = vmatprep.subr.mxu0 0.0
        %1624 = vmatpush1.msra.mxu0 %v1595
        %1625 = vmatprep.subr.mxu0 0.0
        %1626 = vmatpush1.msra.mxu0 %v1596
        %1627 = vmatprep.subr.mxu0 0.0
        %1628 = vmatpush1.msra.mxu0 %v1597
        %1629 = vmatprep.subr.mxu0 0.0
        %1630 = vmatpush1.msra.mxu0 %v1598
        %1631 = vmatprep.subr.mxu0 0.0
        %1632 = vmatpush1.msra.mxu0 %v1599
        %1633 = vmatprep.subr.mxu0 0.0
        %1634 = vmatpush1.msra.mxu0 %v1600
        %1635 = vmatprep.subr.mxu0 0.0
        %1636 = vmatpush1.msra.mxu0 %v1601
        %1637 = vmatprep.subr.mxu0 0.0
        %1638 = vmatpush1.msra.mxu0 %v1602
        %1639 = vmatprep.subr.mxu0 0.0
        %1640 = vmatpush1.msra.mxu0 %v1603
        %1641 = vmatprep.subr.mxu0 0.0
        %1642 = vmatpush1.msra.mxu0 %v1604
        %1643 = vmatprep.subr.mxu0 0.0
        %1644 = vmatpush1.msra.mxu0 0.0
        %1645 = vmatprep.subr.mxu0 0.0
        %1646 = vmatpush1.msra.mxu0 0.0
        %1647 = vmatprep.subr.mxu0 0.0
        %1648 = vmatpush1.msra.mxu0 0.0
        %1649 = vmatprep.subr.mxu0 0.0
        %1650 = vmatpush1.msra.mxu0 0.0
        %1651 = vmatprep.subr.mxu0 0.0
        %1652 = vmatpush1.msra.mxu0 0.0
        %1653 = vmatprep.subr.mxu0 0.0
        %1654 = vmatpush1.msra.mxu0 0.0
        %1655 = vmatprep.subr.mxu0 0.0
        %1656 = vmatpush1.msra.mxu0 0.0
        %1657 = vmatprep.subr.mxu0 0.0
        %1658 = vmatpush1.msra.mxu0 0.0
        %1659 = vmatprep.subr.mxu0 0.0
        %1660 = vmatpush1.msra.mxu0 0.0
        %1661 = vmatprep.subr.mxu0 0.0
        %1662 = vmatpush1.msra.mxu0 0.0
        %1663 = vmatprep.subr.mxu0 0.0
        %1664 = vmatpush1.msra.mxu0 0.0
        %1665 = vmatprep.subr.mxu0 0.0
        %1666 = vmatpush1.msra.mxu0 0.0
        %1667 = vmatprep.subr.mxu0 0.0
        %1668 = vmatpush1.msra.mxu0 0.0
        %1669 = vmatprep.subr.mxu0 0.0
        %1670 = vmatpush1.msra.mxu0 0.0
        %1671 = vmatprep.subr.mxu0 0.0
        %1672 = vmatpush1.msra.mxu0 0.0
        %1673 = vmatprep.subr.mxu0 0.0
        %1674 = vmatpush1.msra.mxu0 0.0
        %1675 = vmatprep.mubr.f32.mxu0 0.0
        %1676 = vmatmul.mubr.f32.gmra.mrb[0].mxu0 %v1606
        %v1677 = vpop.f32.mrb[0].mxu0
        %v1678 = vadd.f32 0.0, %v1677
        %v1679 = vpop.f32.mrb[0].mxu0
        %1680 = vmatprep.mubr.f32.mxu0 0.0
        %1681 = vmatmul.mubr.f32.gmra.mrb[0].mxu0 %v1607
        %v1682 = vpop.f32.mrb[0].mxu0
        %v1683 = vadd.f32 0.0, %v1682
        %v1684 = vpop.f32.mrb[0].mxu0
        %1685 = vmatprep.mubr.f32.mxu0 0.0
        %1686 = vmatmul.mubr.f32.gmra.mrb[0].mxu0 %v1608
        %v1687 = vpop.f32.mrb[0].mxu0
        %v1688 = vadd.f32 0.0, %v1687
        %v1689 = vpop.f32.mrb[0].mxu0
        %1690 = vmatprep.mubr.f32.mxu0 0.0
        %1691 = vmatmul.mubr.f32.gmra.mrb[0].mxu0 %v1609
        %v1692 = vpop.f32.mrb[0].mxu0
        %v1693 = vadd.f32 0.0, %v1692
        %v1694 = vpop.f32.mrb[0].mxu0
        %1695 = vmatprep.mubr.f32.mxu0 0.0
        %1696 = vmatmul.mubr.f32.gmra.mrb[0].mxu0 %v1610
        %v1697 = vpop.f32.mrb[0].mxu0
        %v1698 = vadd.f32 0.0, %v1697
        %v1699 = vpop.f32.mrb[0].mxu0
        %1700 = vdwg.mxu0
        %s1701 = scalar_lea.vmem %s6, 32
        %v1702 = vld [vmem:[%s1701] sm:$0xff]
        %v1703 = vld [vmem:[%s1701 + $0x8] sm:$0xff]
        %v1704 = vld [vmem:[%s1701 + $0x10] sm:$0xff]
        %v1705 = vld [vmem:[%s1701 + $0x18] sm:$0xff]
        %1707 = vset.pattern.permute.xlu0 0
        %1708 = vperm.xlu0 %1707, %v1702
        %v1709 = vpop.permute.xlu0 %1708
        %1712 = vset.pattern.permute.xlu0 0
        %1713 = vperm.xlu0 %1712, %v1703
        %v1714 = vpop.permute.xlu0 %1713
        %1717 = vset.pattern.permute.xlu0 0
        %1718 = vperm.xlu0 %1717, %v1704
        %v1719 = vpop.permute.xlu0 %1718
        %1722 = vset.pattern.permute.xlu0 0
        %1723 = vperm.xlu0 %1722, %v1705
        %v1724 = vpop.permute.xlu0 %1723
        %v1726 = vadd.f32 %v1683, %v1709
        %v1727 = vadd.f32 %v1688, %v1714
        %v1728 = vadd.f32 %v1693, %v1719
        %v1729 = vadd.f32 %v1698, %v1724
        %v1730 = vsub.f32 %v1462, %v1678
        %v1731 = vmul.f32 %v1730, %v1730
        %v1732 = vrot.slane %v1731, 4
        %v1733 = vadd.f32 %v1731, %v1732
        %v1734 = vrot.slane %v1733, 2
        %v1735 = vadd.f32 %v1733, %v1734
        %v1736 = vrot.slane %v1735, 1
        %v1737 = vadd.f32 %v1735, %v1736
        %v1738 = vsel %vm387, %v1737, 0.0
        %1739 = vadd.xlane.f32.xlu0 %v1738
        %v1740 = vpop.xlane.xlu0 %1739
        %vm1741 = vcmp.eq.s32.totalorder %v378, 1
        %v1742 = vsel %vm1741, %v1740, 0.0
        %v1743 = vadd.f32 %v1067, %v1742
        %v1744 = vadd.f32 %v1068, %v1726
        %v1745 = vadd.f32 %v1069, %v1727
        %v1746 = vadd.f32 %v1070, %v1728
        %v1747 = vadd.f32 %v1071, %v1729
        %v1748 = vsub.f32 %v1072, %v1726
        %v1749 = vsub.f32 %v1073, %v1727
        %v1750 = vsub.f32 %v1074, %v1728
        %v1751 = vsub.f32 %v1075, %v1729
        %s1752 = scalar_lea.vmem %s1, 256
        %v1753 = vld [vmem:[%s1752] sm:$0xff]
        %v1754 = vld [vmem:[%s1752 + $0x8] sm:$0xff]
        %v1755 = vld [vmem:[%s1752 + $0x10] sm:$0xff]
        %v1756 = vld [vmem:[%s1752 + $0x18] sm:$0xff]
        %v1757 = vld [vmem:[%s1752 + $0x20] sm:$0xff]
        %v1758 = vld [vmem:[%s1752 + $0x28] sm:$0xff]
        %v1759 = vld [vmem:[%s1752 + $0x30] sm:$0xff]
        %v1760 = vld [vmem:[%s1752 + $0x38] sm:$0xff]
        %v1761 = vld [vmem:[%s1752 + $0x40] sm:$0xff]
        %v1762 = vld [vmem:[%s1752 + $0x48] sm:$0xff]
        %v1763 = vld [vmem:[%s1752 + $0x50] sm:$0xff]
        %v1764 = vld [vmem:[%s1752 + $0x58] sm:$0xff]
        %v1765 = vld [vmem:[%s1752 + $0x60] sm:$0xff]
        %v1766 = vld [vmem:[%s1752 + $0x68] sm:$0xff]
        %v1767 = vld [vmem:[%s1752 + $0x70] sm:$0xff]
        %v1768 = vld [vmem:[%s1752 + $0x78] sm:$0xff]
        %s1769 = scalar_lea.vmem %s2, 256
        %v1770 = vld [vmem:[%s1769] sm:$0xff]
        %v1771 = vld [vmem:[%s1769 + $0x8] sm:$0xff]
        %v1772 = vld [vmem:[%s1769 + $0x10] sm:$0xff]
        %v1773 = vld [vmem:[%s1769 + $0x18] sm:$0xff]
        %v1774 = vld [vmem:[%s1769 + $0x20] sm:$0xff]
        %v1775 = vld [vmem:[%s1769 + $0x28] sm:$0xff]
        %v1776 = vld [vmem:[%s1769 + $0x30] sm:$0xff]
        %v1777 = vld [vmem:[%s1769 + $0x38] sm:$0xff]
        %v1778 = vld [vmem:[%s1769 + $0x40] sm:$0xff]
        %v1779 = vld [vmem:[%s1769 + $0x48] sm:$0xff]
        %v1780 = vld [vmem:[%s1769 + $0x50] sm:$0xff]
        %v1781 = vld [vmem:[%s1769 + $0x58] sm:$0xff]
        %v1782 = vld [vmem:[%s1769 + $0x60] sm:$0xff]
        %v1783 = vld [vmem:[%s1769 + $0x68] sm:$0xff]
        %v1784 = vld [vmem:[%s1769 + $0x70] sm:$0xff]
        %v1785 = vld [vmem:[%s1769 + $0x78] sm:$0xff]
        %1787 = vset.pattern.permute.xlu0 0
        %1788 = vperm.xlu0 %1787, %v1770
        %v1789 = vpop.permute.xlu0 %1788
        %1792 = vset.pattern.permute.xlu0 0
        %1793 = vperm.xlu0 %1792, %v1771
        %v1794 = vpop.permute.xlu0 %1793
        %1797 = vset.pattern.permute.xlu0 0
        %1798 = vperm.xlu0 %1797, %v1772
        %v1799 = vpop.permute.xlu0 %1798
        %1802 = vset.pattern.permute.xlu0 0
        %1803 = vperm.xlu0 %1802, %v1773
        %v1804 = vpop.permute.xlu0 %1803
        %1807 = vset.pattern.permute.xlu0 0
        %1808 = vperm.xlu0 %1807, %v1774
        %v1809 = vpop.permute.xlu0 %1808
        %1812 = vset.pattern.permute.xlu0 0
        %1813 = vperm.xlu0 %1812, %v1775
        %v1814 = vpop.permute.xlu0 %1813
        %1817 = vset.pattern.permute.xlu0 0
        %1818 = vperm.xlu0 %1817, %v1776
        %v1819 = vpop.permute.xlu0 %1818
        %1822 = vset.pattern.permute.xlu0 0
        %1823 = vperm.xlu0 %1822, %v1777
        %v1824 = vpop.permute.xlu0 %1823
        %1827 = vset.pattern.permute.xlu0 0
        %1828 = vperm.xlu0 %1827, %v1778
        %v1829 = vpop.permute.xlu0 %1828
        %1832 = vset.pattern.permute.xlu0 0
        %1833 = vperm.xlu0 %1832, %v1779
        %v1834 = vpop.permute.xlu0 %1833
        %1837 = vset.pattern.permute.xlu0 0
        %1838 = vperm.xlu0 %1837, %v1780
        %v1839 = vpop.permute.xlu0 %1838
        %1842 = vset.pattern.permute.xlu0 0
        %1843 = vperm.xlu0 %1842, %v1781
        %v1844 = vpop.permute.xlu0 %1843
        %1847 = vset.pattern.permute.xlu0 0
        %1848 = vperm.xlu0 %1847, %v1782
        %v1849 = vpop.permute.xlu0 %1848
        %1852 = vset.pattern.permute.xlu0 0
        %1853 = vperm.xlu0 %1852, %v1783
        %v1854 = vpop.permute.xlu0 %1853
        %1857 = vset.pattern.permute.xlu0 0
        %1858 = vperm.xlu0 %1857, %v1784
        %v1859 = vpop.permute.xlu0 %1858
        %1862 = vset.pattern.permute.xlu0 0
        %1863 = vperm.xlu0 %1862, %v1785
        %v1864 = vpop.permute.xlu0 %1863
        %v1867 = vsel %vm500, %v1753, 0
        %v1870 = vsel %vm500, %v1754, 0
        %v1873 = vsel %vm500, %v1755, 0
        %v1876 = vsel %vm500, %v1756, 0
        %v1879 = vsel %vm500, %v1757, 0
        %v1882 = vsel %vm500, %v1758, 0
        %v1885 = vsel %vm500, %v1759, 0
        %v1888 = vsel %vm500, %v1760, 0
        %v1891 = vsel %vm500, %v1761, 0
        %v1894 = vsel %vm500, %v1762, 0
        %v1897 = vsel %vm500, %v1763, 0
        %v1900 = vsel %vm500, %v1764, 0
        %v1903 = vsel %vm500, %v1765, 0
        %v1906 = vsel %vm500, %v1766, 0
        %v1909 = vsel %vm500, %v1767, 0
        %v1912 = vsel %vm500, %v1768, 0
        %1914 = vmatprep.subr.mxu0 0.0
        %1915 = vmatpush1.msra.mxu0 %v1748
        %1916 = vmatprep.subr.mxu0 0.0
        %1917 = vmatpush1.msra.mxu0 %v1749
        %1918 = vmatprep.subr.mxu0 0.0
        %1919 = vmatpush1.msra.mxu0 %v1750
        %1920 = vmatprep.subr.mxu0 0.0
        %1921 = vmatpush1.msra.mxu0 %v1751
        %1922 = vmatprep.subr.mxu0 0.0
        %1923 = vmatpush1.msra.mxu0 0.0
        %1924 = vmatprep.subr.mxu0 0.0
        %1925 = vmatpush1.msra.mxu0 0.0
        %1926 = vmatprep.subr.mxu0 0.0
        %1927 = vmatpush1.msra.mxu0 0.0
        %1928 = vmatprep.subr.mxu0 0.0
        %1929 = vmatpush1.msra.mxu0 0.0
        %1930 = vmatprep.subr.mxu0 0.0
        %1931 = vmatpush1.msra.mxu0 0.0
        %1932 = vmatprep.subr.mxu0 0.0
        %1933 = vmatpush1.msra.mxu0 0.0
        %1934 = vmatprep.subr.mxu0 0.0
        %1935 = vmatpush1.msra.mxu0 0.0
        %1936 = vmatprep.subr.mxu0 0.0
        %1937 = vmatpush1.msra.mxu0 0.0
        %1938 = vmatprep.subr.mxu0 0.0
        %1939 = vmatpush1.msra.mxu0 0.0
        %1940 = vmatprep.subr.mxu0 0.0
        %1941 = vmatpush1.msra.mxu0 0.0
        %1942 = vmatprep.subr.mxu0 0.0
        %1943 = vmatpush1.msra.mxu0 0.0
        %1944 = vmatprep.subr.mxu0 0.0
        %1945 = vmatpush1.msra.mxu0 0.0
        %1946 = vmatprep.subr.mxu0 0.0
        %1947 = vmatpush1.msra.mxu0 0.0
        %1948 = vmatprep.subr.mxu0 0.0
        %1949 = vmatpush1.msra.mxu0 0.0
        %1950 = vmatprep.subr.mxu0 0.0
        %1951 = vmatpush1.msra.mxu0 0.0
        %1952 = vmatprep.subr.mxu0 0.0
        %1953 = vmatpush1.msra.mxu0 0.0
        %1954 = vmatprep.subr.mxu0 0.0
        %1955 = vmatpush1.msra.mxu0 0.0
        %1956 = vmatprep.subr.mxu0 0.0
        %1957 = vmatpush1.msra.mxu0 0.0
        %1958 = vmatprep.subr.mxu0 0.0
        %1959 = vmatpush1.msra.mxu0 0.0
        %1960 = vmatprep.subr.mxu0 0.0
        %1961 = vmatpush1.msra.mxu0 0.0
        %1962 = vmatprep.subr.mxu0 0.0
        %1963 = vmatpush1.msra.mxu0 0.0
        %1964 = vmatprep.subr.mxu0 0.0
        %1965 = vmatpush1.msra.mxu0 0.0
        %1966 = vmatprep.subr.mxu0 0.0
        %1967 = vmatpush1.msra.mxu0 0.0
        %1968 = vmatprep.subr.mxu0 0.0
        %1969 = vmatpush1.msra.mxu0 0.0
        %1970 = vmatprep.subr.mxu0 0.0
        %1971 = vmatpush1.msra.mxu0 0.0
        %1972 = vmatprep.subr.mxu0 0.0
        %1973 = vmatpush1.msra.mxu0 0.0
        %1974 = vmatprep.subr.mxu0 0.0
        %1975 = vmatpush1.msra.mxu0 0.0
        %1976 = vmatprep.subr.mxu0 0.0
        %1977 = vmatpush1.msra.mxu0 0.0
        %1978 = vmatprep.mubr.f32.mxu0 0.0
        %1979 = vmatmul.mubr.f32.gmra.mrb[0].mxu0 %v1867
        %v1980 = vpop.f32.mrb[0].mxu0
        %v1981 = vadd.f32 %v1789, %v1980
        %v1982 = vpop.f32.mrb[0].mxu0
        %1983 = vmatprep.mubr.f32.mxu0 0.0
        %1984 = vmatmul.mubr.f32.gmra.mrb[0].mxu0 %v1870
        %v1985 = vpop.f32.mrb[0].mxu0
        %v1986 = vadd.f32 %v1794, %v1985
        %v1987 = vpop.f32.mrb[0].mxu0
        %1988 = vmatprep.mubr.f32.mxu0 0.0
        %1989 = vmatmul.mubr.f32.gmra.mrb[0].mxu0 %v1873
        %v1990 = vpop.f32.mrb[0].mxu0
        %v1991 = vadd.f32 %v1799, %v1990
        %v1992 = vpop.f32.mrb[0].mxu0
        %1993 = vmatprep.mubr.f32.mxu0 0.0
        %1994 = vmatmul.mubr.f32.gmra.mrb[0].mxu0 %v1876
        %v1995 = vpop.f32.mrb[0].mxu0
        %v1996 = vadd.f32 %v1804, %v1995
        %v1997 = vpop.f32.mrb[0].mxu0
        %1998 = vmatprep.mubr.f32.mxu0 0.0
        %1999 = vmatmul.mubr.f32.gmra.mrb[0].mxu0 %v1879
        %v2000 = vpop.f32.mrb[0].mxu0
        %v2001 = vadd.f32 %v1809, %v2000
        %v2002 = vpop.f32.mrb[0].mxu0
        %2003 = vmatprep.mubr.f32.mxu0 0.0
        %2004 = vmatmul.mubr.f32.gmra.mrb[0].mxu0 %v1882
        %v2005 = vpop.f32.mrb[0].mxu0
        %v2006 = vadd.f32 %v1814, %v2005
        %v2007 = vpop.f32.mrb[0].mxu0
        %2008 = vmatprep.mubr.f32.mxu0 0.0
        %2009 = vmatmul.mubr.f32.gmra.mrb[0].mxu0 %v1885
        %v2010 = vpop.f32.mrb[0].mxu0
        %v2011 = vadd.f32 %v1819, %v2010
        %v2012 = vpop.f32.mrb[0].mxu0
        %2013 = vmatprep.mubr.f32.mxu0 0.0
        %2014 = vmatmul.mubr.f32.gmra.mrb[0].mxu0 %v1888
        %v2015 = vpop.f32.mrb[0].mxu0
        %v2016 = vadd.f32 %v1824, %v2015
        %v2017 = vpop.f32.mrb[0].mxu0
        %2018 = vmatprep.mubr.f32.mxu0 0.0
        %2019 = vmatmul.mubr.f32.gmra.mrb[0].mxu0 %v1891
        %v2020 = vpop.f32.mrb[0].mxu0
        %v2021 = vadd.f32 %v1829, %v2020
        %v2022 = vpop.f32.mrb[0].mxu0
        %2023 = vmatprep.mubr.f32.mxu0 0.0
        %2024 = vmatmul.mubr.f32.gmra.mrb[0].mxu0 %v1894
        %v2025 = vpop.f32.mrb[0].mxu0
        %v2026 = vadd.f32 %v1834, %v2025
        %v2027 = vpop.f32.mrb[0].mxu0
        %2028 = vmatprep.mubr.f32.mxu0 0.0
        %2029 = vmatmul.mubr.f32.gmra.mrb[0].mxu0 %v1897
        %v2030 = vpop.f32.mrb[0].mxu0
        %v2031 = vadd.f32 %v1839, %v2030
        %v2032 = vpop.f32.mrb[0].mxu0
        %2033 = vmatprep.mubr.f32.mxu0 0.0
        %2034 = vmatmul.mubr.f32.gmra.mrb[0].mxu0 %v1900
        %v2035 = vpop.f32.mrb[0].mxu0
        %v2036 = vadd.f32 %v1844, %v2035
        %v2037 = vpop.f32.mrb[0].mxu0
        %2038 = vmatprep.mubr.f32.mxu0 0.0
        %2039 = vmatmul.mubr.f32.gmra.mrb[0].mxu0 %v1903
        %v2040 = vpop.f32.mrb[0].mxu0
        %v2041 = vadd.f32 %v1849, %v2040
        %v2042 = vpop.f32.mrb[0].mxu0
        %2043 = vmatprep.mubr.f32.mxu0 0.0
        %2044 = vmatmul.mubr.f32.gmra.mrb[0].mxu0 %v1906
        %v2045 = vpop.f32.mrb[0].mxu0
        %v2046 = vadd.f32 %v1854, %v2045
        %v2047 = vpop.f32.mrb[0].mxu0
        %2048 = vmatprep.mubr.f32.mxu0 0.0
        %2049 = vmatmul.mubr.f32.gmra.mrb[0].mxu0 %v1909
        %v2050 = vpop.f32.mrb[0].mxu0
        %v2051 = vadd.f32 %v1859, %v2050
        %v2052 = vpop.f32.mrb[0].mxu0
        %2053 = vmatprep.mubr.f32.mxu0 0.0
        %2054 = vmatmul.mubr.f32.gmra.mrb[0].mxu0 %v1912
        %v2055 = vpop.f32.mrb[0].mxu0
        %v2056 = vadd.f32 %v1864, %v2055
        %v2057 = vpop.f32.mrb[0].mxu0
        %2058 = vdwg.mxu0
        %s2059 = scalar_lea.vmem %s3, 16
        %v2060 = vld [vmem:[%s2059] sm:$0xff]
        %s2061 = scalar_lea.vmem %s4, 16
        %v2062 = vld [vmem:[%s2061] sm:$0xff]
        %2064 = vset.pattern.permute.xlu0 0
        %2065 = vperm.xlu0 %2064, %v2062
        %v2066 = vpop.permute.xlu0 %2065
        %v2069 = vsel %vm500, %v2060, 0
        %2071 = vmatprep.subr.mxu0 0.0
        %2072 = vmatpush1.msra.mxu0 %v1748
        %2073 = vmatprep.subr.mxu0 0.0
        %2074 = vmatpush1.msra.mxu0 %v1749
        %2075 = vmatprep.subr.mxu0 0.0
        %2076 = vmatpush1.msra.mxu0 %v1750
        %2077 = vmatprep.subr.mxu0 0.0
        %2078 = vmatpush1.msra.mxu0 %v1751
        %2079 = vmatprep.subr.mxu0 0.0
        %2080 = vmatpush1.msra.mxu0 0.0
        %2081 = vmatprep.subr.mxu0 0.0
        %2082 = vmatpush1.msra.mxu0 0.0
        %2083 = vmatprep.subr.mxu0 0.0
        %2084 = vmatpush1.msra.mxu0 0.0
        %2085 = vmatprep.subr.mxu0 0.0
        %2086 = vmatpush1.msra.mxu0 0.0
        %2087 = vmatprep.subr.mxu0 0.0
        %2088 = vmatpush1.msra.mxu0 0.0
        %2089 = vmatprep.subr.mxu0 0.0
        %2090 = vmatpush1.msra.mxu0 0.0
        %2091 = vmatprep.subr.mxu0 0.0
        %2092 = vmatpush1.msra.mxu0 0.0
        %2093 = vmatprep.subr.mxu0 0.0
        %2094 = vmatpush1.msra.mxu0 0.0
        %2095 = vmatprep.subr.mxu0 0.0
        %2096 = vmatpush1.msra.mxu0 0.0
        %2097 = vmatprep.subr.mxu0 0.0
        %2098 = vmatpush1.msra.mxu0 0.0
        %2099 = vmatprep.subr.mxu0 0.0
        %2100 = vmatpush1.msra.mxu0 0.0
        %2101 = vmatprep.subr.mxu0 0.0
        %2102 = vmatpush1.msra.mxu0 0.0
        %2103 = vmatprep.subr.mxu0 0.0
        %2104 = vmatpush1.msra.mxu0 0.0
        %2105 = vmatprep.subr.mxu0 0.0
        %2106 = vmatpush1.msra.mxu0 0.0
        %2107 = vmatprep.subr.mxu0 0.0
        %2108 = vmatpush1.msra.mxu0 0.0
        %2109 = vmatprep.subr.mxu0 0.0
        %2110 = vmatpush1.msra.mxu0 0.0
        %2111 = vmatprep.subr.mxu0 0.0
        %2112 = vmatpush1.msra.mxu0 0.0
        %2113 = vmatprep.subr.mxu0 0.0
        %2114 = vmatpush1.msra.mxu0 0.0
        %2115 = vmatprep.subr.mxu0 0.0
        %2116 = vmatpush1.msra.mxu0 0.0
        %2117 = vmatprep.subr.mxu0 0.0
        %2118 = vmatpush1.msra.mxu0 0.0
        %2119 = vmatprep.subr.mxu0 0.0
        %2120 = vmatpush1.msra.mxu0 0.0
        %2121 = vmatprep.subr.mxu0 0.0
        %2122 = vmatpush1.msra.mxu0 0.0
        %2123 = vmatprep.subr.mxu0 0.0
        %2124 = vmatpush1.msra.mxu0 0.0
        %2125 = vmatprep.subr.mxu0 0.0
        %2126 = vmatpush1.msra.mxu0 0.0
        %2127 = vmatprep.subr.mxu0 0.0
        %2128 = vmatpush1.msra.mxu0 0.0
        %2129 = vmatprep.subr.mxu0 0.0
        %2130 = vmatpush1.msra.mxu0 0.0
        %2131 = vmatprep.subr.mxu0 0.0
        %2132 = vmatpush1.msra.mxu0 0.0
        %2133 = vmatprep.subr.mxu0 0.0
        %2134 = vmatpush1.msra.mxu0 0.0
        %2135 = vmatprep.mubr.f32.mxu0 0.0
        %2136 = vmatmul.mubr.f32.gmra.mrb[0].mxu0 %v2069
        %v2137 = vpop.f32.mrb[0].mxu0
        %v2138 = vadd.f32 %v2066, %v2137
        %v2139 = vpop.f32.mrb[0].mxu0
        %2140 = vdwg.mxu0
        %v2141 = vmax.f32 %v1981, %v2001
        %v2142 = vmax.f32 %v1986, %v2006
        %v2143 = vmax.f32 %v1991, %v2011
        %v2144 = vmax.f32 %v1996, %v2016
        %v2145 = vmax.f32 %v2141, %v2021
        %v2146 = vmax.f32 %v2142, %v2026
        %v2147 = vmax.f32 %v2143, %v2031
        %v2148 = vmax.f32 %v2144, %v2036
        %v2149 = vmax.f32 %v2145, %v2041
        %v2150 = vmax.f32 %v2146, %v2046
        %v2151 = vmax.f32 %v2147, %v2051
        %v2152 = vmax.f32 %v2148, %v2056
        %v2153 = vmax.f32 %v2149, %v2150
        %v2154 = vmax.f32 %v2151, %v2152
        %v2155 = vmax.f32 %v2153, %v2154
        %v2156 = vrot.slane %v2155, 4
        %v2157 = vmax.f32 %v2155, %v2156
        %v2158 = vrot.slane %v2157, 2
        %v2159 = vmax.f32 %v2157, %v2158
        %v2160 = vrot.slane %v2159, 1
        %v2161 = vmax.f32 %v2159, %v2160
        %vm2162 = vcmp.ge.f32.partialorder %v1981, %v2161
        %vm2163 = vcmp.ge.f32.partialorder %v1986, %v2161
        %vm2164 = vcmp.ge.f32.partialorder %v1991, %v2161
        %vm2165 = vcmp.ge.f32.partialorder %v1996, %v2161
        %vm2166 = vcmp.ge.f32.partialorder %v2001, %v2161
        %vm2167 = vcmp.ge.f32.partialorder %v2006, %v2161
        %vm2168 = vcmp.ge.f32.partialorder %v2011, %v2161
        %vm2169 = vcmp.ge.f32.partialorder %v2016, %v2161
        %vm2170 = vcmp.ge.f32.partialorder %v2021, %v2161
        %vm2171 = vcmp.ge.f32.partialorder %v2026, %v2161
        %vm2172 = vcmp.ge.f32.partialorder %v2031, %v2161
        %vm2173 = vcmp.ge.f32.partialorder %v2036, %v2161
        %vm2174 = vcmp.ge.f32.partialorder %v2041, %v2161
        %vm2175 = vcmp.ge.f32.partialorder %v2046, %v2161
        %vm2176 = vcmp.ge.f32.partialorder %v2051, %v2161
        %vm2177 = vcmp.ge.f32.partialorder %v2056, %v2161
        %v2178 = vsel %vm2162, %v775, 128
        %v2179 = vsel %vm2163, %v776, 128
        %v2180 = vsel %vm2164, %v777, 128
        %v2181 = vsel %vm2165, %v778, 128
        %v2182 = vsel %vm2166, %v779, 128
        %v2183 = vsel %vm2167, %v780, 128
        %v2184 = vsel %vm2168, %v781, 128
        %v2185 = vsel %vm2169, %v782, 128
        %v2186 = vsel %vm2170, %v783, 128
        %v2187 = vsel %vm2171, %v784, 128
        %v2188 = vsel %vm2172, %v785, 128
        %v2189 = vsel %vm2173, %v786, 128
        %v2190 = vsel %vm2174, %v787, 128
        %v2191 = vsel %vm2175, %v788, 128
        %v2192 = vsel %vm2176, %v789, 128
        %v2193 = vsel %vm2177, %v790, 128
        %vm2194 = vcmp.lt.s32.totalorder %v2178, %v2182
        %v2195 = vsel %vm2194, %v2178, %v2182
        %vm2196 = vcmp.lt.s32.totalorder %v2179, %v2183
        %v2197 = vsel %vm2196, %v2179, %v2183
        %vm2198 = vcmp.lt.s32.totalorder %v2180, %v2184
        %v2199 = vsel %vm2198, %v2180, %v2184
        %vm2200 = vcmp.lt.s32.totalorder %v2181, %v2185
        %v2201 = vsel %vm2200, %v2181, %v2185
        %vm2202 = vcmp.lt.s32.totalorder %v2195, %v2186
        %v2203 = vsel %vm2202, %v2195, %v2186
        %vm2204 = vcmp.lt.s32.totalorder %v2197, %v2187
        %v2205 = vsel %vm2204, %v2197, %v2187
        %vm2206 = vcmp.lt.s32.totalorder %v2199, %v2188
        %v2207 = vsel %vm2206, %v2199, %v2188
        %vm2208 = vcmp.lt.s32.totalorder %v2201, %v2189
        %v2209 = vsel %vm2208, %v2201, %v2189
        %vm2210 = vcmp.lt.s32.totalorder %v2203, %v2190
        %v2211 = vsel %vm2210, %v2203, %v2190
        %vm2212 = vcmp.lt.s32.totalorder %v2205, %v2191
        %v2213 = vsel %vm2212, %v2205, %v2191
        %vm2214 = vcmp.lt.s32.totalorder %v2207, %v2192
        %v2215 = vsel %vm2214, %v2207, %v2192
        %vm2216 = vcmp.lt.s32.totalorder %v2209, %v2193
        %v2217 = vsel %vm2216, %v2209, %v2193
        %vm2218 = vcmp.lt.s32.totalorder %v2211, %v2213
        %v2219 = vsel %vm2218, %v2211, %v2213
        %vm2220 = vcmp.lt.s32.totalorder %v2215, %v2217
        %v2221 = vsel %vm2220, %v2215, %v2217
        %vm2222 = vcmp.lt.s32.totalorder %v2219, %v2221
        %v2223 = vsel %vm2222, %v2219, %v2221
        %v2224 = vrot.slane %v2223, 4
        %vm2225 = vcmp.lt.s32.totalorder %v2223, %v2224
        %v2226 = vsel %vm2225, %v2223, %v2224
        %v2227 = vrot.slane %v2226, 2
        %vm2228 = vcmp.lt.s32.totalorder %v2226, %v2227
        %v2229 = vsel %vm2228, %v2226, %v2227
        %v2230 = vrot.slane %v2229, 1
        %vm2231 = vcmp.lt.s32.totalorder %v2229, %v2230
        %v2232 = vsel %vm2231, %v2229, %v2230
        %vm2233 = vcmp.eq.s32.totalorder %v775, %v2232
        %vm2234 = vcmp.eq.s32.totalorder %v776, %v2232
        %vm2235 = vcmp.eq.s32.totalorder %v777, %v2232
        %vm2236 = vcmp.eq.s32.totalorder %v778, %v2232
        %vm2237 = vcmp.eq.s32.totalorder %v779, %v2232
        %vm2238 = vcmp.eq.s32.totalorder %v780, %v2232
        %vm2239 = vcmp.eq.s32.totalorder %v781, %v2232
        %vm2240 = vcmp.eq.s32.totalorder %v782, %v2232
        %vm2241 = vcmp.eq.s32.totalorder %v783, %v2232
        %vm2242 = vcmp.eq.s32.totalorder %v784, %v2232
        %vm2243 = vcmp.eq.s32.totalorder %v785, %v2232
        %vm2244 = vcmp.eq.s32.totalorder %v786, %v2232
        %vm2245 = vcmp.eq.s32.totalorder %v787, %v2232
        %vm2246 = vcmp.eq.s32.totalorder %v788, %v2232
        %vm2247 = vcmp.eq.s32.totalorder %v789, %v2232
        %vm2248 = vcmp.eq.s32.totalorder %v790, %v2232
        %v2249 = vsel %vm2233, 1, 0
        %v2250 = vsel %vm2234, 1, 0
        %v2251 = vsel %vm2235, 1, 0
        %v2252 = vsel %vm2236, 1, 0
        %v2253 = vsel %vm2237, 1, 0
        %v2254 = vsel %vm2238, 1, 0
        %v2255 = vsel %vm2239, 1, 0
        %v2256 = vsel %vm2240, 1, 0
        %v2257 = vsel %vm2241, 1, 0
        %v2258 = vsel %vm2242, 1, 0
        %v2259 = vsel %vm2243, 1, 0
        %v2260 = vsel %vm2244, 1, 0
        %v2261 = vsel %vm2245, 1, 0
        %v2262 = vsel %vm2246, 1, 0
        %v2263 = vsel %vm2247, 1, 0
        %v2264 = vsel %vm2248, 1, 0
        %v2265 = vcvt.s32.f32 %v2249
        %v2266 = vcvt.s32.f32 %v2250
        %v2267 = vcvt.s32.f32 %v2251
        %v2268 = vcvt.s32.f32 %v2252
        %v2269 = vcvt.s32.f32 %v2253
        %v2270 = vcvt.s32.f32 %v2254
        %v2271 = vcvt.s32.f32 %v2255
        %v2272 = vcvt.s32.f32 %v2256
        %v2273 = vcvt.s32.f32 %v2257
        %v2274 = vcvt.s32.f32 %v2258
        %v2275 = vcvt.s32.f32 %v2259
        %v2276 = vcvt.s32.f32 %v2260
        %v2277 = vcvt.s32.f32 %v2261
        %v2278 = vcvt.s32.f32 %v2262
        %v2279 = vcvt.s32.f32 %v2263
        %v2280 = vcvt.s32.f32 %v2264
        %s2281 = scalar_lea.vmem %s5, 80
        %v2282 = vld [vmem:[%s2281] sm:$0xff]
        %v2283 = vld [vmem:[%s2281 + $0x8] sm:$0xff]
        %v2284 = vld [vmem:[%s2281 + $0x10] sm:$0xff]
        %v2285 = vld [vmem:[%s2281 + $0x18] sm:$0xff]
        %v2286 = vld [vmem:[%s2281 + $0x20] sm:$0xff]
        %2287 = vmatprep.subr.mxu0 0.0
        %2288 = vmatpush1.msra.mxu0 %v2265
        %2289 = vmatprep.subr.mxu0 0.0
        %2290 = vmatpush1.msra.mxu0 %v2266
        %2291 = vmatprep.subr.mxu0 0.0
        %2292 = vmatpush1.msra.mxu0 %v2267
        %2293 = vmatprep.subr.mxu0 0.0
        %2294 = vmatpush1.msra.mxu0 %v2268
        %2295 = vmatprep.subr.mxu0 0.0
        %2296 = vmatpush1.msra.mxu0 %v2269
        %2297 = vmatprep.subr.mxu0 0.0
        %2298 = vmatpush1.msra.mxu0 %v2270
        %2299 = vmatprep.subr.mxu0 0.0
        %2300 = vmatpush1.msra.mxu0 %v2271
        %2301 = vmatprep.subr.mxu0 0.0
        %2302 = vmatpush1.msra.mxu0 %v2272
        %2303 = vmatprep.subr.mxu0 0.0
        %2304 = vmatpush1.msra.mxu0 %v2273
        %2305 = vmatprep.subr.mxu0 0.0
        %2306 = vmatpush1.msra.mxu0 %v2274
        %2307 = vmatprep.subr.mxu0 0.0
        %2308 = vmatpush1.msra.mxu0 %v2275
        %2309 = vmatprep.subr.mxu0 0.0
        %2310 = vmatpush1.msra.mxu0 %v2276
        %2311 = vmatprep.subr.mxu0 0.0
        %2312 = vmatpush1.msra.mxu0 %v2277
        %2313 = vmatprep.subr.mxu0 0.0
        %2314 = vmatpush1.msra.mxu0 %v2278
        %2315 = vmatprep.subr.mxu0 0.0
        %2316 = vmatpush1.msra.mxu0 %v2279
        %2317 = vmatprep.subr.mxu0 0.0
        %2318 = vmatpush1.msra.mxu0 %v2280
        %2319 = vmatprep.subr.mxu0 0.0
        %2320 = vmatpush1.msra.mxu0 0.0
        %2321 = vmatprep.subr.mxu0 0.0
        %2322 = vmatpush1.msra.mxu0 0.0
        %2323 = vmatprep.subr.mxu0 0.0
        %2324 = vmatpush1.msra.mxu0 0.0
        %2325 = vmatprep.subr.mxu0 0.0
        %2326 = vmatpush1.msra.mxu0 0.0
        %2327 = vmatprep.subr.mxu0 0.0
        %2328 = vmatpush1.msra.mxu0 0.0
        %2329 = vmatprep.subr.mxu0 0.0
        %2330 = vmatpush1.msra.mxu0 0.0
        %2331 = vmatprep.subr.mxu0 0.0
        %2332 = vmatpush1.msra.mxu0 0.0
        %2333 = vmatprep.subr.mxu0 0.0
        %2334 = vmatpush1.msra.mxu0 0.0
        %2335 = vmatprep.subr.mxu0 0.0
        %2336 = vmatpush1.msra.mxu0 0.0
        %2337 = vmatprep.subr.mxu0 0.0
        %2338 = vmatpush1.msra.mxu0 0.0
        %2339 = vmatprep.subr.mxu0 0.0
        %2340 = vmatpush1.msra.mxu0 0.0
        %2341 = vmatprep.subr.mxu0 0.0
        %2342 = vmatpush1.msra.mxu0 0.0
        %2343 = vmatprep.subr.mxu0 0.0
        %2344 = vmatpush1.msra.mxu0 0.0
        %2345 = vmatprep.subr.mxu0 0.0
        %2346 = vmatpush1.msra.mxu0 0.0
        %2347 = vmatprep.subr.mxu0 0.0
        %2348 = vmatpush1.msra.mxu0 0.0
        %2349 = vmatprep.subr.mxu0 0.0
        %2350 = vmatpush1.msra.mxu0 0.0
        %2351 = vmatprep.mubr.f32.mxu0 0.0
        %2352 = vmatmul.mubr.f32.gmra.mrb[0].mxu0 %v2282
        %v2353 = vpop.f32.mrb[0].mxu0
        %v2354 = vadd.f32 0.0, %v2353
        %v2355 = vpop.f32.mrb[0].mxu0
        %2356 = vmatprep.mubr.f32.mxu0 0.0
        %2357 = vmatmul.mubr.f32.gmra.mrb[0].mxu0 %v2283
        %v2358 = vpop.f32.mrb[0].mxu0
        %v2359 = vadd.f32 0.0, %v2358
        %v2360 = vpop.f32.mrb[0].mxu0
        %2361 = vmatprep.mubr.f32.mxu0 0.0
        %2362 = vmatmul.mubr.f32.gmra.mrb[0].mxu0 %v2284
        %v2363 = vpop.f32.mrb[0].mxu0
        %v2364 = vadd.f32 0.0, %v2363
        %v2365 = vpop.f32.mrb[0].mxu0
        %2366 = vmatprep.mubr.f32.mxu0 0.0
        %2367 = vmatmul.mubr.f32.gmra.mrb[0].mxu0 %v2285
        %v2368 = vpop.f32.mrb[0].mxu0
        %v2369 = vadd.f32 0.0, %v2368
        %v2370 = vpop.f32.mrb[0].mxu0
        %2371 = vmatprep.mubr.f32.mxu0 0.0
        %2372 = vmatmul.mubr.f32.gmra.mrb[0].mxu0 %v2286
        %v2373 = vpop.f32.mrb[0].mxu0
        %v2374 = vadd.f32 0.0, %v2373
        %v2375 = vpop.f32.mrb[0].mxu0
        %2376 = vdwg.mxu0
        %s2377 = scalar_lea.vmem %s6, 64
        %v2378 = vld [vmem:[%s2377] sm:$0xff]
        %v2379 = vld [vmem:[%s2377 + $0x8] sm:$0xff]
        %v2380 = vld [vmem:[%s2377 + $0x10] sm:$0xff]
        %v2381 = vld [vmem:[%s2377 + $0x18] sm:$0xff]
        %2383 = vset.pattern.permute.xlu0 0
        %2384 = vperm.xlu0 %2383, %v2378
        %v2385 = vpop.permute.xlu0 %2384
        %2388 = vset.pattern.permute.xlu0 0
        %2389 = vperm.xlu0 %2388, %v2379
        %v2390 = vpop.permute.xlu0 %2389
        %2393 = vset.pattern.permute.xlu0 0
        %2394 = vperm.xlu0 %2393, %v2380
        %v2395 = vpop.permute.xlu0 %2394
        %2398 = vset.pattern.permute.xlu0 0
        %2399 = vperm.xlu0 %2398, %v2381
        %v2400 = vpop.permute.xlu0 %2399
        %v2402 = vadd.f32 %v2359, %v2385
        %v2403 = vadd.f32 %v2364, %v2390
        %v2404 = vadd.f32 %v2369, %v2395
        %v2405 = vadd.f32 %v2374, %v2400
        %v2406 = vsub.f32 %v2138, %v2354
        %v2407 = vmul.f32 %v2406, %v2406
        %v2408 = vrot.slane %v2407, 4
        %v2409 = vadd.f32 %v2407, %v2408
        %v2410 = vrot.slane %v2409, 2
        %v2411 = vadd.f32 %v2409, %v2410
        %v2412 = vrot.slane %v2411, 1
        %v2413 = vadd.f32 %v2411, %v2412
        %v2414 = vsel %vm387, %v2413, 0.0
        %2415 = vadd.xlane.f32.xlu0 %v2414
        %v2416 = vpop.xlane.xlu0 %2415
        %vm2417 = vcmp.eq.s32.totalorder %v378, 2
        %v2418 = vsel %vm2417, %v2416, 0.0
        %v2419 = vadd.f32 %v1743, %v2418
        %v2420 = vadd.f32 %v1744, %v2402
        %v2421 = vadd.f32 %v1745, %v2403
        %v2422 = vadd.f32 %v1746, %v2404
        %v2423 = vadd.f32 %v1747, %v2405
        %v2424 = vsub.f32 %v1748, %v2402
        %v2425 = vsub.f32 %v1749, %v2403
        %v2426 = vsub.f32 %v1750, %v2404
        %v2427 = vsub.f32 %v1751, %v2405
        %s2428 = scalar_lea.vmem %s1, 384
        %v2429 = vld [vmem:[%s2428] sm:$0xff]
        %v2430 = vld [vmem:[%s2428 + $0x8] sm:$0xff]
        %v2431 = vld [vmem:[%s2428 + $0x10] sm:$0xff]
        %v2432 = vld [vmem:[%s2428 + $0x18] sm:$0xff]
        %v2433 = vld [vmem:[%s2428 + $0x20] sm:$0xff]
        %v2434 = vld [vmem:[%s2428 + $0x28] sm:$0xff]
        %v2435 = vld [vmem:[%s2428 + $0x30] sm:$0xff]
        %v2436 = vld [vmem:[%s2428 + $0x38] sm:$0xff]
        %v2437 = vld [vmem:[%s2428 + $0x40] sm:$0xff]
        %v2438 = vld [vmem:[%s2428 + $0x48] sm:$0xff]
        %v2439 = vld [vmem:[%s2428 + $0x50] sm:$0xff]
        %v2440 = vld [vmem:[%s2428 + $0x58] sm:$0xff]
        %v2441 = vld [vmem:[%s2428 + $0x60] sm:$0xff]
        %v2442 = vld [vmem:[%s2428 + $0x68] sm:$0xff]
        %v2443 = vld [vmem:[%s2428 + $0x70] sm:$0xff]
        %v2444 = vld [vmem:[%s2428 + $0x78] sm:$0xff]
        %s2445 = scalar_lea.vmem %s2, 384
        %v2446 = vld [vmem:[%s2445] sm:$0xff]
        %v2447 = vld [vmem:[%s2445 + $0x8] sm:$0xff]
        %v2448 = vld [vmem:[%s2445 + $0x10] sm:$0xff]
        %v2449 = vld [vmem:[%s2445 + $0x18] sm:$0xff]
        %v2450 = vld [vmem:[%s2445 + $0x20] sm:$0xff]
        %v2451 = vld [vmem:[%s2445 + $0x28] sm:$0xff]
        %v2452 = vld [vmem:[%s2445 + $0x30] sm:$0xff]
        %v2453 = vld [vmem:[%s2445 + $0x38] sm:$0xff]
        %v2454 = vld [vmem:[%s2445 + $0x40] sm:$0xff]
        %v2455 = vld [vmem:[%s2445 + $0x48] sm:$0xff]
        %v2456 = vld [vmem:[%s2445 + $0x50] sm:$0xff]
        %v2457 = vld [vmem:[%s2445 + $0x58] sm:$0xff]
        %v2458 = vld [vmem:[%s2445 + $0x60] sm:$0xff]
        %v2459 = vld [vmem:[%s2445 + $0x68] sm:$0xff]
        %v2460 = vld [vmem:[%s2445 + $0x70] sm:$0xff]
        %v2461 = vld [vmem:[%s2445 + $0x78] sm:$0xff]
        %2463 = vset.pattern.permute.xlu0 0
        %2464 = vperm.xlu0 %2463, %v2446
        %v2465 = vpop.permute.xlu0 %2464
        %2468 = vset.pattern.permute.xlu0 0
        %2469 = vperm.xlu0 %2468, %v2447
        %v2470 = vpop.permute.xlu0 %2469
        %2473 = vset.pattern.permute.xlu0 0
        %2474 = vperm.xlu0 %2473, %v2448
        %v2475 = vpop.permute.xlu0 %2474
        %2478 = vset.pattern.permute.xlu0 0
        %2479 = vperm.xlu0 %2478, %v2449
        %v2480 = vpop.permute.xlu0 %2479
        %2483 = vset.pattern.permute.xlu0 0
        %2484 = vperm.xlu0 %2483, %v2450
        %v2485 = vpop.permute.xlu0 %2484
        %2488 = vset.pattern.permute.xlu0 0
        %2489 = vperm.xlu0 %2488, %v2451
        %v2490 = vpop.permute.xlu0 %2489
        %2493 = vset.pattern.permute.xlu0 0
        %2494 = vperm.xlu0 %2493, %v2452
        %v2495 = vpop.permute.xlu0 %2494
        %2498 = vset.pattern.permute.xlu0 0
        %2499 = vperm.xlu0 %2498, %v2453
        %v2500 = vpop.permute.xlu0 %2499
        %2503 = vset.pattern.permute.xlu0 0
        %2504 = vperm.xlu0 %2503, %v2454
        %v2505 = vpop.permute.xlu0 %2504
        %2508 = vset.pattern.permute.xlu0 0
        %2509 = vperm.xlu0 %2508, %v2455
        %v2510 = vpop.permute.xlu0 %2509
        %2513 = vset.pattern.permute.xlu0 0
        %2514 = vperm.xlu0 %2513, %v2456
        %v2515 = vpop.permute.xlu0 %2514
        %2518 = vset.pattern.permute.xlu0 0
        %2519 = vperm.xlu0 %2518, %v2457
        %v2520 = vpop.permute.xlu0 %2519
        %2523 = vset.pattern.permute.xlu0 0
        %2524 = vperm.xlu0 %2523, %v2458
        %v2525 = vpop.permute.xlu0 %2524
        %2528 = vset.pattern.permute.xlu0 0
        %2529 = vperm.xlu0 %2528, %v2459
        %v2530 = vpop.permute.xlu0 %2529
        %2533 = vset.pattern.permute.xlu0 0
        %2534 = vperm.xlu0 %2533, %v2460
        %v2535 = vpop.permute.xlu0 %2534
        %2538 = vset.pattern.permute.xlu0 0
        %2539 = vperm.xlu0 %2538, %v2461
        %v2540 = vpop.permute.xlu0 %2539
        %v2543 = vsel %vm500, %v2429, 0
        %v2546 = vsel %vm500, %v2430, 0
        %v2549 = vsel %vm500, %v2431, 0
        %v2552 = vsel %vm500, %v2432, 0
        %v2555 = vsel %vm500, %v2433, 0
        %v2558 = vsel %vm500, %v2434, 0
        %v2561 = vsel %vm500, %v2435, 0
        %v2564 = vsel %vm500, %v2436, 0
        %v2567 = vsel %vm500, %v2437, 0
        %v2570 = vsel %vm500, %v2438, 0
        %v2573 = vsel %vm500, %v2439, 0
        %v2576 = vsel %vm500, %v2440, 0
        %v2579 = vsel %vm500, %v2441, 0
        %v2582 = vsel %vm500, %v2442, 0
        %v2585 = vsel %vm500, %v2443, 0
        %v2588 = vsel %vm500, %v2444, 0
        %2590 = vmatprep.subr.mxu0 0.0
        %2591 = vmatpush1.msra.mxu0 %v2424
        %2592 = vmatprep.subr.mxu0 0.0
        %2593 = vmatpush1.msra.mxu0 %v2425
        %2594 = vmatprep.subr.mxu0 0.0
        %2595 = vmatpush1.msra.mxu0 %v2426
        %2596 = vmatprep.subr.mxu0 0.0
        %2597 = vmatpush1.msra.mxu0 %v2427
        %2598 = vmatprep.subr.mxu0 0.0
        %2599 = vmatpush1.msra.mxu0 0.0
        %2600 = vmatprep.subr.mxu0 0.0
        %2601 = vmatpush1.msra.mxu0 0.0
        %2602 = vmatprep.subr.mxu0 0.0
        %2603 = vmatpush1.msra.mxu0 0.0
        %2604 = vmatprep.subr.mxu0 0.0
        %2605 = vmatpush1.msra.mxu0 0.0
        %2606 = vmatprep.subr.mxu0 0.0
        %2607 = vmatpush1.msra.mxu0 0.0
        %2608 = vmatprep.subr.mxu0 0.0
        %2609 = vmatpush1.msra.mxu0 0.0
        %2610 = vmatprep.subr.mxu0 0.0
        %2611 = vmatpush1.msra.mxu0 0.0
        %2612 = vmatprep.subr.mxu0 0.0
        %2613 = vmatpush1.msra.mxu0 0.0
        %2614 = vmatprep.subr.mxu0 0.0
        %2615 = vmatpush1.msra.mxu0 0.0
        %2616 = vmatprep.subr.mxu0 0.0
        %2617 = vmatpush1.msra.mxu0 0.0
        %2618 = vmatprep.subr.mxu0 0.0
        %2619 = vmatpush1.msra.mxu0 0.0
        %2620 = vmatprep.subr.mxu0 0.0
        %2621 = vmatpush1.msra.mxu0 0.0
        %2622 = vmatprep.subr.mxu0 0.0
        %2623 = vmatpush1.msra.mxu0 0.0
        %2624 = vmatprep.subr.mxu0 0.0
        %2625 = vmatpush1.msra.mxu0 0.0
        %2626 = vmatprep.subr.mxu0 0.0
        %2627 = vmatpush1.msra.mxu0 0.0
        %2628 = vmatprep.subr.mxu0 0.0
        %2629 = vmatpush1.msra.mxu0 0.0
        %2630 = vmatprep.subr.mxu0 0.0
        %2631 = vmatpush1.msra.mxu0 0.0
        %2632 = vmatprep.subr.mxu0 0.0
        %2633 = vmatpush1.msra.mxu0 0.0
        %2634 = vmatprep.subr.mxu0 0.0
        %2635 = vmatpush1.msra.mxu0 0.0
        %2636 = vmatprep.subr.mxu0 0.0
        %2637 = vmatpush1.msra.mxu0 0.0
        %2638 = vmatprep.subr.mxu0 0.0
        %2639 = vmatpush1.msra.mxu0 0.0
        %2640 = vmatprep.subr.mxu0 0.0
        %2641 = vmatpush1.msra.mxu0 0.0
        %2642 = vmatprep.subr.mxu0 0.0
        %2643 = vmatpush1.msra.mxu0 0.0
        %2644 = vmatprep.subr.mxu0 0.0
        %2645 = vmatpush1.msra.mxu0 0.0
        %2646 = vmatprep.subr.mxu0 0.0
        %2647 = vmatpush1.msra.mxu0 0.0
        %2648 = vmatprep.subr.mxu0 0.0
        %2649 = vmatpush1.msra.mxu0 0.0
        %2650 = vmatprep.subr.mxu0 0.0
        %2651 = vmatpush1.msra.mxu0 0.0
        %2652 = vmatprep.subr.mxu0 0.0
        %2653 = vmatpush1.msra.mxu0 0.0
        %2654 = vmatprep.mubr.f32.mxu0 0.0
        %2655 = vmatmul.mubr.f32.gmra.mrb[0].mxu0 %v2543
        %v2656 = vpop.f32.mrb[0].mxu0
        %v2657 = vadd.f32 %v2465, %v2656
        %v2658 = vpop.f32.mrb[0].mxu0
        %2659 = vmatprep.mubr.f32.mxu0 0.0
        %2660 = vmatmul.mubr.f32.gmra.mrb[0].mxu0 %v2546
        %v2661 = vpop.f32.mrb[0].mxu0
        %v2662 = vadd.f32 %v2470, %v2661
        %v2663 = vpop.f32.mrb[0].mxu0
        %2664 = vmatprep.mubr.f32.mxu0 0.0
        %2665 = vmatmul.mubr.f32.gmra.mrb[0].mxu0 %v2549
        %v2666 = vpop.f32.mrb[0].mxu0
        %v2667 = vadd.f32 %v2475, %v2666
        %v2668 = vpop.f32.mrb[0].mxu0
        %2669 = vmatprep.mubr.f32.mxu0 0.0
        %2670 = vmatmul.mubr.f32.gmra.mrb[0].mxu0 %v2552
        %v2671 = vpop.f32.mrb[0].mxu0
        %v2672 = vadd.f32 %v2480, %v2671
        %v2673 = vpop.f32.mrb[0].mxu0
        %2674 = vmatprep.mubr.f32.mxu0 0.0
        %2675 = vmatmul.mubr.f32.gmra.mrb[0].mxu0 %v2555
        %v2676 = vpop.f32.mrb[0].mxu0
        %v2677 = vadd.f32 %v2485, %v2676
        %v2678 = vpop.f32.mrb[0].mxu0
        %2679 = vmatprep.mubr.f32.mxu0 0.0
        %2680 = vmatmul.mubr.f32.gmra.mrb[0].mxu0 %v2558
        %v2681 = vpop.f32.mrb[0].mxu0
        %v2682 = vadd.f32 %v2490, %v2681
        %v2683 = vpop.f32.mrb[0].mxu0
        %2684 = vmatprep.mubr.f32.mxu0 0.0
        %2685 = vmatmul.mubr.f32.gmra.mrb[0].mxu0 %v2561
        %v2686 = vpop.f32.mrb[0].mxu0
        %v2687 = vadd.f32 %v2495, %v2686
        %v2688 = vpop.f32.mrb[0].mxu0
        %2689 = vmatprep.mubr.f32.mxu0 0.0
        %2690 = vmatmul.mubr.f32.gmra.mrb[0].mxu0 %v2564
        %v2691 = vpop.f32.mrb[0].mxu0
        %v2692 = vadd.f32 %v2500, %v2691
        %v2693 = vpop.f32.mrb[0].mxu0
        %2694 = vmatprep.mubr.f32.mxu0 0.0
        %2695 = vmatmul.mubr.f32.gmra.mrb[0].mxu0 %v2567
        %v2696 = vpop.f32.mrb[0].mxu0
        %v2697 = vadd.f32 %v2505, %v2696
        %v2698 = vpop.f32.mrb[0].mxu0
        %2699 = vmatprep.mubr.f32.mxu0 0.0
        %2700 = vmatmul.mubr.f32.gmra.mrb[0].mxu0 %v2570
        %v2701 = vpop.f32.mrb[0].mxu0
        %v2702 = vadd.f32 %v2510, %v2701
        %v2703 = vpop.f32.mrb[0].mxu0
        %2704 = vmatprep.mubr.f32.mxu0 0.0
        %2705 = vmatmul.mubr.f32.gmra.mrb[0].mxu0 %v2573
        %v2706 = vpop.f32.mrb[0].mxu0
        %v2707 = vadd.f32 %v2515, %v2706
        %v2708 = vpop.f32.mrb[0].mxu0
        %2709 = vmatprep.mubr.f32.mxu0 0.0
        %2710 = vmatmul.mubr.f32.gmra.mrb[0].mxu0 %v2576
        %v2711 = vpop.f32.mrb[0].mxu0
        %v2712 = vadd.f32 %v2520, %v2711
        %v2713 = vpop.f32.mrb[0].mxu0
        %2714 = vmatprep.mubr.f32.mxu0 0.0
        %2715 = vmatmul.mubr.f32.gmra.mrb[0].mxu0 %v2579
        %v2716 = vpop.f32.mrb[0].mxu0
        %v2717 = vadd.f32 %v2525, %v2716
        %v2718 = vpop.f32.mrb[0].mxu0
        %2719 = vmatprep.mubr.f32.mxu0 0.0
        %2720 = vmatmul.mubr.f32.gmra.mrb[0].mxu0 %v2582
        %v2721 = vpop.f32.mrb[0].mxu0
        %v2722 = vadd.f32 %v2530, %v2721
        %v2723 = vpop.f32.mrb[0].mxu0
        %2724 = vmatprep.mubr.f32.mxu0 0.0
        %2725 = vmatmul.mubr.f32.gmra.mrb[0].mxu0 %v2585
        %v2726 = vpop.f32.mrb[0].mxu0
        %v2727 = vadd.f32 %v2535, %v2726
        %v2728 = vpop.f32.mrb[0].mxu0
        %2729 = vmatprep.mubr.f32.mxu0 0.0
        %2730 = vmatmul.mubr.f32.gmra.mrb[0].mxu0 %v2588
        %v2731 = vpop.f32.mrb[0].mxu0
        %v2732 = vadd.f32 %v2540, %v2731
        %v2733 = vpop.f32.mrb[0].mxu0
        %2734 = vdwg.mxu0
        %s2735 = scalar_lea.vmem %s3, 24
        %v2736 = vld [vmem:[%s2735] sm:$0xff]
        %s2737 = scalar_lea.vmem %s4, 24
        %v2738 = vld [vmem:[%s2737] sm:$0xff]
        %2740 = vset.pattern.permute.xlu0 0
        %2741 = vperm.xlu0 %2740, %v2738
        %v2742 = vpop.permute.xlu0 %2741
        %v2745 = vsel %vm500, %v2736, 0
        %2747 = vmatprep.subr.mxu0 0.0
        %2748 = vmatpush1.msra.mxu0 %v2424
        %2749 = vmatprep.subr.mxu0 0.0
        %2750 = vmatpush1.msra.mxu0 %v2425
        %2751 = vmatprep.subr.mxu0 0.0
        %2752 = vmatpush1.msra.mxu0 %v2426
        %2753 = vmatprep.subr.mxu0 0.0
        %2754 = vmatpush1.msra.mxu0 %v2427
        %2755 = vmatprep.subr.mxu0 0.0
        %2756 = vmatpush1.msra.mxu0 0.0
        %2757 = vmatprep.subr.mxu0 0.0
        %2758 = vmatpush1.msra.mxu0 0.0
        %2759 = vmatprep.subr.mxu0 0.0
        %2760 = vmatpush1.msra.mxu0 0.0
        %2761 = vmatprep.subr.mxu0 0.0
        %2762 = vmatpush1.msra.mxu0 0.0
        %2763 = vmatprep.subr.mxu0 0.0
        %2764 = vmatpush1.msra.mxu0 0.0
        %2765 = vmatprep.subr.mxu0 0.0
        %2766 = vmatpush1.msra.mxu0 0.0
        %2767 = vmatprep.subr.mxu0 0.0
        %2768 = vmatpush1.msra.mxu0 0.0
        %2769 = vmatprep.subr.mxu0 0.0
        %2770 = vmatpush1.msra.mxu0 0.0
        %2771 = vmatprep.subr.mxu0 0.0
        %2772 = vmatpush1.msra.mxu0 0.0
        %2773 = vmatprep.subr.mxu0 0.0
        %2774 = vmatpush1.msra.mxu0 0.0
        %2775 = vmatprep.subr.mxu0 0.0
        %2776 = vmatpush1.msra.mxu0 0.0
        %2777 = vmatprep.subr.mxu0 0.0
        %2778 = vmatpush1.msra.mxu0 0.0
        %2779 = vmatprep.subr.mxu0 0.0
        %2780 = vmatpush1.msra.mxu0 0.0
        %2781 = vmatprep.subr.mxu0 0.0
        %2782 = vmatpush1.msra.mxu0 0.0
        %2783 = vmatprep.subr.mxu0 0.0
        %2784 = vmatpush1.msra.mxu0 0.0
        %2785 = vmatprep.subr.mxu0 0.0
        %2786 = vmatpush1.msra.mxu0 0.0
        %2787 = vmatprep.subr.mxu0 0.0
        %2788 = vmatpush1.msra.mxu0 0.0
        %2789 = vmatprep.subr.mxu0 0.0
        %2790 = vmatpush1.msra.mxu0 0.0
        %2791 = vmatprep.subr.mxu0 0.0
        %2792 = vmatpush1.msra.mxu0 0.0
        %2793 = vmatprep.subr.mxu0 0.0
        %2794 = vmatpush1.msra.mxu0 0.0
        %2795 = vmatprep.subr.mxu0 0.0
        %2796 = vmatpush1.msra.mxu0 0.0
        %2797 = vmatprep.subr.mxu0 0.0
        %2798 = vmatpush1.msra.mxu0 0.0
        %2799 = vmatprep.subr.mxu0 0.0
        %2800 = vmatpush1.msra.mxu0 0.0
        %2801 = vmatprep.subr.mxu0 0.0
        %2802 = vmatpush1.msra.mxu0 0.0
        %2803 = vmatprep.subr.mxu0 0.0
        %2804 = vmatpush1.msra.mxu0 0.0
        %2805 = vmatprep.subr.mxu0 0.0
        %2806 = vmatpush1.msra.mxu0 0.0
        %2807 = vmatprep.subr.mxu0 0.0
        %2808 = vmatpush1.msra.mxu0 0.0
        %2809 = vmatprep.subr.mxu0 0.0
        %2810 = vmatpush1.msra.mxu0 0.0
        %2811 = vmatprep.mubr.f32.mxu0 0.0
        %2812 = vmatmul.mubr.f32.gmra.mrb[0].mxu0 %v2745
        %v2813 = vpop.f32.mrb[0].mxu0
        %v2814 = vadd.f32 %v2742, %v2813
        %v2815 = vpop.f32.mrb[0].mxu0
        %2816 = vdwg.mxu0
        %v2817 = vmax.f32 %v2657, %v2677
        %v2818 = vmax.f32 %v2662, %v2682
        %v2819 = vmax.f32 %v2667, %v2687
        %v2820 = vmax.f32 %v2672, %v2692
        %v2821 = vmax.f32 %v2817, %v2697
        %v2822 = vmax.f32 %v2818, %v2702
        %v2823 = vmax.f32 %v2819, %v2707
        %v2824 = vmax.f32 %v2820, %v2712
        %v2825 = vmax.f32 %v2821, %v2717
        %v2826 = vmax.f32 %v2822, %v2722
        %v2827 = vmax.f32 %v2823, %v2727
        %v2828 = vmax.f32 %v2824, %v2732
        %v2829 = vmax.f32 %v2825, %v2826
        %v2830 = vmax.f32 %v2827, %v2828
        %v2831 = vmax.f32 %v2829, %v2830
        %v2832 = vrot.slane %v2831, 4
        %v2833 = vmax.f32 %v2831, %v2832
        %v2834 = vrot.slane %v2833, 2
        %v2835 = vmax.f32 %v2833, %v2834
        %v2836 = vrot.slane %v2835, 1
        %v2837 = vmax.f32 %v2835, %v2836
        %vm2838 = vcmp.ge.f32.partialorder %v2657, %v2837
        %vm2839 = vcmp.ge.f32.partialorder %v2662, %v2837
        %vm2840 = vcmp.ge.f32.partialorder %v2667, %v2837
        %vm2841 = vcmp.ge.f32.partialorder %v2672, %v2837
        %vm2842 = vcmp.ge.f32.partialorder %v2677, %v2837
        %vm2843 = vcmp.ge.f32.partialorder %v2682, %v2837
        %vm2844 = vcmp.ge.f32.partialorder %v2687, %v2837
        %vm2845 = vcmp.ge.f32.partialorder %v2692, %v2837
        %vm2846 = vcmp.ge.f32.partialorder %v2697, %v2837
        %vm2847 = vcmp.ge.f32.partialorder %v2702, %v2837
        %vm2848 = vcmp.ge.f32.partialorder %v2707, %v2837
        %vm2849 = vcmp.ge.f32.partialorder %v2712, %v2837
        %vm2850 = vcmp.ge.f32.partialorder %v2717, %v2837
        %vm2851 = vcmp.ge.f32.partialorder %v2722, %v2837
        %vm2852 = vcmp.ge.f32.partialorder %v2727, %v2837
        %vm2853 = vcmp.ge.f32.partialorder %v2732, %v2837
        %v2854 = vsel %vm2838, %v775, 128
        %v2855 = vsel %vm2839, %v776, 128
        %v2856 = vsel %vm2840, %v777, 128
        %v2857 = vsel %vm2841, %v778, 128
        %v2858 = vsel %vm2842, %v779, 128
        %v2859 = vsel %vm2843, %v780, 128
        %v2860 = vsel %vm2844, %v781, 128
        %v2861 = vsel %vm2845, %v782, 128
        %v2862 = vsel %vm2846, %v783, 128
        %v2863 = vsel %vm2847, %v784, 128
        %v2864 = vsel %vm2848, %v785, 128
        %v2865 = vsel %vm2849, %v786, 128
        %v2866 = vsel %vm2850, %v787, 128
        %v2867 = vsel %vm2851, %v788, 128
        %v2868 = vsel %vm2852, %v789, 128
        %v2869 = vsel %vm2853, %v790, 128
        %vm2870 = vcmp.lt.s32.totalorder %v2854, %v2858
        %v2871 = vsel %vm2870, %v2854, %v2858
        %vm2872 = vcmp.lt.s32.totalorder %v2855, %v2859
        %v2873 = vsel %vm2872, %v2855, %v2859
        %vm2874 = vcmp.lt.s32.totalorder %v2856, %v2860
        %v2875 = vsel %vm2874, %v2856, %v2860
        %vm2876 = vcmp.lt.s32.totalorder %v2857, %v2861
        %v2877 = vsel %vm2876, %v2857, %v2861
        %vm2878 = vcmp.lt.s32.totalorder %v2871, %v2862
        %v2879 = vsel %vm2878, %v2871, %v2862
        %vm2880 = vcmp.lt.s32.totalorder %v2873, %v2863
        %v2881 = vsel %vm2880, %v2873, %v2863
        %vm2882 = vcmp.lt.s32.totalorder %v2875, %v2864
        %v2883 = vsel %vm2882, %v2875, %v2864
        %vm2884 = vcmp.lt.s32.totalorder %v2877, %v2865
        %v2885 = vsel %vm2884, %v2877, %v2865
        %vm2886 = vcmp.lt.s32.totalorder %v2879, %v2866
        %v2887 = vsel %vm2886, %v2879, %v2866
        %vm2888 = vcmp.lt.s32.totalorder %v2881, %v2867
        %v2889 = vsel %vm2888, %v2881, %v2867
        %vm2890 = vcmp.lt.s32.totalorder %v2883, %v2868
        %v2891 = vsel %vm2890, %v2883, %v2868
        %vm2892 = vcmp.lt.s32.totalorder %v2885, %v2869
        %v2893 = vsel %vm2892, %v2885, %v2869
        %vm2894 = vcmp.lt.s32.totalorder %v2887, %v2889
        %v2895 = vsel %vm2894, %v2887, %v2889
        %vm2896 = vcmp.lt.s32.totalorder %v2891, %v2893
        %v2897 = vsel %vm2896, %v2891, %v2893
        %vm2898 = vcmp.lt.s32.totalorder %v2895, %v2897
        %v2899 = vsel %vm2898, %v2895, %v2897
        %v2900 = vrot.slane %v2899, 4
        %vm2901 = vcmp.lt.s32.totalorder %v2899, %v2900
        %v2902 = vsel %vm2901, %v2899, %v2900
        %v2903 = vrot.slane %v2902, 2
        %vm2904 = vcmp.lt.s32.totalorder %v2902, %v2903
        %v2905 = vsel %vm2904, %v2902, %v2903
        %v2906 = vrot.slane %v2905, 1
        %vm2907 = vcmp.lt.s32.totalorder %v2905, %v2906
        %v2908 = vsel %vm2907, %v2905, %v2906
        %vm2909 = vcmp.eq.s32.totalorder %v775, %v2908
        %vm2910 = vcmp.eq.s32.totalorder %v776, %v2908
        %vm2911 = vcmp.eq.s32.totalorder %v777, %v2908
        %vm2912 = vcmp.eq.s32.totalorder %v778, %v2908
        %vm2913 = vcmp.eq.s32.totalorder %v779, %v2908
        %vm2914 = vcmp.eq.s32.totalorder %v780, %v2908
        %vm2915 = vcmp.eq.s32.totalorder %v781, %v2908
        %vm2916 = vcmp.eq.s32.totalorder %v782, %v2908
        %vm2917 = vcmp.eq.s32.totalorder %v783, %v2908
        %vm2918 = vcmp.eq.s32.totalorder %v784, %v2908
        %vm2919 = vcmp.eq.s32.totalorder %v785, %v2908
        %vm2920 = vcmp.eq.s32.totalorder %v786, %v2908
        %vm2921 = vcmp.eq.s32.totalorder %v787, %v2908
        %vm2922 = vcmp.eq.s32.totalorder %v788, %v2908
        %vm2923 = vcmp.eq.s32.totalorder %v789, %v2908
        %vm2924 = vcmp.eq.s32.totalorder %v790, %v2908
        %v2925 = vsel %vm2909, 1, 0
        %v2926 = vsel %vm2910, 1, 0
        %v2927 = vsel %vm2911, 1, 0
        %v2928 = vsel %vm2912, 1, 0
        %v2929 = vsel %vm2913, 1, 0
        %v2930 = vsel %vm2914, 1, 0
        %v2931 = vsel %vm2915, 1, 0
        %v2932 = vsel %vm2916, 1, 0
        %v2933 = vsel %vm2917, 1, 0
        %v2934 = vsel %vm2918, 1, 0
        %v2935 = vsel %vm2919, 1, 0
        %v2936 = vsel %vm2920, 1, 0
        %v2937 = vsel %vm2921, 1, 0
        %v2938 = vsel %vm2922, 1, 0
        %v2939 = vsel %vm2923, 1, 0
        %v2940 = vsel %vm2924, 1, 0
        %v2941 = vcvt.s32.f32 %v2925
        %v2942 = vcvt.s32.f32 %v2926
        %v2943 = vcvt.s32.f32 %v2927
        %v2944 = vcvt.s32.f32 %v2928
        %v2945 = vcvt.s32.f32 %v2929
        %v2946 = vcvt.s32.f32 %v2930
        %v2947 = vcvt.s32.f32 %v2931
        %v2948 = vcvt.s32.f32 %v2932
        %v2949 = vcvt.s32.f32 %v2933
        %v2950 = vcvt.s32.f32 %v2934
        %v2951 = vcvt.s32.f32 %v2935
        %v2952 = vcvt.s32.f32 %v2936
        %v2953 = vcvt.s32.f32 %v2937
        %v2954 = vcvt.s32.f32 %v2938
        %v2955 = vcvt.s32.f32 %v2939
        %v2956 = vcvt.s32.f32 %v2940
        %s2957 = scalar_lea.vmem %s5, 120
        %v2958 = vld [vmem:[%s2957] sm:$0xff]
        %v2959 = vld [vmem:[%s2957 + $0x8] sm:$0xff]
        %v2960 = vld [vmem:[%s2957 + $0x10] sm:$0xff]
        %v2961 = vld [vmem:[%s2957 + $0x18] sm:$0xff]
        %v2962 = vld [vmem:[%s2957 + $0x20] sm:$0xff]
        %2963 = vmatprep.subr.mxu0 0.0
        %2964 = vmatpush1.msra.mxu0 %v2941
        %2965 = vmatprep.subr.mxu0 0.0
        %2966 = vmatpush1.msra.mxu0 %v2942
        %2967 = vmatprep.subr.mxu0 0.0
        %2968 = vmatpush1.msra.mxu0 %v2943
        %2969 = vmatprep.subr.mxu0 0.0
        %2970 = vmatpush1.msra.mxu0 %v2944
        %2971 = vmatprep.subr.mxu0 0.0
        %2972 = vmatpush1.msra.mxu0 %v2945
        %2973 = vmatprep.subr.mxu0 0.0
        %2974 = vmatpush1.msra.mxu0 %v2946
        %2975 = vmatprep.subr.mxu0 0.0
        %2976 = vmatpush1.msra.mxu0 %v2947
        %2977 = vmatprep.subr.mxu0 0.0
        %2978 = vmatpush1.msra.mxu0 %v2948
        %2979 = vmatprep.subr.mxu0 0.0
        %2980 = vmatpush1.msra.mxu0 %v2949
        %2981 = vmatprep.subr.mxu0 0.0
        %2982 = vmatpush1.msra.mxu0 %v2950
        %2983 = vmatprep.subr.mxu0 0.0
        %2984 = vmatpush1.msra.mxu0 %v2951
        %2985 = vmatprep.subr.mxu0 0.0
        %2986 = vmatpush1.msra.mxu0 %v2952
        %2987 = vmatprep.subr.mxu0 0.0
        %2988 = vmatpush1.msra.mxu0 %v2953
        %2989 = vmatprep.subr.mxu0 0.0
        %2990 = vmatpush1.msra.mxu0 %v2954
        %2991 = vmatprep.subr.mxu0 0.0
        %2992 = vmatpush1.msra.mxu0 %v2955
        %2993 = vmatprep.subr.mxu0 0.0
        %2994 = vmatpush1.msra.mxu0 %v2956
        %2995 = vmatprep.subr.mxu0 0.0
        %2996 = vmatpush1.msra.mxu0 0.0
        %2997 = vmatprep.subr.mxu0 0.0
        %2998 = vmatpush1.msra.mxu0 0.0
        %2999 = vmatprep.subr.mxu0 0.0
        %3000 = vmatpush1.msra.mxu0 0.0
        %3001 = vmatprep.subr.mxu0 0.0
        %3002 = vmatpush1.msra.mxu0 0.0
        %3003 = vmatprep.subr.mxu0 0.0
        %3004 = vmatpush1.msra.mxu0 0.0
        %3005 = vmatprep.subr.mxu0 0.0
        %3006 = vmatpush1.msra.mxu0 0.0
        %3007 = vmatprep.subr.mxu0 0.0
        %3008 = vmatpush1.msra.mxu0 0.0
        %3009 = vmatprep.subr.mxu0 0.0
        %3010 = vmatpush1.msra.mxu0 0.0
        %3011 = vmatprep.subr.mxu0 0.0
        %3012 = vmatpush1.msra.mxu0 0.0
        %3013 = vmatprep.subr.mxu0 0.0
        %3014 = vmatpush1.msra.mxu0 0.0
        %3015 = vmatprep.subr.mxu0 0.0
        %3016 = vmatpush1.msra.mxu0 0.0
        %3017 = vmatprep.subr.mxu0 0.0
        %3018 = vmatpush1.msra.mxu0 0.0
        %3019 = vmatprep.subr.mxu0 0.0
        %3020 = vmatpush1.msra.mxu0 0.0
        %3021 = vmatprep.subr.mxu0 0.0
        %3022 = vmatpush1.msra.mxu0 0.0
        %3023 = vmatprep.subr.mxu0 0.0
        %3024 = vmatpush1.msra.mxu0 0.0
        %3025 = vmatprep.subr.mxu0 0.0
        %3026 = vmatpush1.msra.mxu0 0.0
        %3027 = vmatprep.mubr.f32.mxu0 0.0
        %3028 = vmatmul.mubr.f32.gmra.mrb[0].mxu0 %v2958
        %v3029 = vpop.f32.mrb[0].mxu0
        %v3030 = vadd.f32 0.0, %v3029
        %v3031 = vpop.f32.mrb[0].mxu0
        %3032 = vmatprep.mubr.f32.mxu0 0.0
        %3033 = vmatmul.mubr.f32.gmra.mrb[0].mxu0 %v2959
        %v3034 = vpop.f32.mrb[0].mxu0
        %v3035 = vadd.f32 0.0, %v3034
        %v3036 = vpop.f32.mrb[0].mxu0
        %3037 = vmatprep.mubr.f32.mxu0 0.0
        %3038 = vmatmul.mubr.f32.gmra.mrb[0].mxu0 %v2960
        %v3039 = vpop.f32.mrb[0].mxu0
        %v3040 = vadd.f32 0.0, %v3039
        %v3041 = vpop.f32.mrb[0].mxu0
        %3042 = vmatprep.mubr.f32.mxu0 0.0
        %3043 = vmatmul.mubr.f32.gmra.mrb[0].mxu0 %v2961
        %v3044 = vpop.f32.mrb[0].mxu0
        %v3045 = vadd.f32 0.0, %v3044
        %v3046 = vpop.f32.mrb[0].mxu0
        %3047 = vmatprep.mubr.f32.mxu0 0.0
        %3048 = vmatmul.mubr.f32.gmra.mrb[0].mxu0 %v2962
        %v3049 = vpop.f32.mrb[0].mxu0
        %v3050 = vadd.f32 0.0, %v3049
        %v3051 = vpop.f32.mrb[0].mxu0
        %3052 = vdwg.mxu0
        %s3053 = scalar_lea.vmem %s6, 96
        %v3054 = vld [vmem:[%s3053] sm:$0xff]
        %v3055 = vld [vmem:[%s3053 + $0x8] sm:$0xff]
        %v3056 = vld [vmem:[%s3053 + $0x10] sm:$0xff]
        %v3057 = vld [vmem:[%s3053 + $0x18] sm:$0xff]
        %3059 = vset.pattern.permute.xlu0 0
        %3060 = vperm.xlu0 %3059, %v3054
        %v3061 = vpop.permute.xlu0 %3060
        %3064 = vset.pattern.permute.xlu0 0
        %3065 = vperm.xlu0 %3064, %v3055
        %v3066 = vpop.permute.xlu0 %3065
        %3069 = vset.pattern.permute.xlu0 0
        %3070 = vperm.xlu0 %3069, %v3056
        %v3071 = vpop.permute.xlu0 %3070
        %3074 = vset.pattern.permute.xlu0 0
        %3075 = vperm.xlu0 %3074, %v3057
        %v3076 = vpop.permute.xlu0 %3075
        %v3078 = vadd.f32 %v3035, %v3061
        %v3079 = vadd.f32 %v3040, %v3066
        %v3080 = vadd.f32 %v3045, %v3071
        %v3081 = vadd.f32 %v3050, %v3076
        %v3082 = vsub.f32 %v2814, %v3030
        %v3083 = vmul.f32 %v3082, %v3082
        %v3084 = vrot.slane %v3083, 4
        %v3085 = vadd.f32 %v3083, %v3084
        %v3086 = vrot.slane %v3085, 2
        %v3087 = vadd.f32 %v3085, %v3086
        %v3088 = vrot.slane %v3087, 1
        %v3089 = vadd.f32 %v3087, %v3088
        %v3090 = vsel %vm387, %v3089, 0.0
        %3091 = vadd.xlane.f32.xlu0 %v3090
        %v3092 = vpop.xlane.xlu0 %3091
        %vm3093 = vcmp.eq.s32.totalorder %v378, 3
        %v3094 = vsel %vm3093, %v3092, 0.0
        %v3095 = vadd.f32 %v2419, %v3094
        %v3096 = vadd.f32 %v2420, %v3078
        %v3097 = vadd.f32 %v2421, %v3079
        %v3098 = vadd.f32 %v2422, %v3080
        %v3099 = vadd.f32 %v2423, %v3081
        %3100 = vst [vmem:[%s355] sm:$0xff] %v3096
        %3101 = vst [vmem:[%s355 + $0x8] sm:$0xff] %v3097
        %3102 = vst [vmem:[%s355 + $0x10] sm:$0xff] %v3098
        %3103 = vst [vmem:[%s355 + $0x18] sm:$0xff] %v3099
        %vm3104 = vcmask 1040384
        %v3105 = vsel %vm3104, %v882, %v1556
        %vm3106 = vcmask 1041408
        %v3107 = vsel %vm3106, %v3105, %v2232
        %vm3108 = vcmask 1042432
        %v3109 = vsel %vm3108, %v3107, %v2908
        %3110 = vst [vmem:[%s362] sm:$0xf] %v3109
        %vm3111 = vcmask 24576
        %3112 = vst.msk [vmem:[%s368] sm:$0x1] %vm3111, %v3095
        %s3113 = sand.u32 %s203, 1
        %s3114 = scalar_lea.sflag [#allocation3], %s3113
        %s3115 = sand.u32 %s203, 1
        %s3116 = smul.addr %s3115, 32
        %s3117 = scalar_lea.vmem [#allocation2], %s3116
        %s3118 = sand.u32 %s27, 1
        %s3119 = scalar_lea.sflag [#allocation5], %s3118
        %s3120 = sand.u32 %s231, 1
        %s3121 = smul.addr %s3120, 4
        %s3122 = scalar_lea.vmem [#allocation4], %s3121
        %s3123 = sand.u32 %s27, 1
        %s3124 = scalar_lea.sflag [#allocation5], %s3123
        %s3125 = sand.u32 %s259, 1
        %s3126 = scalar_lea.vmem [#allocation6], %s3125
        // Predicated region
        $region49: #{tpu_custom_call.1} parent=47 // pred_check
          %p3127 = pneg %p213
        $region50: #{tpu_custom_call.1} parent=47 // pred_check_branch
          %3129 = sbr.rel (%p3127) target = $region52
        $region51: #{tpu_custom_call.1} parent=47 // pred_region
          %s3131 = ssub.s32 512, 512
          %3132 = vsyncadd %s3114, %s3131
          %s3133 = smul.addr %s31, 4
          %s3134 = sadd.s32 %s32, %s3133
          %s3135 = smul.addr %s3134, 128
          %s3136 = scalar_lea.hbm %s7, %s3135
          %s3137 = sshll.u32 %s3117, 4
          %s3138 = int_to_ptr.vmem [resolvable:$true] %s3137
          %3143 = dma.vmem_to_hbm [thread:$0]  %s3138, 512, %s3136, %s3114, 128, 128, 8
        $region52: #{tpu_custom_call.1} parent=47 // pred_fallthru
          _
        // Predicated region
        $region53: #{tpu_custom_call.1} parent=47 // pred_check
          %p3144 = pneg %p241
        $region54: #{tpu_custom_call.1} parent=47 // pred_check_branch
          %3146 = sbr.rel (%p3144) target = $region56
        $region55: #{tpu_custom_call.1} parent=47 // pred_region
          %s3148 = ssub.s32 64, 64
          %3149 = vsyncadd %s3119, %s3148
          %s3150 = sadd.s32 %s32, %s31
          %s3151 = smul.addr %s3150, 64
          %s3152 = scalar_lea.hbm %s8, %s3151
          %s3154 = sshll.u32 %s3122, 4
          %s3155 = int_to_ptr.vmem [resolvable:$true] %s3154
          %3157 = dma.vmem_to_hbm [thread:$0]  %s3155, 64, %s3152, %s3119
        $region56: #{tpu_custom_call.1} parent=47 // pred_fallthru
          _
        // Predicated region
        $region57: #{tpu_custom_call.1} parent=47 // pred_check
          %p3158 = pneg %p269
        $region58: #{tpu_custom_call.1} parent=47 // pred_check_branch
          %3160 = sbr.rel (%p3158) target = $region60
        $region59: #{tpu_custom_call.1} parent=47 // pred_region
          %s3162 = ssub.s32 16, 16
          %3163 = vsyncadd %s3124, %s3162
          %s3164 = sadd.s32 %s32, %s31
          %s3165 = smul.addr %s3164, 16
          %s3166 = scalar_lea.hbm %s9, %s3165
          %s3168 = sshll.u32 %s3126, 4
          %s3169 = int_to_ptr.vmem [resolvable:$true] %s3168
          %3171 = dma.vmem_to_hbm [thread:$0]  %s3169, 16, %s3166, %s3124
        $region60: #{tpu_custom_call.1} parent=47 // pred_fallthru
          _
      $region48: #{tpu_custom_call.1} parent=5 // pred_fallthru
        _
      %p3172 = scmp.le.s32.totalorder 2, %s22
      // Predicated region
      $region61: #{tpu_custom_call.1} parent=5 // pred_check
        %p3173 = pneg %p3172
      $region62: #{tpu_custom_call.1} parent=5 // pred_check_branch
        %3175 = sbr.rel (%p3173) target = $region64
      $region63: #{tpu_custom_call.1} parent=5 // pred_region
        %s3176 = ssub.s32 %s22, 2
        // Predicated region
        $region65: #{tpu_custom_call.1} parent=63 // pred_check
          %p3177 = pneg %p219
        $region66: #{tpu_custom_call.1} parent=63 // pred_check_branch
          %3179 = sbr.rel (%p3177) target = $region68
        $region67: #{tpu_custom_call.1} parent=63 // pred_region
          %s3180 = sand.u32 %s204, 1
          %s3181 = scalar_lea.sflag [#allocation3], %s3180
          %s3182 = sand.u32 %s204, 1
          %s3183 = smul.addr %s3182, 32
          %s3184 = scalar_lea.vmem [#allocation2], %s3183
          %3185 = dma.done %s3181, 512
        $region68: #{tpu_custom_call.1} parent=63 // pred_fallthru
          _
        // Predicated region
        $region69: #{tpu_custom_call.1} parent=63 // pred_check
          %p3186 = pneg %p247
        $region70: #{tpu_custom_call.1} parent=63 // pred_check_branch
          %3188 = sbr.rel (%p3186) target = $region72
        $region71: #{tpu_custom_call.1} parent=63 // pred_region
          %s3189 = sand.u32 %s28, 1
          %s3190 = scalar_lea.sflag [#allocation5], %s3189
          %s3191 = sand.u32 %s232, 1
          %s3192 = smul.addr %s3191, 4
          %s3193 = scalar_lea.vmem [#allocation4], %s3192
          %3194 = dma.done %s3190, 64
        $region72: #{tpu_custom_call.1} parent=63 // pred_fallthru
          _
        // Predicated region
        $region73: #{tpu_custom_call.1} parent=63 // pred_check
          %p3195 = pneg %p275
        $region74: #{tpu_custom_call.1} parent=63 // pred_check_branch
          %3197 = sbr.rel (%p3195) target = $region76
        $region75: #{tpu_custom_call.1} parent=63 // pred_region
          %s3198 = sand.u32 %s28, 1
          %s3199 = scalar_lea.sflag [#allocation5], %s3198
          %s3200 = sand.u32 %s260, 1
          %s3201 = scalar_lea.vmem [#allocation6], %s3200
          %3202 = dma.done %s3199, 16
        $region76: #{tpu_custom_call.1} parent=63 // pred_fallthru
          _
      $region64: #{tpu_custom_call.1} parent=5 // pred_fallthru
        _
    $region6: #{tpu_custom_call.1} parent=1 // loop_footer
      %s26 = sadd.s32 1, %s22
    $region7: #{tpu_custom_call.1} parent=1 // loop_footer_branch
      %21 = sbr.rel target = $region3
    $region8: #{tpu_custom_call.1} parent=1 // loop_exit
      _
    %3203 = vsyncpa [#allocation3], 1
    %s3204 = scalar_lea.sflag [#allocation3], 1
    %3205 = vsyncpa %s3204, 1
    %3206 = vsyncpa [#allocation5], 1
    %s3207 = scalar_lea.sflag [#allocation5], 1
    %3208 = vsyncpa %s3207, 1

</llo_original>
